<compile_context>
chip_gen: v7x
topology: tpu7x:2x2x1
jax: 0.10.0
libtpu: 0.0.40
codegen_flags: <defaults>
</compile_context>

<pallas_src>
import functools

import numpy as np

import jax
import jax.numpy as jnp
from jax.experimental import pallas as pl
from jax.experimental.pallas import tpu as pltpu


# ------------------------------ fused kernel -------------------------------
# Lane layouts:
#   x0        (128): ic*32 + w            (lane 96 = 1.0 -> folded conv1 bias)
#   conv1 out (256): r*128 + oc*16 + wq   with w = 2*wq + r   (oc<6,  wq<14)
#   pool1     (128):            oc*16 + wq      (lane 127 = 1.0 -> conv2 bias)
#   conv2 out (256): r*128 + oc*8  + wq   with w = 2*wq + r   (oc<16, wq<5)
#   pool2     (128):            oc*8  + wq

def _lenet_kernel(x_ref, a1w_ref, a2w_hbm, g1_hbm, w2t_hbm,
                  fb1_ref, fb2_ref, w3t_ref, fb3_ref,
                  out_ref,
                  a1_ref, p1_ref, a2_ref, p2_ref,
                  a2w_ref, g1_ref, w2t_ref, dma_sem,
                  *, B, R, R_a1, R_p1, R_a2):
    f32 = jnp.float32
    bf16 = jnp.bfloat16

    # Kick off conv2 / fc weight DMAs (HBM -> VMEM) so they overlap with the
    # conv1 + pool1 compute instead of being exposed before the body starts.
    cp_a2w = pltpu.make_async_copy(a2w_hbm, a2w_ref, dma_sem.at[0])
    cp_g1 = pltpu.make_async_copy(g1_hbm, g1_ref, dma_sem.at[1])
    cp_w2t = pltpu.make_async_copy(w2t_hbm, w2t_ref, dma_sem.at[2])
    cp_a2w.start()
    cp_g1.start()
    cp_w2t.start()

    # ---- conv1 (3->6, 5x5): 5 row-shifted bf16 matmuls; bias folded via the
    #      ones-lane (x0 lane 96) into a1w[0]; accumulate straight from kh=0.
    acc = jnp.dot(x_ref[pl.ds(0, R_a1), :].astype(bf16), a1w_ref[0],
                  preferred_element_type=f32)
    for kh in range(1, 5):
        acc = acc + jnp.dot(x_ref[pl.ds(kh, R_a1), :].astype(bf16),
                            a1w_ref[kh], preferred_element_type=f32)
    a1_ref[...] = jnp.maximum(acc, 0.0)

    # ---- maxpool1 2x2/2: two 128-aligned lane halves (even/odd cols) and two
    #      adjacent rows.  Rows stay dilated (stride 2).  Lane 127 carries the
    #      1.0 that feeds the folded conv2 bias.
    p1_ref[...] = jnp.maximum(
        jnp.maximum(a1_ref[pl.ds(0, R_p1), pl.ds(0, 128)],
                    a1_ref[pl.ds(0, R_p1), pl.ds(128, 128)]),
        jnp.maximum(a1_ref[pl.ds(1, R_p1), pl.ds(0, 128)],
                    a1_ref[pl.ds(1, R_p1), pl.ds(128, 128)]))

    # ---- conv2 (6->16, 5x5) on the row-dilated grid; bias folded via p1 lane
    #      127 into a2w[0].  Wait for the prefetched slab only now.
    cp_a2w.wait()
    acc = jnp.dot(p1_ref[pl.ds(0, R_a2), :].astype(bf16), a2w_ref[0],
                  preferred_element_type=f32)
    for kh in range(1, 5):
        acc = acc + jnp.dot(p1_ref[pl.ds(2 * kh, R_a2), :].astype(bf16),
                            a2w_ref[kh], preferred_element_type=f32)
    a2_ref[...] = jnp.maximum(acc, 0.0)

    # ---- maxpool2 (row dilation 2 -> 4) ----
    p2_ref[...] = jnp.maximum(
        jnp.maximum(a2_ref[pl.ds(0, R), pl.ds(0, 128)],
                    a2_ref[pl.ds(0, R), pl.ds(128, 128)]),
        jnp.maximum(a2_ref[pl.ds(2, R), pl.ds(0, 128)],
                    a2_ref[pl.ds(2, R), pl.ds(128, 128)]))

    # ---- fc1: no feature scratch / row copies.  For each pooled output row
    #      hq, gather the (B,128) valid p2 rows with a sublane-strided read
    #      (rows b*32 + 4*hq) and multiply by the matching (128,120) slab.
    cp_g1.wait()
    cp_w2t.wait()
    acc = jnp.dot(p2_ref[pl.ds(0, B, stride=32), :].astype(bf16), g1_ref[0],
                  preferred_element_type=f32)
    for hq in range(1, 5):
        acc = acc + jnp.dot(
            p2_ref[pl.ds(4 * hq, B, stride=32), :].astype(bf16),
            g1_ref[hq], preferred_element_type=f32)
    h = jnp.maximum(acc + fb1_ref[...], 0.0)

    # ---- fc2 -> fc3 (tiny, f32) ----
    h = jnp.maximum(jnp.dot(h, w2t_ref[...], preferred_element_type=f32)
                    + fb2_ref[...], 0.0)
    out_ref[...] = jnp.dot(h, w3t_ref[...], preferred_element_type=f32) \
        + fb3_ref[...]


def _fullspec(shape):
    nd = len(shape)
    return pl.BlockSpec(shape, lambda i, _nd=nd: (0,) * _nd)


# --------------------------- host-side weight prep --------------------------

def prepare_kernel_params(params):
    """One-time (outside jit) repack of PyTorch-layout weights into the banded
    bf16 matmul slabs / permuted FC matrices the fused kernel consumes."""
    w1 = np.asarray(params["w1"], np.float32)    # (6, 3, 5, 5)
    b1 = np.asarray(params["b1"], np.float32)
    w2 = np.asarray(params["w2"], np.float32)    # (16, 6, 5, 5)
    b2 = np.asarray(params["b2"], np.float32)
    fw1 = np.asarray(params["fw1"], np.float32)  # (120, 400)
    fw2 = np.asarray(params["fw2"], np.float32)  # (84, 120)
    fw3 = np.asarray(params["fw3"], np.float32)  # (10, 84)

    # conv1 slabs: input lanes (ic*32 + w_in) -> output lanes (r*128+oc*16+wq)
    a1w = np.zeros((5, 128, 256), np.float32)
    for kh in range(5):
        for kw in range(5):
            for r in range(2):
                for wq in range(14):
                    w_in = 2 * wq + r + kw
                    for oc in range(6):
                        for ic in range(3):
                            a1w[kh, ic * 32 + w_in,
                                r * 128 + oc * 16 + wq] = w1[oc, ic, kh, kw]
    # folded conv1 bias: x0 lane 96 is 1.0 on every row, so row 96 of the
    # kh=0 slab adds b1 exactly once per output row.
    for r in range(2):
        for oc in range(6):
            for wq in range(14):
                a1w[0, 96, r * 128 + oc * 16 + wq] = b1[oc]
    # ones-lane generator: makes conv1 output lane 127 == 1.0 everywhere, so
    # pool1 lane 127 == 1.0, which drives the folded conv2 bias below.
    a1w[0, 96, 127] = 1.0

    # conv2 slabs: input lanes (ic*16 + wq_in) -> output lanes (r*128+oc*8+wq)
    a2w = np.zeros((5, 128, 256), np.float32)
    for kh in range(5):
        for kw in range(5):
            for r in range(2):
                for wq in range(5):
                    wq_in = 2 * wq + r + kw
                    for oc in range(16):
                        for ic in range(6):
                            a2w[kh, ic * 16 + wq_in,
                                r * 128 + oc * 8 + wq] = w2[oc, ic, kh, kw]
    # folded conv2 bias, fed by p1 lane 127 == 1.0 (kh=0 only).
    for r in range(2):
        for oc in range(16):
            for wq in range(5):
                a2w[0, 127, r * 128 + oc * 8 + wq] = b2[oc]

    # fc1 as 5 slabs (one per pooled output row hq): kernel lane = c*8 + wq2;
    # PyTorch x.view(-1, 400) order is f = c*25 + hq*5 + wq2.  Unused lanes
    # stay zero, so garbage lanes of p2 never contribute.
    g1 = np.zeros((5, 128, 120), np.float32)
    for c in range(16):
        for hq in range(5):
            for wq2 in range(5):
                g1[hq, c * 8 + wq2, :] = fw1[:, c * 25 + hq * 5 + wq2]

    return {
        "a1w": jnp.asarray(a1w, dtype=jnp.bfloat16),
        "a2w": jnp.asarray(a2w, dtype=jnp.bfloat16),
        "g1": jnp.asarray(g1, dtype=jnp.bfloat16),
        "w2t": jnp.asarray(fw2.T),
        "w3t": jnp.asarray(fw3.T),
        "fb1": jnp.asarray(np.asarray(params["fb1"], np.float32).reshape(1, 120)),
        "fb2": jnp.asarray(np.asarray(params["fb2"], np.float32).reshape(1, 84)),
        "fb3": jnp.asarray(np.asarray(params["fb3"], np.float32).reshape(1, 10)),
    }


# --------------------------------- forward ----------------------------------

def forward(kparams, x):
    """x: (B, 3, 32, 32) float32 NCHW -> (B, 10) logits, one fused kernel."""
    B = x.shape[0]
    R = 32 * B                 # rows holding valid data (b*32 + h)
    R_a2 = R + 2               # conv2 rows  (pool2 reads rows +0, +2)
    R_p1 = R_a2 + 8            # pool1 rows  (conv2 reads rows +0..+8)
    R_a1 = R_p1 + 1            # conv1 rows  (pool1 reads rows +0, +1)
    R_x0 = R_a1 + 5            # padded input rows (conv1 reads rows +0..+4)

    # input layout: rows = (b, h); lanes 0..95 = ic*32 + w, lane 96 = 1.0
    # (drives the folded conv biases), lanes 97..127 = 0.  Repack stays under
    # the same jit as the kernel so XLA fuses it.
    img = jnp.transpose(x, (0, 2, 1, 3)).reshape(R, 96).astype(jnp.float32)
    img = jnp.pad(img, ((0, R_x0 - R), (0, 0)))
    x0 = jnp.concatenate(
        [img,
         jnp.ones((R_x0, 1), jnp.float32),
         jnp.zeros((R_x0, 31), jnp.float32)], axis=1)

    args = (x0, kparams["a1w"], kparams["a2w"], kparams["g1"], kparams["w2t"],
            kparams["fb1"], kparams["fb2"], kparams["w3t"], kparams["fb3"])

    any_spec = pl.BlockSpec(memory_space=pl.ANY)
    in_specs = [
        _fullspec(x0.shape),                 # x0           -> VMEM (prologue)
        _fullspec(kparams["a1w"].shape),     # conv1 slabs  -> VMEM (prologue)
        any_spec,                            # conv2 slabs  -> HBM, manual DMA
        any_spec,                            # fc1 slabs    -> HBM, manual DMA
        any_spec,                            # fc2 weight   -> HBM, manual DMA
        _fullspec(kparams["fb1"].shape),
        _fullspec(kparams["fb2"].shape),
        _fullspec(kparams["w3t"].shape),
        _fullspec(kparams["fb3"].shape),
    ]

    kernel = functools.partial(_lenet_kernel, B=B, R=R,
                               R_a1=R_a1, R_p1=R_p1, R_a2=R_a2)
    return pl.pallas_call(
        kernel,
        out_shape=jax.ShapeDtypeStruct((B, 10), jnp.float32),
        grid=(1,),
        in_specs=in_specs,
        out_specs=_fullspec((B, 10)),
        scratch_shapes=[
            pltpu.VMEM((R_a1, 256), jnp.float32),      # conv1 + relu
            pltpu.VMEM((R_p1, 128), jnp.float32),      # pool1
            pltpu.VMEM((R_a2, 256), jnp.float32),      # conv2 + relu
            pltpu.VMEM((R, 128), jnp.float32),         # pool2
            pltpu.VMEM((5, 128, 256), jnp.bfloat16),   # prefetched conv2 slabs
            pltpu.VMEM((5, 128, 120), jnp.bfloat16),   # prefetched fc1 slabs
            pltpu.VMEM((120, 84), jnp.float32),        # prefetched fc2 weight
            pltpu.SemaphoreType.DMA((3,)),             # DMA completion sems
        ],
        compiler_params=pltpu.CompilerParams(
            dimension_semantics=("arbitrary",)),
    )(*args)


# ------------------------------ params / check ------------------------------

def init_params(key):
    """Deterministic PyTorch-default-style U[-1/sqrt(fan_in), 1/sqrt(fan_in)]."""
    def uni(k, shape, fan_in):
        bound = 1.0 / float(fan_in) ** 0.5
        return jax.random.uniform(k, shape, jnp.float32, -bound, bound)

    ks = jax.random.split(key, 10)
    return {
        "w1": uni(ks[0], (6, 3, 5, 5), 3 * 25),   "b1": uni(ks[1], (6,), 3 * 25),
        "w2": uni(ks[2], (16, 6, 5, 5), 6 * 25),  "b2": uni(ks[3], (16,), 6 * 25),
        "fw1": uni(ks[4], (120, 400), 400),       "fb1": uni(ks[5], (120,), 400),
        "fw2": uni(ks[6], (84, 120), 120),        "fb2": uni(ks[7], (84,), 120),
        "fw3": uni(ks[8], (10, 84), 84),          "fb3": uni(ks[9], (10,), 84),
    }


def _reference_forward(params, x):
    """Plain-JAX reference (matches the PyTorch module) for a numerical check."""
    hi = jax.lax.Precision.HIGHEST
    y = jax.lax.conv_general_dilated(
        x, params["w1"], (1, 1), "VALID",
        dimension_numbers=("NCHW", "OIHW", "NCHW"), precision=hi)
    y = jax.nn.relu(y + params["b1"][None, :, None, None])
    y = jax.lax.reduce_window(y, -jnp.inf, jax.lax.max,
                              (1, 1, 2, 2), (1, 1, 2, 2), "VALID")
    y = jax.lax.conv_general_dilated(
        y, params["w2"], (1, 1), "VALID",
        dimension_numbers=("NCHW", "OIHW", "NCHW"), precision=hi)
    y = jax.nn.relu(y + params["b2"][None, :, None, None])
    y = jax.lax.reduce_window(y, -jnp.inf, jax.lax.max,
                              (1, 1, 2, 2), (1, 1, 2, 2), "VALID")
    y = y.reshape(y.shape[0], 400)
    y = jax.nn.relu(jnp.dot(y, params["fw1"].T, precision=hi) + params["fb1"])
    y = jax.nn.relu(jnp.dot(y, params["fw2"].T, precision=hi) + params["fb2"])
    return jnp.dot(y, params["fw3"].T, precision=hi) + params["fb3"]


if __name__ == "__main__":
    key = jax.random.PRNGKey(0)
    pkey, xkey = jax.random.split(key)
    params = init_params(pkey)
    B = 2
    x = jax.random.normal(xkey, (B, 3, 32, 32), jnp.float32)

    kparams = prepare_kernel_params(params)          # one-time, outside jit
    out = jax.jit(forward)(kparams, x)
    jax.block_until_ready(out)
    assert out.shape == (B, 10) and out.dtype == jnp.float32

    ref = _reference_forward(params, x)
    # Tolerance accounts for the bf16 weight slabs / bf16 matmul LHS (errors
    # measured ~1e-3 absolute on these O(0.1) logits; layout bugs would be O(1)).
    np.testing.assert_allclose(np.asarray(out), np.asarray(ref),
                               rtol=1e-2, atol=1e-2)
    print("KERNEL_OK")
</pallas_src>

<mosaic_0001>
module attributes {stable_mosaic.version = 11 : i64} {
  func.func @_lenet_kernel(%arg0: i32, %arg1: memref<80x128xf32, #tpu.memory_space<vmem>>, %arg2: memref<5x128x256xbf16, #tpu.memory_space<vmem>>, %arg3: memref<5x128x256xbf16, #tpu.memory_space<any>>, %arg4: memref<5x128x120xbf16, #tpu.memory_space<any>>, %arg5: memref<120x84xf32, #tpu.memory_space<any>>, %arg6: memref<1x120xf32, #tpu.memory_space<vmem>>, %arg7: memref<1x84xf32, #tpu.memory_space<vmem>>, %arg8: memref<84x10xf32, #tpu.memory_space<vmem>>, %arg9: memref<1x10xf32, #tpu.memory_space<vmem>>, %arg10: memref<2x10xf32, #tpu.memory_space<vmem>>, %arg11: memref<75x256xf32, #tpu.memory_space<vmem>>, %arg12: memref<74x128xf32, #tpu.memory_space<vmem>>, %arg13: memref<66x256xf32, #tpu.memory_space<vmem>>, %arg14: memref<64x128xf32, #tpu.memory_space<vmem>>, %arg15: memref<5x128x256xbf16, #tpu.memory_space<vmem>>, %arg16: memref<5x128x120xbf16, #tpu.memory_space<vmem>>, %arg17: memref<120x84xf32, #tpu.memory_space<vmem>>, %arg18: memref<3x!tpu.dma_semaphore, #tpu.memory_space<semaphore_mem>>) attributes {dimension_semantics = [#tpu.dimension_semantics<arbitrary>], iteration_bounds = array<i64: 1>, scalar_prefetch = 0 : i64, scratch_operands = 8 : i64, tpu.core_type = #tpu.core_type<tc>, window_params = [{pipeline_mode = #tpu.pipeline_mode<synchronous>, transform_indices = @transform_0, window_bounds = array<i64: 80, 128>}, {pipeline_mode = #tpu.pipeline_mode<synchronous>, transform_indices = @transform_1, window_bounds = array<i64: 5, 128, 256>}, {}, {}, {}, {pipeline_mode = #tpu.pipeline_mode<synchronous>, transform_indices = @transform_5, window_bounds = array<i64: 1, 120>}, {pipeline_mode = #tpu.pipeline_mode<synchronous>, transform_indices = @transform_6, window_bounds = array<i64: 1, 84>}, {pipeline_mode = #tpu.pipeline_mode<synchronous>, transform_indices = @transform_7, window_bounds = array<i64: 84, 10>}, {pipeline_mode = #tpu.pipeline_mode<synchronous>, transform_indices = @transform_8, window_bounds = array<i64: 1, 10>}, {pipeline_mode = #tpu.pipeline_mode<synchronous>, transform_indices = @transform_9, window_bounds = array<i64: 2, 10>}]} {
    %c0_i32 = arith.constant 0 : i32
    %0 = tpu.memref_slice %arg18[%c0_i32] : memref<3x!tpu.dma_semaphore, #tpu.memory_space<semaphore_mem>> -> memref<1x!tpu.dma_semaphore, #tpu.memory_space<semaphore_mem>>
    %1 = tpu.memref_squeeze %0 : memref<1x!tpu.dma_semaphore, #tpu.memory_space<semaphore_mem>> -> memref<!tpu.dma_semaphore, #tpu.memory_space<semaphore_mem>>
    tpu.enqueue_dma source(%arg3 : memref<5x128x256xbf16, #tpu.memory_space<any>>) target(%arg15 : memref<5x128x256xbf16, #tpu.memory_space<vmem>>) target_semaphore(%1 : memref<!tpu.dma_semaphore, #tpu.memory_space<semaphore_mem>>)
    %c1_i32 = arith.constant 1 : i32
    %2 = tpu.memref_slice %arg18[%c1_i32] : memref<3x!tpu.dma_semaphore, #tpu.memory_space<semaphore_mem>> -> memref<1x!tpu.dma_semaphore, #tpu.memory_space<semaphore_mem>>
    %3 = tpu.memref_squeeze %2 : memref<1x!tpu.dma_semaphore, #tpu.memory_space<semaphore_mem>> -> memref<!tpu.dma_semaphore, #tpu.memory_space<semaphore_mem>>
    tpu.enqueue_dma source(%arg4 : memref<5x128x120xbf16, #tpu.memory_space<any>>) target(%arg16 : memref<5x128x120xbf16, #tpu.memory_space<vmem>>) target_semaphore(%3 : memref<!tpu.dma_semaphore, #tpu.memory_space<semaphore_mem>>)
    %c2_i32 = arith.constant 2 : i32
    %4 = tpu.memref_slice %arg18[%c2_i32] : memref<3x!tpu.dma_semaphore, #tpu.memory_space<semaphore_mem>> -> memref<1x!tpu.dma_semaphore, #tpu.memory_space<semaphore_mem>>
    %5 = tpu.memref_squeeze %4 : memref<1x!tpu.dma_semaphore, #tpu.memory_space<semaphore_mem>> -> memref<!tpu.dma_semaphore, #tpu.memory_space<semaphore_mem>>
    tpu.enqueue_dma source(%arg5 : memref<120x84xf32, #tpu.memory_space<any>>) target(%arg17 : memref<120x84xf32, #tpu.memory_space<vmem>>) target_semaphore(%5 : memref<!tpu.dma_semaphore, #tpu.memory_space<semaphore_mem>>)
    %c0 = arith.constant 0 : index
    %c0_0 = arith.constant 0 : index
    %6 = vector.load %arg1[%c0, %c0_0] : memref<80x128xf32, #tpu.memory_space<vmem>>, vector<75x128xf32>
    %7 = arith.truncf %6 : vector<75x128xf32> to vector<75x128xbf16>
    %c0_1 = arith.constant 0 : index
    %c0_2 = arith.constant 0 : index
    %c0_3 = arith.constant 0 : index
    %8 = vector.load %arg2[%c0_1, %c0_2, %c0_3] : memref<5x128x256xbf16, #tpu.memory_space<vmem>>, vector<1x128x256xbf16>
    %9 = vector.shape_cast %8 : vector<1x128x256xbf16> to vector<128x256xbf16>
    %cst = arith.constant dense<0.000000e+00> : vector<75x256xf32>
    %10 = tpu.matmul %7, %9, %cst {dimension_numbers = #tpu.dot_dimension_numbers<[1], [0], [0], [1], [0, 0, 1, 1], [], []>} : vector<75x128xbf16>, vector<128x256xbf16>, vector<75x256xf32> -> vector<75x256xf32>
    %c1 = arith.constant 1 : index
    %c0_4 = arith.constant 0 : index
    %11 = vector.load %arg1[%c1, %c0_4] : memref<80x128xf32, #tpu.memory_space<vmem>>, vector<75x128xf32>
    %12 = arith.truncf %11 : vector<75x128xf32> to vector<75x128xbf16>
    %c1_5 = arith.constant 1 : index
    %c0_6 = arith.constant 0 : index
    %c0_7 = arith.constant 0 : index
    %13 = vector.load %arg2[%c1_5, %c0_6, %c0_7] : memref<5x128x256xbf16, #tpu.memory_space<vmem>>, vector<1x128x256xbf16>
    %14 = vector.shape_cast %13 : vector<1x128x256xbf16> to vector<128x256xbf16>
    %cst_8 = arith.constant dense<0.000000e+00> : vector<75x256xf32>
    %15 = tpu.matmul %12, %14, %cst_8 {dimension_numbers = #tpu.dot_dimension_numbers<[1], [0], [0], [1], [0, 0, 1, 1], [], []>} : vector<75x128xbf16>, vector<128x256xbf16>, vector<75x256xf32> -> vector<75x256xf32>
    %16 = arith.addf %10, %15 : vector<75x256xf32>
    %c2 = arith.constant 2 : index
    %c0_9 = arith.constant 0 : index
    %17 = vector.load %arg1[%c2, %c0_9] : memref<80x128xf32, #tpu.memory_space<vmem>>, vector<75x128xf32>
    %18 = arith.truncf %17 : vector<75x128xf32> to vector<75x128xbf16>
    %c2_10 = arith.constant 2 : index
    %c0_11 = arith.constant 0 : index
    %c0_12 = arith.constant 0 : index
    %19 = vector.load %arg2[%c2_10, %c0_11, %c0_12] : memref<5x128x256xbf16, #tpu.memory_space<vmem>>, vector<1x128x256xbf16>
    %20 = vector.shape_cast %19 : vector<1x128x256xbf16> to vector<128x256xbf16>
    %cst_13 = arith.constant dense<0.000000e+00> : vector<75x256xf32>
    %21 = tpu.matmul %18, %20, %cst_13 {dimension_numbers = #tpu.dot_dimension_numbers<[1], [0], [0], [1], [0, 0, 1, 1], [], []>} : vector<75x128xbf16>, vector<128x256xbf16>, vector<75x256xf32> -> vector<75x256xf32>
    %22 = arith.addf %16, %21 : vector<75x256xf32>
    %c3 = arith.constant 3 : index
    %c0_14 = arith.constant 0 : index
    %23 = vector.load %arg1[%c3, %c0_14] : memref<80x128xf32, #tpu.memory_space<vmem>>, vector<75x128xf32>
    %24 = arith.truncf %23 : vector<75x128xf32> to vector<75x128xbf16>
    %c3_15 = arith.constant 3 : index
    %c0_16 = arith.constant 0 : index
    %c0_17 = arith.constant 0 : index
    %25 = vector.load %arg2[%c3_15, %c0_16, %c0_17] : memref<5x128x256xbf16, #tpu.memory_space<vmem>>, vector<1x128x256xbf16>
    %26 = vector.shape_cast %25 : vector<1x128x256xbf16> to vector<128x256xbf16>
    %cst_18 = arith.constant dense<0.000000e+00> : vector<75x256xf32>
    %27 = tpu.matmul %24, %26, %cst_18 {dimension_numbers = #tpu.dot_dimension_numbers<[1], [0], [0], [1], [0, 0, 1, 1], [], []>} : vector<75x128xbf16>, vector<128x256xbf16>, vector<75x256xf32> -> vector<75x256xf32>
    %28 = arith.addf %22, %27 : vector<75x256xf32>
    %c4 = arith.constant 4 : index
    %c0_19 = arith.constant 0 : index
    %29 = vector.load %arg1[%c4, %c0_19] : memref<80x128xf32, #tpu.memory_space<vmem>>, vector<75x128xf32>
    %30 = arith.truncf %29 : vector<75x128xf32> to vector<75x128xbf16>
    %c4_20 = arith.constant 4 : index
    %c0_21 = arith.constant 0 : index
    %c0_22 = arith.constant 0 : index
    %31 = vector.load %arg2[%c4_20, %c0_21, %c0_22] : memref<5x128x256xbf16, #tpu.memory_space<vmem>>, vector<1x128x256xbf16>
    %32 = vector.shape_cast %31 : vector<1x128x256xbf16> to vector<128x256xbf16>
    %cst_23 = arith.constant dense<0.000000e+00> : vector<75x256xf32>
    %33 = tpu.matmul %30, %32, %cst_23 {dimension_numbers = #tpu.dot_dimension_numbers<[1], [0], [0], [1], [0, 0, 1, 1], [], []>} : vector<75x128xbf16>, vector<128x256xbf16>, vector<75x256xf32> -> vector<75x256xf32>
    %34 = arith.addf %28, %33 : vector<75x256xf32>
    %cst_24 = arith.constant 0.000000e+00 : f32
    %35 = vector.broadcast %cst_24 : f32 to vector<75x256xf32>
    %36 = arith.maximumf %34, %35 : vector<75x256xf32>
    %c0_25 = arith.constant 0 : index
    %c0_26 = arith.constant 0 : index
    %37 = vector.load %arg11[%c0_25, %c0_26] : memref<75x256xf32, #tpu.memory_space<vmem>>, vector<75x256xf32>
    tpu.vector_store %arg11[%c0_25, %c0_26], %36 {strides = array<i32>} : memref<75x256xf32, #tpu.memory_space<vmem>>, vector<75x256xf32>,
    %c0_27 = arith.constant 0 : index
    %c0_28 = arith.constant 0 : index
    %38 = vector.load %arg11[%c0_27, %c0_28] : memref<75x256xf32, #tpu.memory_space<vmem>>, vector<74x128xf32>
    %c0_29 = arith.constant 0 : index
    %c128 = arith.constant 128 : index
    %39 = vector.load %arg11[%c0_29, %c128] : memref<75x256xf32, #tpu.memory_space<vmem>>, vector<74x128xf32>
    %40 = arith.maximumf %38, %39 : vector<74x128xf32>
    %c1_30 = arith.constant 1 : index
    %c0_31 = arith.constant 0 : index
    %41 = vector.load %arg11[%c1_30, %c0_31] : memref<75x256xf32, #tpu.memory_space<vmem>>, vector<74x128xf32>
    %c1_32 = arith.constant 1 : index
    %c128_33 = arith.constant 128 : index
    %42 = vector.load %arg11[%c1_32, %c128_33] : memref<75x256xf32, #tpu.memory_space<vmem>>, vector<74x128xf32>
    %43 = arith.maximumf %41, %42 : vector<74x128xf32>
    %44 = arith.maximumf %40, %43 : vector<74x128xf32>
    %c0_34 = arith.constant 0 : index
    %c0_35 = arith.constant 0 : index
    %45 = vector.load %arg12[%c0_34, %c0_35] : memref<74x128xf32, #tpu.memory_space<vmem>>, vector<74x128xf32>
    tpu.vector_store %arg12[%c0_34, %c0_35], %44 {strides = array<i32>} : memref<74x128xf32, #tpu.memory_space<vmem>>, vector<74x128xf32>,
    %c0_i32_36 = arith.constant 0 : i32
    %46 = tpu.memref_slice %arg18[%c0_i32_36] : memref<3x!tpu.dma_semaphore, #tpu.memory_space<semaphore_mem>> -> memref<1x!tpu.dma_semaphore, #tpu.memory_space<semaphore_mem>>
    %47 = tpu.memref_squeeze %46 : memref<1x!tpu.dma_semaphore, #tpu.memory_space<semaphore_mem>> -> memref<!tpu.dma_semaphore, #tpu.memory_space<semaphore_mem>>
    tpu.wait_dma2 semaphore(%47 : memref<!tpu.dma_semaphore, #tpu.memory_space<semaphore_mem>>) src(%arg3 : memref<5x128x256xbf16, #tpu.memory_space<any>>) dst(%arg15 : memref<5x128x256xbf16, #tpu.memory_space<vmem>>)
    %c0_37 = arith.constant 0 : index
    %c0_38 = arith.constant 0 : index
    %48 = vector.load %arg12[%c0_37, %c0_38] : memref<74x128xf32, #tpu.memory_space<vmem>>, vector<66x128xf32>
    %49 = arith.truncf %48 : vector<66x128xf32> to vector<66x128xbf16>
    %c0_39 = arith.constant 0 : index
    %c0_40 = arith.constant 0 : index
    %c0_41 = arith.constant 0 : index
    %50 = vector.load %arg15[%c0_39, %c0_40, %c0_41] : memref<5x128x256xbf16, #tpu.memory_space<vmem>>, vector<1x128x256xbf16>
    %51 = vector.shape_cast %50 : vector<1x128x256xbf16> to vector<128x256xbf16>
    %cst_42 = arith.constant dense<0.000000e+00> : vector<66x256xf32>
    %52 = tpu.matmul %49, %51, %cst_42 {dimension_numbers = #tpu.dot_dimension_numbers<[1], [0], [0], [1], [0, 0, 1, 1], [], []>} : vector<66x128xbf16>, vector<128x256xbf16>, vector<66x256xf32> -> vector<66x256xf32>
    %c2_43 = arith.constant 2 : index
    %c0_44 = arith.constant 0 : index
    %53 = vector.load %arg12[%c2_43, %c0_44] : memref<74x128xf32, #tpu.memory_space<vmem>>, vector<66x128xf32>
    %54 = arith.truncf %53 : vector<66x128xf32> to vector<66x128xbf16>
    %c1_45 = arith.constant 1 : index
    %c0_46 = arith.constant 0 : index
    %c0_47 = arith.constant 0 : index
    %55 = vector.load %arg15[%c1_45, %c0_46, %c0_47] : memref<5x128x256xbf16, #tpu.memory_space<vmem>>, vector<1x128x256xbf16>
    %56 = vector.shape_cast %55 : vector<1x128x256xbf16> to vector<128x256xbf16>
    %cst_48 = arith.constant dense<0.000000e+00> : vector<66x256xf32>
    %57 = tpu.matmul %54, %56, %cst_48 {dimension_numbers = #tpu.dot_dimension_numbers<[1], [0], [0], [1], [0, 0, 1, 1], [], []>} : vector<66x128xbf16>, vector<128x256xbf16>, vector<66x256xf32> -> vector<66x256xf32>
    %58 = arith.addf %52, %57 : vector<66x256xf32>
    %c4_49 = arith.constant 4 : index
    %c0_50 = arith.constant 0 : index
    %59 = vector.load %arg12[%c4_49, %c0_50] : memref<74x128xf32, #tpu.memory_space<vmem>>, vector<66x128xf32>
    %60 = arith.truncf %59 : vector<66x128xf32> to vector<66x128xbf16>
    %c2_51 = arith.constant 2 : index
    %c0_52 = arith.constant 0 : index
    %c0_53 = arith.constant 0 : index
    %61 = vector.load %arg15[%c2_51, %c0_52, %c0_53] : memref<5x128x256xbf16, #tpu.memory_space<vmem>>, vector<1x128x256xbf16>
    %62 = vector.shape_cast %61 : vector<1x128x256xbf16> to vector<128x256xbf16>
    %cst_54 = arith.constant dense<0.000000e+00> : vector<66x256xf32>
    %63 = tpu.matmul %60, %62, %cst_54 {dimension_numbers = #tpu.dot_dimension_numbers<[1], [0], [0], [1], [0, 0, 1, 1], [], []>} : vector<66x128xbf16>, vector<128x256xbf16>, vector<66x256xf32> -> vector<66x256xf32>
    %64 = arith.addf %58, %63 : vector<66x256xf32>
    %c6 = arith.constant 6 : index
    %c0_55 = arith.constant 0 : index
    %65 = vector.load %arg12[%c6, %c0_55] : memref<74x128xf32, #tpu.memory_space<vmem>>, vector<66x128xf32>
    %66 = arith.truncf %65 : vector<66x128xf32> to vector<66x128xbf16>
    %c3_56 = arith.constant 3 : index
    %c0_57 = arith.constant 0 : index
    %c0_58 = arith.constant 0 : index
    %67 = vector.load %arg15[%c3_56, %c0_57, %c0_58] : memref<5x128x256xbf16, #tpu.memory_space<vmem>>, vector<1x128x256xbf16>
    %68 = vector.shape_cast %67 : vector<1x128x256xbf16> to vector<128x256xbf16>
    %cst_59 = arith.constant dense<0.000000e+00> : vector<66x256xf32>
    %69 = tpu.matmul %66, %68, %cst_59 {dimension_numbers = #tpu.dot_dimension_numbers<[1], [0], [0], [1], [0, 0, 1, 1], [], []>} : vector<66x128xbf16>, vector<128x256xbf16>, vector<66x256xf32> -> vector<66x256xf32>
    %70 = arith.addf %64, %69 : vector<66x256xf32>
    %c8 = arith.constant 8 : index
    %c0_60 = arith.constant 0 : index
    %71 = vector.load %arg12[%c8, %c0_60] : memref<74x128xf32, #tpu.memory_space<vmem>>, vector<66x128xf32>
    %72 = arith.truncf %71 : vector<66x128xf32> to vector<66x128xbf16>
    %c4_61 = arith.constant 4 : index
    %c0_62 = arith.constant 0 : index
    %c0_63 = arith.constant 0 : index
    %73 = vector.load %arg15[%c4_61, %c0_62, %c0_63] : memref<5x128x256xbf16, #tpu.memory_space<vmem>>, vector<1x128x256xbf16>
    %74 = vector.shape_cast %73 : vector<1x128x256xbf16> to vector<128x256xbf16>
    %cst_64 = arith.constant dense<0.000000e+00> : vector<66x256xf32>
    %75 = tpu.matmul %72, %74, %cst_64 {dimension_numbers = #tpu.dot_dimension_numbers<[1], [0], [0], [1], [0, 0, 1, 1], [], []>} : vector<66x128xbf16>, vector<128x256xbf16>, vector<66x256xf32> -> vector<66x256xf32>
    %76 = arith.addf %70, %75 : vector<66x256xf32>
    %cst_65 = arith.constant 0.000000e+00 : f32
    %77 = vector.broadcast %cst_65 : f32 to vector<66x256xf32>
    %78 = arith.maximumf %76, %77 : vector<66x256xf32>
    %c0_66 = arith.constant 0 : index
    %c0_67 = arith.constant 0 : index
    %79 = vector.load %arg13[%c0_66, %c0_67] : memref<66x256xf32, #tpu.memory_space<vmem>>, vector<66x256xf32>
    tpu.vector_store %arg13[%c0_66, %c0_67], %78 {strides = array<i32>} : memref<66x256xf32, #tpu.memory_space<vmem>>, vector<66x256xf32>,
    %c0_68 = arith.constant 0 : index
    %c0_69 = arith.constant 0 : index
    %80 = vector.load %arg13[%c0_68, %c0_69] : memref<66x256xf32, #tpu.memory_space<vmem>>, vector<64x128xf32>
    %c0_70 = arith.constant 0 : index
    %c128_71 = arith.constant 128 : index
    %81 = vector.load %arg13[%c0_70, %c128_71] : memref<66x256xf32, #tpu.memory_space<vmem>>, vector<64x128xf32>
    %82 = arith.maximumf %80, %81 : vector<64x128xf32>
    %c2_72 = arith.constant 2 : index
    %c0_73 = arith.constant 0 : index
    %83 = vector.load %arg13[%c2_72, %c0_73] : memref<66x256xf32, #tpu.memory_space<vmem>>, vector<64x128xf32>
    %c2_74 = arith.constant 2 : index
    %c128_75 = arith.constant 128 : index
    %84 = vector.load %arg13[%c2_74, %c128_75] : memref<66x256xf32, #tpu.memory_space<vmem>>, vector<64x128xf32>
    %85 = arith.maximumf %83, %84 : vector<64x128xf32>
    %86 = arith.maximumf %82, %85 : vector<64x128xf32>
    %c0_76 = arith.constant 0 : index
    %c0_77 = arith.constant 0 : index
    %87 = vector.load %arg14[%c0_76, %c0_77] : memref<64x128xf32, #tpu.memory_space<vmem>>, vector<64x128xf32>
    tpu.vector_store %arg14[%c0_76, %c0_77], %86 {strides = array<i32>} : memref<64x128xf32, #tpu.memory_space<vmem>>, vector<64x128xf32>,
    %c1_i32_78 = arith.constant 1 : i32
    %88 = tpu.memref_slice %arg18[%c1_i32_78] : memref<3x!tpu.dma_semaphore, #tpu.memory_space<semaphore_mem>> -> memref<1x!tpu.dma_semaphore, #tpu.memory_space<semaphore_mem>>
    %89 = tpu.memref_squeeze %88 : memref<1x!tpu.dma_semaphore, #tpu.memory_space<semaphore_mem>> -> memref<!tpu.dma_semaphore, #tpu.memory_space<semaphore_mem>>
    tpu.wait_dma2 semaphore(%89 : memref<!tpu.dma_semaphore, #tpu.memory_space<semaphore_mem>>) src(%arg4 : memref<5x128x120xbf16, #tpu.memory_space<any>>) dst(%arg16 : memref<5x128x120xbf16, #tpu.memory_space<vmem>>)
    %c2_i32_79 = arith.constant 2 : i32
    %90 = tpu.memref_slice %arg18[%c2_i32_79] : memref<3x!tpu.dma_semaphore, #tpu.memory_space<semaphore_mem>> -> memref<1x!tpu.dma_semaphore, #tpu.memory_space<semaphore_mem>>
    %91 = tpu.memref_squeeze %90 : memref<1x!tpu.dma_semaphore, #tpu.memory_space<semaphore_mem>> -> memref<!tpu.dma_semaphore, #tpu.memory_space<semaphore_mem>>
    tpu.wait_dma2 semaphore(%91 : memref<!tpu.dma_semaphore, #tpu.memory_space<semaphore_mem>>) src(%arg5 : memref<120x84xf32, #tpu.memory_space<any>>) dst(%arg17 : memref<120x84xf32, #tpu.memory_space<vmem>>)
    %c0_80 = arith.constant 0 : index
    %c0_81 = arith.constant 0 : index
    %92 = tpu.strided_load %arg14[%c0_80, %c0_81] {strides = array<i32: 32, 1>} : memref<64x128xf32, #tpu.memory_space<vmem>>, vector<2x128xf32>
    %93 = arith.truncf %92 : vector<2x128xf32> to vector<2x128xbf16>
    %c0_82 = arith.constant 0 : index
    %c0_83 = arith.constant 0 : index
    %c0_84 = arith.constant 0 : index
    %94 = vector.load %arg16[%c0_82, %c0_83, %c0_84] : memref<5x128x120xbf16, #tpu.memory_space<vmem>>, vector<1x128x120xbf16>
    %95 = vector.shape_cast %94 : vector<1x128x120xbf16> to vector<128x120xbf16>
    %cst_85 = arith.constant dense<0.000000e+00> : vector<2x120xf32>
    %96 = tpu.matmul %93, %95, %cst_85 {dimension_numbers = #tpu.dot_dimension_numbers<[1], [0], [0], [1], [0, 0, 1, 1], [], []>} : vector<2x128xbf16>, vector<128x120xbf16>, vector<2x120xf32> -> vector<2x120xf32>
    %c4_86 = arith.constant 4 : index
    %c0_87 = arith.constant 0 : index
    %97 = tpu.strided_load %arg14[%c4_86, %c0_87] {strides = array<i32: 32, 1>} : memref<64x128xf32, #tpu.memory_space<vmem>>, vector<2x128xf32>
    %98 = arith.truncf %97 : vector<2x128xf32> to vector<2x128xbf16>
    %c1_88 = arith.constant 1 : index
    %c0_89 = arith.constant 0 : index
    %c0_90 = arith.constant 0 : index
    %99 = vector.load %arg16[%c1_88, %c0_89, %c0_90] : memref<5x128x120xbf16, #tpu.memory_space<vmem>>, vector<1x128x120xbf16>
    %100 = vector.shape_cast %99 : vector<1x128x120xbf16> to vector<128x120xbf16>
    %cst_91 = arith.constant dense<0.000000e+00> : vector<2x120xf32>
    %101 = tpu.matmul %98, %100, %cst_91 {dimension_numbers = #tpu.dot_dimension_numbers<[1], [0], [0], [1], [0, 0, 1, 1], [], []>} : vector<2x128xbf16>, vector<128x120xbf16>, vector<2x120xf32> -> vector<2x120xf32>
    %102 = arith.addf %96, %101 : vector<2x120xf32>
    %c8_92 = arith.constant 8 : index
    %c0_93 = arith.constant 0 : index
    %103 = tpu.strided_load %arg14[%c8_92, %c0_93] {strides = array<i32: 32, 1>} : memref<64x128xf32, #tpu.memory_space<vmem>>, vector<2x128xf32>
    %104 = arith.truncf %103 : vector<2x128xf32> to vector<2x128xbf16>
    %c2_94 = arith.constant 2 : index
    %c0_95 = arith.constant 0 : index
    %c0_96 = arith.constant 0 : index
    %105 = vector.load %arg16[%c2_94, %c0_95, %c0_96] : memref<5x128x120xbf16, #tpu.memory_space<vmem>>, vector<1x128x120xbf16>
    %106 = vector.shape_cast %105 : vector<1x128x120xbf16> to vector<128x120xbf16>
    %cst_97 = arith.constant dense<0.000000e+00> : vector<2x120xf32>
    %107 = tpu.matmul %104, %106, %cst_97 {dimension_numbers = #tpu.dot_dimension_numbers<[1], [0], [0], [1], [0, 0, 1, 1], [], []>} : vector<2x128xbf16>, vector<128x120xbf16>, vector<2x120xf32> -> vector<2x120xf32>
    %108 = arith.addf %102, %107 : vector<2x120xf32>
    %c12 = arith.constant 12 : index
    %c0_98 = arith.constant 0 : index
    %109 = tpu.strided_load %arg14[%c12, %c0_98] {strides = array<i32: 32, 1>} : memref<64x128xf32, #tpu.memory_space<vmem>>, vector<2x128xf32>
    %110 = arith.truncf %109 : vector<2x128xf32> to vector<2x128xbf16>
    %c3_99 = arith.constant 3 : index
    %c0_100 = arith.constant 0 : index
    %c0_101 = arith.constant 0 : index
    %111 = vector.load %arg16[%c3_99, %c0_100, %c0_101] : memref<5x128x120xbf16, #tpu.memory_space<vmem>>, vector<1x128x120xbf16>
    %112 = vector.shape_cast %111 : vector<1x128x120xbf16> to vector<128x120xbf16>
    %cst_102 = arith.constant dense<0.000000e+00> : vector<2x120xf32>
    %113 = tpu.matmul %110, %112, %cst_102 {dimension_numbers = #tpu.dot_dimension_numbers<[1], [0], [0], [1], [0, 0, 1, 1], [], []>} : vector<2x128xbf16>, vector<128x120xbf16>, vector<2x120xf32> -> vector<2x120xf32>
    %114 = arith.addf %108, %113 : vector<2x120xf32>
    %c16 = arith.constant 16 : index
    %c0_103 = arith.constant 0 : index
    %115 = tpu.strided_load %arg14[%c16, %c0_103] {strides = array<i32: 32, 1>} : memref<64x128xf32, #tpu.memory_space<vmem>>, vector<2x128xf32>
    %116 = arith.truncf %115 : vector<2x128xf32> to vector<2x128xbf16>
    %c4_104 = arith.constant 4 : index
    %c0_105 = arith.constant 0 : index
    %c0_106 = arith.constant 0 : index
    %117 = vector.load %arg16[%c4_104, %c0_105, %c0_106] : memref<5x128x120xbf16, #tpu.memory_space<vmem>>, vector<1x128x120xbf16>
    %118 = vector.shape_cast %117 : vector<1x128x120xbf16> to vector<128x120xbf16>
    %cst_107 = arith.constant dense<0.000000e+00> : vector<2x120xf32>
    %119 = tpu.matmul %116, %118, %cst_107 {dimension_numbers = #tpu.dot_dimension_numbers<[1], [0], [0], [1], [0, 0, 1, 1], [], []>} : vector<2x128xbf16>, vector<128x120xbf16>, vector<2x120xf32> -> vector<2x120xf32>
    %120 = arith.addf %114, %119 : vector<2x120xf32>
    %c0_108 = arith.constant 0 : index
    %c0_109 = arith.constant 0 : index
    %121 = vector.load %arg6[%c0_108, %c0_109] : memref<1x120xf32, #tpu.memory_space<vmem>>, vector<1x120xf32>
    %122 = vector.broadcast %121 : vector<1x120xf32> to vector<2x120xf32>
    %123 = arith.addf %120, %122 : vector<2x120xf32>
    %cst_110 = arith.constant 0.000000e+00 : f32
    %124 = vector.broadcast %cst_110 : f32 to vector<2x120xf32>
    %125 = arith.maximumf %123, %124 : vector<2x120xf32>
    %c0_111 = arith.constant 0 : index
    %c0_112 = arith.constant 0 : index
    %126 = vector.load %arg17[%c0_111, %c0_112] : memref<120x84xf32, #tpu.memory_space<vmem>>, vector<120x84xf32>
    %cst_113 = arith.constant dense<0.000000e+00> : vector<2x84xf32>
    %127 = tpu.matmul %125, %126, %cst_113 {dimension_numbers = #tpu.dot_dimension_numbers<[1], [0], [0], [1], [0, 0, 1, 1], [], []>} : vector<2x120xf32>, vector<120x84xf32>, vector<2x84xf32> -> vector<2x84xf32>
    %c0_114 = arith.constant 0 : index
    %c0_115 = arith.constant 0 : index
    %128 = vector.load %arg7[%c0_114, %c0_115] : memref<1x84xf32, #tpu.memory_space<vmem>>, vector<1x84xf32>
    %129 = vector.broadcast %128 : vector<1x84xf32> to vector<2x84xf32>
    %130 = arith.addf %127, %129 : vector<2x84xf32>
    %cst_116 = arith.constant 0.000000e+00 : f32
    %131 = vector.broadcast %cst_116 : f32 to vector<2x84xf32>
    %132 = arith.maximumf %130, %131 : vector<2x84xf32>
    %c0_117 = arith.constant 0 : index
    %c0_118 = arith.constant 0 : index
    %133 = vector.load %arg8[%c0_117, %c0_118] : memref<84x10xf32, #tpu.memory_space<vmem>>, vector<84x10xf32>
    %cst_119 = arith.constant dense<0.000000e+00> : vector<2x10xf32>
    %134 = tpu.matmul %132, %133, %cst_119 {dimension_numbers = #tpu.dot_dimension_numbers<[1], [0], [0], [1], [0, 0, 1, 1], [], []>} : vector<2x84xf32>, vector<84x10xf32>, vector<2x10xf32> -> vector<2x10xf32>
    %c0_120 = arith.constant 0 : index
    %c0_121 = arith.constant 0 : index
    %135 = vector.load %arg9[%c0_120, %c0_121] : memref<1x10xf32, #tpu.memory_space<vmem>>, vector<1x10xf32>
    %136 = vector.broadcast %135 : vector<1x10xf32> to vector<2x10xf32>
    %137 = arith.addf %134, %136 : vector<2x10xf32>
    %c0_122 = arith.constant 0 : index
    %c0_123 = arith.constant 0 : index
    %138 = vector.load %arg10[%c0_122, %c0_123] : memref<2x10xf32, #tpu.memory_space<vmem>>, vector<2x10xf32>
    tpu.vector_store %arg10[%c0_122, %c0_123], %137 {strides = array<i32>} : memref<2x10xf32, #tpu.memory_space<vmem>>, vector<2x10xf32>,
    return
  }
  func.func @transform_0(%arg0: i32) -> (i32, i32) {
    %c0_i32 = arith.constant 0 : i32
    %c0_i32_0 = arith.constant 0 : i32
    %c0_i32_1 = arith.constant 0 : i32
    return %c0_i32, %c0_i32_0 : i32, i32
  }
  func.func @transform_1(%arg0: i32) -> (i32, i32, i32) {
    %c0_i32 = arith.constant 0 : i32
    %c0_i32_0 = arith.constant 0 : i32
    %c0_i32_1 = arith.constant 0 : i32
    %c0_i32_2 = arith.constant 0 : i32
    return %c0_i32, %c0_i32_0, %c0_i32_1 : i32, i32, i32
  }
  func.func @transform_5(%arg0: i32) -> (i32, i32) {
    %c0_i32 = arith.constant 0 : i32
    %c0_i32_0 = arith.constant 0 : i32
    %c0_i32_1 = arith.constant 0 : i32
    return %c0_i32, %c0_i32_0 : i32, i32
  }
  func.func @transform_6(%arg0: i32) -> (i32, i32) {
    %c0_i32 = arith.constant 0 : i32
    %c0_i32_0 = arith.constant 0 : i32
    %c0_i32_1 = arith.constant 0 : i32
    return %c0_i32, %c0_i32_0 : i32, i32
  }
  func.func @transform_7(%arg0: i32) -> (i32, i32) {
    %c0_i32 = arith.constant 0 : i32
    %c0_i32_0 = arith.constant 0 : i32
    %c0_i32_1 = arith.constant 0 : i32
    return %c0_i32, %c0_i32_0 : i32, i32
  }
  func.func @transform_8(%arg0: i32) -> (i32, i32) {
    %c0_i32 = arith.constant 0 : i32
    %c0_i32_0 = arith.constant 0 : i32
    %c0_i32_1 = arith.constant 0 : i32
    return %c0_i32, %c0_i32_0 : i32, i32
  }
  func.func @transform_9(%arg0: i32) -> (i32, i32) {
    %c0_i32 = arith.constant 0 : i32
    %c0_i32_0 = arith.constant 0 : i32
    %c0_i32_1 = arith.constant 0 : i32
    return %c0_i32, %c0_i32_0 : i32, i32
  }
}

</mosaic_0001>

<llo_original>
// kernel: forward.1
$region0: #{forward.1}
  #allocation0 [shape = 'u32[]', space=smem, size = 0x4, offset = 0x4, fixed_abs, tag = 'smem constant byte address 0x4 - core index']
  #allocation1 [shape = 'u32[144,128]{1,0:T(1,128)}', space=vmem, size = 0x12000, scoped, tag = 'internal scratch']
  #allocation2 [shape = 'f32[75,256]{1,0:T(8,128)}', space=vmem, size = 0x14000, scoped, tag = 'scratch operand']
  #allocation3 [shape = 'f32[74,128]{1,0:T(8,128)}', space=vmem, size = 0xa000, scoped, tag = 'scratch operand']
  #allocation4 [shape = 'f32[66,256]{1,0:T(8,128)}', space=vmem, size = 0x12000, scoped, tag = 'scratch operand']
  #allocation5 [shape = 'f32[64,128]{1,0:T(8,128)}', space=vmem, size = 0x8000, scoped, tag = 'scratch operand']
  #allocation6 [shape = 'bf16[5,128,256]{2,1,0:T(16,128)(2,1)}', space=vmem, size = 0x50000, scoped, tag = 'scratch operand']
  #allocation7 [shape = 'bf16[5,128,120]{2,1,0:T(16,128)(2,1)}', space=vmem, size = 0x28000, scoped, tag = 'scratch operand']
  #allocation8 [shape = 'f32[120,84]{1,0:T(8,128)}', space=vmem, size = 0xf000, scoped, tag = 'scratch operand']
  #allocation9 [shape = 's32[3]{0}', space=sflag, size = 0xc, scoped, tag = 'scratch operand']
  #allocation12 [shape = 's32[]', space=sflag, size = 0x4, offset = 0, fixed_abs, tag = 'sflag constant byte address 0x0 - dummy sync flag']
  #allocation13 [shape = 's32[]', space=sflag, size = 0x4, offset = 0, fixed_abs, tag = 'sflag constant byte address 0x0 - dummy sync flag']
  #allocation14 [shape = 's32[]', space=sflag, size = 0x4, offset = 0, fixed_abs, tag = 'sflag constant byte address 0x0 - dummy sync flag']
  %s0 = inlined_call_operand.vmem [shape: f32[80,128], index: 0, kind: input, shape index: {}]
  %s1 = inlined_call_operand.vmem [shape: bf16[5,128,256], index: 1, kind: input, shape index: {}]
  %s2 = inlined_call_operand.vmem [shape: bf16[5,128,256], index: 2, kind: input, shape index: {}]
  %s3 = inlined_call_operand.vmem [shape: bf16[5,128,120], index: 3, kind: input, shape index: {}]
  %s4 = inlined_call_operand.vmem [shape: f32[120,84], index: 4, kind: input, shape index: {}]
  %s5 = inlined_call_operand.vmem [shape: f32[1,120], index: 5, kind: input, shape index: {}]
  %s6 = inlined_call_operand.vmem [shape: f32[1,84], index: 6, kind: input, shape index: {}]
  %s7 = inlined_call_operand.vmem [shape: f32[84,10], index: 7, kind: input, shape index: {}]
  %s8 = inlined_call_operand.vmem [shape: f32[1,10], index: 8, kind: input, shape index: {}]
  %s9 = inlined_call_operand.hbm [shape: f32[2,10], index: 9, kind: output, shape index: {}]
  %s10 = sld [smem:[#allocation0]]
  $region139: #{forward.1} parent=0
    _
  %s12 = ssub.s32 1, %s10
  %s13 = scalar_select 0, %s12, %s10
  $region1: #{forward.1} parent=0
    #allocation10 [shape = 'u8[1024]{0}', space=vmem, size = 0x400, scoped, tag = 'output window, operand 0, single buffered']
    #allocation11 [shape = 's32[1]{0}', space=sflag, size = 0x4, scoped, tag = 'scoped memory for forward.1']
    %14 = vsyncpa [#allocation11], 0
    // Predicated region
    $region2: #{forward.1} parent=1 // pred_check
      _
    $region3: #{forward.1} parent=1 // pred_check_branch
      %16 = sbr.rel (0) target = $region5
    $region4: #{forward.1} parent=1 // pred_region
      _
    $region5: #{forward.1} parent=1 // pred_fallthru
      _
    // Predicated region
    $region6: #{forward.1} parent=1 // pred_check
      _
    $region7: #{forward.1} parent=1 // pred_check_branch
      %18 = sbr.rel (0) target = $region9
    $region8: #{forward.1} parent=1 // pred_region
      _
    $region9: #{forward.1} parent=1 // pred_fallthru
      _
    // Predicated region
    $region10: #{forward.1} parent=1 // pred_check
      _
    $region11: #{forward.1} parent=1 // pred_check_branch
      %20 = sbr.rel (0) target = $region13
    $region12: #{forward.1} parent=1 // pred_region
      _
    $region13: #{forward.1} parent=1 // pred_fallthru
      _
    // Predicated region
    $region14: #{forward.1} parent=1 // pred_check
      _
    $region15: #{forward.1} parent=1 // pred_check_branch
      %22 = sbr.rel (0) target = $region17
    $region16: #{forward.1} parent=1 // pred_region
      _
    $region17: #{forward.1} parent=1 // pred_fallthru
      _
    // Predicated region
    $region18: #{forward.1} parent=1 // pred_check
      _
    $region19: #{forward.1} parent=1 // pred_check_branch
      %24 = sbr.rel (0) target = $region21
    $region20: #{forward.1} parent=1 // pred_region
      _
    $region21: #{forward.1} parent=1 // pred_fallthru
      _
    // Predicated region
    $region22: #{forward.1} parent=1 // pred_check
      _
    $region23: #{forward.1} parent=1 // pred_check_branch
      %26 = sbr.rel (0) target = $region25
    $region24: #{forward.1} parent=1 // pred_region
      _
    $region25: #{forward.1} parent=1 // pred_fallthru
      _
    %p29 = scmp.lt.u32.totalorder 4, 8
    %p30 = pneg %p29
    // Predicated region
    $region26: #{forward.1} parent=1 // pred_check
      _
    $region27: #{forward.1} parent=1 // pred_check_branch
      %32 = sbr.rel (%p29) target = $region29
    $region28: #{forward.1} parent=1 // pred_region
      %s365 = sand.u32 4, 7
      %p366 = scmp.eq.s32.totalorder %s365, 0
      %p367 = pneg %p366
      // Predicated region
      $region41: #{forward.1} parent=28 // pred_check
        _
      $region42: #{forward.1} parent=28 // pred_check_branch
        %369 = sbr.rel (%p366) target = $region44
      $region43: #{forward.1} parent=28 // pred_region
        %s370 = sand.u32 4, 7
        %s371 = ssub.s32 4, %s370
        %s372 = scalar_lea.vmem %s2, %s371
        %s373 = ssub.s32 4, %s370
        %s374 = scalar_lea.vmem [#allocation6], %s373
        loop: start=0, step=1, limit=1
        $region45: #{forward.1} parent=43 // loop_pre_header
          _
        $region46: #{forward.1} parent=43 // loop_header
          %s376 = sphi 0, %s380
          %p377 = scmp.ge.s32.totalorder %s376, 1
          %s381 = sphi %s2, %s2
          %s382 = sphi [#allocation6], [#allocation6]
        $region47: #{forward.1} parent=43 // loop_header_branch
          %379 = sbr.rel (%p377) target = $region51
        $region48: #{forward.1} parent=43 // loop_body
          _
        $region49: #{forward.1} parent=43 // loop_footer
          %s380 = sadd.s32 1, %s376
        $region50: #{forward.1} parent=43 // loop_footer_branch
          %375 = sbr.rel target = $region46
        $region51: #{forward.1} parent=43 // loop_exit
          _
        %s383 = sshllo.u32 0, %s370
        loop: start=0, step=1, limit=1
        $region52: #{forward.1} parent=43 // loop_pre_header
          _
        $region53: #{forward.1} parent=43 // loop_header
          %s385 = sphi 0, %s389
          %p386 = scmp.ge.s32.totalorder %s385, 1
          %s390 = sphi %s372, %s372
          %s391 = sphi %s374, %s374
        $region54: #{forward.1} parent=43 // loop_header_branch
          %388 = sbr.rel (%p386) target = $region58
        $region55: #{forward.1} parent=43 // loop_body
          %v392 = vld [vmem:[%s390] sm:%s383]
          %393 = vst [vmem:[%s391] sm:%s383] %v392
          %v394 = vld [vmem:[%s390 + $0x8] sm:%s383]
          %395 = vst [vmem:[%s391 + $0x4] sm:%s383] %v394
          %v396 = vld [vmem:[%s390 + $0x4] sm:%s383]
          %397 = vst [vmem:[%s391 + $0x8] sm:%s383] %v396
          %v398 = vld [vmem:[%s390 + $0xc] sm:%s383]
          %399 = vst [vmem:[%s391 + $0xc] sm:%s383] %v398
          %v400 = vld [vmem:[%s390 + $0x10] sm:%s383]
          %401 = vst [vmem:[%s391 + $0x10] sm:%s383] %v400
          %v402 = vld [vmem:[%s390 + $0x18] sm:%s383]
          %403 = vst [vmem:[%s391 + $0x14] sm:%s383] %v402
          %v404 = vld [vmem:[%s390 + $0x14] sm:%s383]
          %405 = vst [vmem:[%s391 + $0x18] sm:%s383] %v404
          %v406 = vld [vmem:[%s390 + $0x1c] sm:%s383]
          %407 = vst [vmem:[%s391 + $0x1c] sm:%s383] %v406
          %v408 = vld [vmem:[%s390 + $0x20] sm:%s383]
          %409 = vst [vmem:[%s391 + $0x20] sm:%s383] %v408
          %v410 = vld [vmem:[%s390 + $0x28] sm:%s383]
          %411 = vst [vmem:[%s391 + $0x24] sm:%s383] %v410
          %v412 = vld [vmem:[%s390 + $0x24] sm:%s383]
          %413 = vst [vmem:[%s391 + $0x28] sm:%s383] %v412
          %v414 = vld [vmem:[%s390 + $0x2c] sm:%s383]
          %415 = vst [vmem:[%s391 + $0x2c] sm:%s383] %v414
          %v416 = vld [vmem:[%s390 + $0x30] sm:%s383]
          %417 = vst [vmem:[%s391 + $0x30] sm:%s383] %v416
          %v418 = vld [vmem:[%s390 + $0x38] sm:%s383]
          %419 = vst [vmem:[%s391 + $0x34] sm:%s383] %v418
          %v420 = vld [vmem:[%s390 + $0x34] sm:%s383]
          %421 = vst [vmem:[%s391 + $0x38] sm:%s383] %v420
          %v422 = vld [vmem:[%s390 + $0x3c] sm:%s383]
          %423 = vst [vmem:[%s391 + $0x3c] sm:%s383] %v422
          %v424 = vld [vmem:[%s390 + $0x40] sm:%s383]
          %425 = vst [vmem:[%s391 + $0x40] sm:%s383] %v424
          %v426 = vld [vmem:[%s390 + $0x48] sm:%s383]
          %427 = vst [vmem:[%s391 + $0x44] sm:%s383] %v426
          %v428 = vld [vmem:[%s390 + $0x44] sm:%s383]
          %429 = vst [vmem:[%s391 + $0x48] sm:%s383] %v428
          %v430 = vld [vmem:[%s390 + $0x4c] sm:%s383]
          %431 = vst [vmem:[%s391 + $0x4c] sm:%s383] %v430
          %v432 = vld [vmem:[%s390 + $0x50] sm:%s383]
          %433 = vst [vmem:[%s391 + $0x50] sm:%s383] %v432
          %v434 = vld [vmem:[%s390 + $0x58] sm:%s383]
          %435 = vst [vmem:[%s391 + $0x54] sm:%s383] %v434
          %v436 = vld [vmem:[%s390 + $0x54] sm:%s383]
          %437 = vst [vmem:[%s391 + $0x58] sm:%s383] %v436
          %v438 = vld [vmem:[%s390 + $0x5c] sm:%s383]
          %439 = vst [vmem:[%s391 + $0x5c] sm:%s383] %v438
          %v440 = vld [vmem:[%s390 + $0x60] sm:%s383]
          %441 = vst [vmem:[%s391 + $0x60] sm:%s383] %v440
          %v442 = vld [vmem:[%s390 + $0x68] sm:%s383]
          %443 = vst [vmem:[%s391 + $0x64] sm:%s383] %v442
          %v444 = vld [vmem:[%s390 + $0x64] sm:%s383]
          %445 = vst [vmem:[%s391 + $0x68] sm:%s383] %v444
          %v446 = vld [vmem:[%s390 + $0x6c] sm:%s383]
          %447 = vst [vmem:[%s391 + $0x6c] sm:%s383] %v446
          %v448 = vld [vmem:[%s390 + $0x70] sm:%s383]
          %449 = vst [vmem:[%s391 + $0x70] sm:%s383] %v448
          %v450 = vld [vmem:[%s390 + $0x78] sm:%s383]
          %451 = vst [vmem:[%s391 + $0x74] sm:%s383] %v450
          %v452 = vld [vmem:[%s390 + $0x74] sm:%s383]
          %453 = vst [vmem:[%s391 + $0x78] sm:%s383] %v452
          %v454 = vld [vmem:[%s390 + $0x7c] sm:%s383]
          %455 = vst [vmem:[%s391 + $0x7c] sm:%s383] %v454
          %v456 = vld [vmem:[%s390 + $0x80] sm:%s383]
          %457 = vst [vmem:[%s391 + $0x80] sm:%s383] %v456
          %v458 = vld [vmem:[%s390 + $0x88] sm:%s383]
          %459 = vst [vmem:[%s391 + $0x84] sm:%s383] %v458
          %v460 = vld [vmem:[%s390 + $0x84] sm:%s383]
          %461 = vst [vmem:[%s391 + $0x88] sm:%s383] %v460
          %v462 = vld [vmem:[%s390 + $0x8c] sm:%s383]
          %463 = vst [vmem:[%s391 + $0x8c] sm:%s383] %v462
          %v464 = vld [vmem:[%s390 + $0x90] sm:%s383]
          %465 = vst [vmem:[%s391 + $0x90] sm:%s383] %v464
          %v466 = vld [vmem:[%s390 + $0x98] sm:%s383]
          %467 = vst [vmem:[%s391 + $0x94] sm:%s383] %v466
          %v468 = vld [vmem:[%s390 + $0x94] sm:%s383]
          %469 = vst [vmem:[%s391 + $0x98] sm:%s383] %v468
          %v470 = vld [vmem:[%s390 + $0x9c] sm:%s383]
          %471 = vst [vmem:[%s391 + $0x9c] sm:%s383] %v470
          %v472 = vld [vmem:[%s390 + $0xa0] sm:%s383]
          %473 = vst [vmem:[%s391 + $0xa0] sm:%s383] %v472
          %v474 = vld [vmem:[%s390 + $0xa8] sm:%s383]
          %475 = vst [vmem:[%s391 + $0xa4] sm:%s383] %v474
          %v476 = vld [vmem:[%s390 + $0xa4] sm:%s383]
          %477 = vst [vmem:[%s391 + $0xa8] sm:%s383] %v476
          %v478 = vld [vmem:[%s390 + $0xac] sm:%s383]
          %479 = vst [vmem:[%s391 + $0xac] sm:%s383] %v478
          %v480 = vld [vmem:[%s390 + $0xb0] sm:%s383]
          %481 = vst [vmem:[%s391 + $0xb0] sm:%s383] %v480
          %v482 = vld [vmem:[%s390 + $0xb8] sm:%s383]
          %483 = vst [vmem:[%s391 + $0xb4] sm:%s383] %v482
          %v484 = vld [vmem:[%s390 + $0xb4] sm:%s383]
          %485 = vst [vmem:[%s391 + $0xb8] sm:%s383] %v484
          %v486 = vld [vmem:[%s390 + $0xbc] sm:%s383]
          %487 = vst [vmem:[%s391 + $0xbc] sm:%s383] %v486
          %v488 = vld [vmem:[%s390 + $0xc0] sm:%s383]
          %489 = vst [vmem:[%s391 + $0xc0] sm:%s383] %v488
          %v490 = vld [vmem:[%s390 + $0xc8] sm:%s383]
          %491 = vst [vmem:[%s391 + $0xc4] sm:%s383] %v490
          %v492 = vld [vmem:[%s390 + $0xc4] sm:%s383]
          %493 = vst [vmem:[%s391 + $0xc8] sm:%s383] %v492
          %v494 = vld [vmem:[%s390 + $0xcc] sm:%s383]
          %495 = vst [vmem:[%s391 + $0xcc] sm:%s383] %v494
          %v496 = vld [vmem:[%s390 + $0xd0] sm:%s383]
          %497 = vst [vmem:[%s391 + $0xd0] sm:%s383] %v496
          %v498 = vld [vmem:[%s390 + $0xd8] sm:%s383]
          %499 = vst [vmem:[%s391 + $0xd4] sm:%s383] %v498
          %v500 = vld [vmem:[%s390 + $0xd4] sm:%s383]
          %501 = vst [vmem:[%s391 + $0xd8] sm:%s383] %v500
          %v502 = vld [vmem:[%s390 + $0xdc] sm:%s383]
          %503 = vst [vmem:[%s391 + $0xdc] sm:%s383] %v502
          %v504 = vld [vmem:[%s390 + $0xe0] sm:%s383]
          %505 = vst [vmem:[%s391 + $0xe0] sm:%s383] %v504
          %v506 = vld [vmem:[%s390 + $0xe8] sm:%s383]
          %507 = vst [vmem:[%s391 + $0xe4] sm:%s383] %v506
          %v508 = vld [vmem:[%s390 + $0xe4] sm:%s383]
          %509 = vst [vmem:[%s391 + $0xe8] sm:%s383] %v508
          %v510 = vld [vmem:[%s390 + $0xec] sm:%s383]
          %511 = vst [vmem:[%s391 + $0xec] sm:%s383] %v510
          %v512 = vld [vmem:[%s390 + $0xf0] sm:%s383]
          %513 = vst [vmem:[%s391 + $0xf0] sm:%s383] %v512
          %v514 = vld [vmem:[%s390 + $0xf8] sm:%s383]
          %515 = vst [vmem:[%s391 + $0xf4] sm:%s383] %v514
          %v516 = vld [vmem:[%s390 + $0xf4] sm:%s383]
          %517 = vst [vmem:[%s391 + $0xf8] sm:%s383] %v516
          %v518 = vld [vmem:[%s390 + $0xfc] sm:%s383]
          %519 = vst [vmem:[%s391 + $0xfc] sm:%s383] %v518
          %v520 = vld [vmem:[%s390 + $0x100] sm:%s383]
          %521 = vst [vmem:[%s391 + $0x100] sm:%s383] %v520
          %v522 = vld [vmem:[%s390 + $0x108] sm:%s383]
          %523 = vst [vmem:[%s391 + $0x104] sm:%s383] %v522
          %v524 = vld [vmem:[%s390 + $0x104] sm:%s383]
          %525 = vst [vmem:[%s391 + $0x108] sm:%s383] %v524
          %v526 = vld [vmem:[%s390 + $0x10c] sm:%s383]
          %527 = vst [vmem:[%s391 + $0x10c] sm:%s383] %v526
          %v528 = vld [vmem:[%s390 + $0x110] sm:%s383]
          %529 = vst [vmem:[%s391 + $0x110] sm:%s383] %v528
          %v530 = vld [vmem:[%s390 + $0x118] sm:%s383]
          %531 = vst [vmem:[%s391 + $0x114] sm:%s383] %v530
          %v532 = vld [vmem:[%s390 + $0x114] sm:%s383]
          %533 = vst [vmem:[%s391 + $0x118] sm:%s383] %v532
          %v534 = vld [vmem:[%s390 + $0x11c] sm:%s383]
          %535 = vst [vmem:[%s391 + $0x11c] sm:%s383] %v534
          %v536 = vld [vmem:[%s390 + $0x120] sm:%s383]
          %537 = vst [vmem:[%s391 + $0x120] sm:%s383] %v536
          %v538 = vld [vmem:[%s390 + $0x128] sm:%s383]
          %539 = vst [vmem:[%s391 + $0x124] sm:%s383] %v538
          %v540 = vld [vmem:[%s390 + $0x124] sm:%s383]
          %541 = vst [vmem:[%s391 + $0x128] sm:%s383] %v540
          %v542 = vld [vmem:[%s390 + $0x12c] sm:%s383]
          %543 = vst [vmem:[%s391 + $0x12c] sm:%s383] %v542
          %v544 = vld [vmem:[%s390 + $0x130] sm:%s383]
          %545 = vst [vmem:[%s391 + $0x130] sm:%s383] %v544
          %v546 = vld [vmem:[%s390 + $0x138] sm:%s383]
          %547 = vst [vmem:[%s391 + $0x134] sm:%s383] %v546
          %v548 = vld [vmem:[%s390 + $0x134] sm:%s383]
          %549 = vst [vmem:[%s391 + $0x138] sm:%s383] %v548
          %v550 = vld [vmem:[%s390 + $0x13c] sm:%s383]
          %551 = vst [vmem:[%s391 + $0x13c] sm:%s383] %v550
          %v552 = vld [vmem:[%s390 + $0x140] sm:%s383]
          %553 = vst [vmem:[%s391 + $0x140] sm:%s383] %v552
          %v554 = vld [vmem:[%s390 + $0x148] sm:%s383]
          %555 = vst [vmem:[%s391 + $0x144] sm:%s383] %v554
          %v556 = vld [vmem:[%s390 + $0x144] sm:%s383]
          %557 = vst [vmem:[%s391 + $0x148] sm:%s383] %v556
          %v558 = vld [vmem:[%s390 + $0x14c] sm:%s383]
          %559 = vst [vmem:[%s391 + $0x14c] sm:%s383] %v558
          %v560 = vld [vmem:[%s390 + $0x150] sm:%s383]
          %561 = vst [vmem:[%s391 + $0x150] sm:%s383] %v560
          %v562 = vld [vmem:[%s390 + $0x158] sm:%s383]
          %563 = vst [vmem:[%s391 + $0x154] sm:%s383] %v562
          %v564 = vld [vmem:[%s390 + $0x154] sm:%s383]
          %565 = vst [vmem:[%s391 + $0x158] sm:%s383] %v564
          %v566 = vld [vmem:[%s390 + $0x15c] sm:%s383]
          %567 = vst [vmem:[%s391 + $0x15c] sm:%s383] %v566
          %v568 = vld [vmem:[%s390 + $0x160] sm:%s383]
          %569 = vst [vmem:[%s391 + $0x160] sm:%s383] %v568
          %v570 = vld [vmem:[%s390 + $0x168] sm:%s383]
          %571 = vst [vmem:[%s391 + $0x164] sm:%s383] %v570
          %v572 = vld [vmem:[%s390 + $0x164] sm:%s383]
          %573 = vst [vmem:[%s391 + $0x168] sm:%s383] %v572
          %v574 = vld [vmem:[%s390 + $0x16c] sm:%s383]
          %575 = vst [vmem:[%s391 + $0x16c] sm:%s383] %v574
          %v576 = vld [vmem:[%s390 + $0x170] sm:%s383]
          %577 = vst [vmem:[%s391 + $0x170] sm:%s383] %v576
          %v578 = vld [vmem:[%s390 + $0x178] sm:%s383]
          %579 = vst [vmem:[%s391 + $0x174] sm:%s383] %v578
          %v580 = vld [vmem:[%s390 + $0x174] sm:%s383]
          %581 = vst [vmem:[%s391 + $0x178] sm:%s383] %v580
          %v582 = vld [vmem:[%s390 + $0x17c] sm:%s383]
          %583 = vst [vmem:[%s391 + $0x17c] sm:%s383] %v582
          %v584 = vld [vmem:[%s390 + $0x180] sm:%s383]
          %585 = vst [vmem:[%s391 + $0x180] sm:%s383] %v584
          %v586 = vld [vmem:[%s390 + $0x188] sm:%s383]
          %587 = vst [vmem:[%s391 + $0x184] sm:%s383] %v586
          %v588 = vld [vmem:[%s390 + $0x184] sm:%s383]
          %589 = vst [vmem:[%s391 + $0x188] sm:%s383] %v588
          %v590 = vld [vmem:[%s390 + $0x18c] sm:%s383]
          %591 = vst [vmem:[%s391 + $0x18c] sm:%s383] %v590
          %v592 = vld [vmem:[%s390 + $0x190] sm:%s383]
          %593 = vst [vmem:[%s391 + $0x190] sm:%s383] %v592
          %v594 = vld [vmem:[%s390 + $0x198] sm:%s383]
          %595 = vst [vmem:[%s391 + $0x194] sm:%s383] %v594
          %v596 = vld [vmem:[%s390 + $0x194] sm:%s383]
          %597 = vst [vmem:[%s391 + $0x198] sm:%s383] %v596
          %v598 = vld [vmem:[%s390 + $0x19c] sm:%s383]
          %599 = vst [vmem:[%s391 + $0x19c] sm:%s383] %v598
          %v600 = vld [vmem:[%s390 + $0x1a0] sm:%s383]
          %601 = vst [vmem:[%s391 + $0x1a0] sm:%s383] %v600
          %v602 = vld [vmem:[%s390 + $0x1a8] sm:%s383]
          %603 = vst [vmem:[%s391 + $0x1a4] sm:%s383] %v602
          %v604 = vld [vmem:[%s390 + $0x1a4] sm:%s383]
          %605 = vst [vmem:[%s391 + $0x1a8] sm:%s383] %v604
          %v606 = vld [vmem:[%s390 + $0x1ac] sm:%s383]
          %607 = vst [vmem:[%s391 + $0x1ac] sm:%s383] %v606
          %v608 = vld [vmem:[%s390 + $0x1b0] sm:%s383]
          %609 = vst [vmem:[%s391 + $0x1b0] sm:%s383] %v608
          %v610 = vld [vmem:[%s390 + $0x1b8] sm:%s383]
          %611 = vst [vmem:[%s391 + $0x1b4] sm:%s383] %v610
          %v612 = vld [vmem:[%s390 + $0x1b4] sm:%s383]
          %613 = vst [vmem:[%s391 + $0x1b8] sm:%s383] %v612
          %v614 = vld [vmem:[%s390 + $0x1bc] sm:%s383]
          %615 = vst [vmem:[%s391 + $0x1bc] sm:%s383] %v614
          %v616 = vld [vmem:[%s390 + $0x1c0] sm:%s383]
          %617 = vst [vmem:[%s391 + $0x1c0] sm:%s383] %v616
          %v618 = vld [vmem:[%s390 + $0x1c8] sm:%s383]
          %619 = vst [vmem:[%s391 + $0x1c4] sm:%s383] %v618
          %v620 = vld [vmem:[%s390 + $0x1c4] sm:%s383]
          %621 = vst [vmem:[%s391 + $0x1c8] sm:%s383] %v620
          %v622 = vld [vmem:[%s390 + $0x1cc] sm:%s383]
          %623 = vst [vmem:[%s391 + $0x1cc] sm:%s383] %v622
          %v624 = vld [vmem:[%s390 + $0x1d0] sm:%s383]
          %625 = vst [vmem:[%s391 + $0x1d0] sm:%s383] %v624
          %v626 = vld [vmem:[%s390 + $0x1d8] sm:%s383]
          %627 = vst [vmem:[%s391 + $0x1d4] sm:%s383] %v626
          %v628 = vld [vmem:[%s390 + $0x1d4] sm:%s383]
          %629 = vst [vmem:[%s391 + $0x1d8] sm:%s383] %v628
          %v630 = vld [vmem:[%s390 + $0x1dc] sm:%s383]
          %631 = vst [vmem:[%s391 + $0x1dc] sm:%s383] %v630
          %v632 = vld [vmem:[%s390 + $0x1e0] sm:%s383]
          %633 = vst [vmem:[%s391 + $0x1e0] sm:%s383] %v632
          %v634 = vld [vmem:[%s390 + $0x1e8] sm:%s383]
          %635 = vst [vmem:[%s391 + $0x1e4] sm:%s383] %v634
          %v636 = vld [vmem:[%s390 + $0x1e4] sm:%s383]
          %637 = vst [vmem:[%s391 + $0x1e8] sm:%s383] %v636
          %v638 = vld [vmem:[%s390 + $0x1ec] sm:%s383]
          %639 = vst [vmem:[%s391 + $0x1ec] sm:%s383] %v638
          %v640 = vld [vmem:[%s390 + $0x1f0] sm:%s383]
          %641 = vst [vmem:[%s391 + $0x1f0] sm:%s383] %v640
          %v642 = vld [vmem:[%s390 + $0x1f8] sm:%s383]
          %643 = vst [vmem:[%s391 + $0x1f4] sm:%s383] %v642
          %v644 = vld [vmem:[%s390 + $0x1f4] sm:%s383]
          %645 = vst [vmem:[%s391 + $0x1f8] sm:%s383] %v644
          %v646 = vld [vmem:[%s390 + $0x1fc] sm:%s383]
          %647 = vst [vmem:[%s391 + $0x1fc] sm:%s383] %v646
          %v648 = vld [vmem:[%s390 + $0x200] sm:%s383]
          %649 = vst [vmem:[%s391 + $0x200] sm:%s383] %v648
          %v650 = vld [vmem:[%s390 + $0x208] sm:%s383]
          %651 = vst [vmem:[%s391 + $0x204] sm:%s383] %v650
          %v652 = vld [vmem:[%s390 + $0x204] sm:%s383]
          %653 = vst [vmem:[%s391 + $0x208] sm:%s383] %v652
          %v654 = vld [vmem:[%s390 + $0x20c] sm:%s383]
          %655 = vst [vmem:[%s391 + $0x20c] sm:%s383] %v654
          %v656 = vld [vmem:[%s390 + $0x210] sm:%s383]
          %657 = vst [vmem:[%s391 + $0x210] sm:%s383] %v656
          %v658 = vld [vmem:[%s390 + $0x218] sm:%s383]
          %659 = vst [vmem:[%s391 + $0x214] sm:%s383] %v658
          %v660 = vld [vmem:[%s390 + $0x214] sm:%s383]
          %661 = vst [vmem:[%s391 + $0x218] sm:%s383] %v660
          %v662 = vld [vmem:[%s390 + $0x21c] sm:%s383]
          %663 = vst [vmem:[%s391 + $0x21c] sm:%s383] %v662
          %v664 = vld [vmem:[%s390 + $0x220] sm:%s383]
          %665 = vst [vmem:[%s391 + $0x220] sm:%s383] %v664
          %v666 = vld [vmem:[%s390 + $0x228] sm:%s383]
          %667 = vst [vmem:[%s391 + $0x224] sm:%s383] %v666
          %v668 = vld [vmem:[%s390 + $0x224] sm:%s383]
          %669 = vst [vmem:[%s391 + $0x228] sm:%s383] %v668
          %v670 = vld [vmem:[%s390 + $0x22c] sm:%s383]
          %671 = vst [vmem:[%s391 + $0x22c] sm:%s383] %v670
          %v672 = vld [vmem:[%s390 + $0x230] sm:%s383]
          %673 = vst [vmem:[%s391 + $0x230] sm:%s383] %v672
          %v674 = vld [vmem:[%s390 + $0x238] sm:%s383]
          %675 = vst [vmem:[%s391 + $0x234] sm:%s383] %v674
          %v676 = vld [vmem:[%s390 + $0x234] sm:%s383]
          %677 = vst [vmem:[%s391 + $0x238] sm:%s383] %v676
          %v678 = vld [vmem:[%s390 + $0x23c] sm:%s383]
          %679 = vst [vmem:[%s391 + $0x23c] sm:%s383] %v678
          %v680 = vld [vmem:[%s390 + $0x240] sm:%s383]
          %681 = vst [vmem:[%s391 + $0x240] sm:%s383] %v680
          %v682 = vld [vmem:[%s390 + $0x248] sm:%s383]
          %683 = vst [vmem:[%s391 + $0x244] sm:%s383] %v682
          %v684 = vld [vmem:[%s390 + $0x244] sm:%s383]
          %685 = vst [vmem:[%s391 + $0x248] sm:%s383] %v684
          %v686 = vld [vmem:[%s390 + $0x24c] sm:%s383]
          %687 = vst [vmem:[%s391 + $0x24c] sm:%s383] %v686
          %v688 = vld [vmem:[%s390 + $0x250] sm:%s383]
          %689 = vst [vmem:[%s391 + $0x250] sm:%s383] %v688
          %v690 = vld [vmem:[%s390 + $0x258] sm:%s383]
          %691 = vst [vmem:[%s391 + $0x254] sm:%s383] %v690
          %v692 = vld [vmem:[%s390 + $0x254] sm:%s383]
          %693 = vst [vmem:[%s391 + $0x258] sm:%s383] %v692
          %v694 = vld [vmem:[%s390 + $0x25c] sm:%s383]
          %695 = vst [vmem:[%s391 + $0x25c] sm:%s383] %v694
          %v696 = vld [vmem:[%s390 + $0x260] sm:%s383]
          %697 = vst [vmem:[%s391 + $0x260] sm:%s383] %v696
          %v698 = vld [vmem:[%s390 + $0x268] sm:%s383]
          %699 = vst [vmem:[%s391 + $0x264] sm:%s383] %v698
          %v700 = vld [vmem:[%s390 + $0x264] sm:%s383]
          %701 = vst [vmem:[%s391 + $0x268] sm:%s383] %v700
          %v702 = vld [vmem:[%s390 + $0x26c] sm:%s383]
          %703 = vst [vmem:[%s391 + $0x26c] sm:%s383] %v702
          %v704 = vld [vmem:[%s390 + $0x270] sm:%s383]
          %705 = vst [vmem:[%s391 + $0x270] sm:%s383] %v704
          %v706 = vld [vmem:[%s390 + $0x278] sm:%s383]
          %707 = vst [vmem:[%s391 + $0x274] sm:%s383] %v706
          %v708 = vld [vmem:[%s390 + $0x274] sm:%s383]
          %709 = vst [vmem:[%s391 + $0x278] sm:%s383] %v708
          %v710 = vld [vmem:[%s390 + $0x27c] sm:%s383]
          %711 = vst [vmem:[%s391 + $0x27c] sm:%s383] %v710
        $region56: #{forward.1} parent=43 // loop_footer
          %s389 = sadd.s32 1, %s385
        $region57: #{forward.1} parent=43 // loop_footer_branch
          %384 = sbr.rel target = $region53
        $region58: #{forward.1} parent=43 // loop_exit
          _
      $region44: #{forward.1} parent=28 // pred_fallthru
        _
    $region29: #{forward.1} parent=1 // pred_fallthru
      _
    // Predicated region
    $region30: #{forward.1} parent=1 // pred_check
      %p33 = pneg %p29
    $region31: #{forward.1} parent=1 // pred_check_branch
      %35 = sbr.rel (%p33) target = $region33
    $region32: #{forward.1} parent=1 // pred_region
      %s36 = sshllo.u32 0, 4
      loop: start=0, step=1, limit=1
      $region34: #{forward.1} parent=32 // loop_pre_header
        _
      $region35: #{forward.1} parent=32 // loop_header
        %s38 = sphi 0, %s42
        %p39 = scmp.ge.s32.totalorder %s38, 1
        %s43 = sphi %s2, %s2
        %s44 = sphi [#allocation6], [#allocation6]
      $region36: #{forward.1} parent=32 // loop_header_branch
        %41 = sbr.rel (%p39) target = $region40
      $region37: #{forward.1} parent=32 // loop_body
        %v45 = vld [vmem:[%s43] sm:%s36]
        %46 = vst [vmem:[%s44] sm:%s36] %v45
        %v47 = vld [vmem:[%s43 + $0x8] sm:%s36]
        %48 = vst [vmem:[%s44 + $0x4] sm:%s36] %v47
        %v49 = vld [vmem:[%s43 + $0x4] sm:%s36]
        %50 = vst [vmem:[%s44 + $0x8] sm:%s36] %v49
        %v51 = vld [vmem:[%s43 + $0xc] sm:%s36]
        %52 = vst [vmem:[%s44 + $0xc] sm:%s36] %v51
        %v53 = vld [vmem:[%s43 + $0x10] sm:%s36]
        %54 = vst [vmem:[%s44 + $0x10] sm:%s36] %v53
        %v55 = vld [vmem:[%s43 + $0x18] sm:%s36]
        %56 = vst [vmem:[%s44 + $0x14] sm:%s36] %v55
        %v57 = vld [vmem:[%s43 + $0x14] sm:%s36]
        %58 = vst [vmem:[%s44 + $0x18] sm:%s36] %v57
        %v59 = vld [vmem:[%s43 + $0x1c] sm:%s36]
        %60 = vst [vmem:[%s44 + $0x1c] sm:%s36] %v59
        %v61 = vld [vmem:[%s43 + $0x20] sm:%s36]
        %62 = vst [vmem:[%s44 + $0x20] sm:%s36] %v61
        %v63 = vld [vmem:[%s43 + $0x28] sm:%s36]
        %64 = vst [vmem:[%s44 + $0x24] sm:%s36] %v63
        %v65 = vld [vmem:[%s43 + $0x24] sm:%s36]
        %66 = vst [vmem:[%s44 + $0x28] sm:%s36] %v65
        %v67 = vld [vmem:[%s43 + $0x2c] sm:%s36]
        %68 = vst [vmem:[%s44 + $0x2c] sm:%s36] %v67
        %v69 = vld [vmem:[%s43 + $0x30] sm:%s36]
        %70 = vst [vmem:[%s44 + $0x30] sm:%s36] %v69
        %v71 = vld [vmem:[%s43 + $0x38] sm:%s36]
        %72 = vst [vmem:[%s44 + $0x34] sm:%s36] %v71
        %v73 = vld [vmem:[%s43 + $0x34] sm:%s36]
        %74 = vst [vmem:[%s44 + $0x38] sm:%s36] %v73
        %v75 = vld [vmem:[%s43 + $0x3c] sm:%s36]
        %76 = vst [vmem:[%s44 + $0x3c] sm:%s36] %v75
        %v77 = vld [vmem:[%s43 + $0x40] sm:%s36]
        %78 = vst [vmem:[%s44 + $0x40] sm:%s36] %v77
        %v79 = vld [vmem:[%s43 + $0x48] sm:%s36]
        %80 = vst [vmem:[%s44 + $0x44] sm:%s36] %v79
        %v81 = vld [vmem:[%s43 + $0x44] sm:%s36]
        %82 = vst [vmem:[%s44 + $0x48] sm:%s36] %v81
        %v83 = vld [vmem:[%s43 + $0x4c] sm:%s36]
        %84 = vst [vmem:[%s44 + $0x4c] sm:%s36] %v83
        %v85 = vld [vmem:[%s43 + $0x50] sm:%s36]
        %86 = vst [vmem:[%s44 + $0x50] sm:%s36] %v85
        %v87 = vld [vmem:[%s43 + $0x58] sm:%s36]
        %88 = vst [vmem:[%s44 + $0x54] sm:%s36] %v87
        %v89 = vld [vmem:[%s43 + $0x54] sm:%s36]
        %90 = vst [vmem:[%s44 + $0x58] sm:%s36] %v89
        %v91 = vld [vmem:[%s43 + $0x5c] sm:%s36]
        %92 = vst [vmem:[%s44 + $0x5c] sm:%s36] %v91
        %v93 = vld [vmem:[%s43 + $0x60] sm:%s36]
        %94 = vst [vmem:[%s44 + $0x60] sm:%s36] %v93
        %v95 = vld [vmem:[%s43 + $0x68] sm:%s36]
        %96 = vst [vmem:[%s44 + $0x64] sm:%s36] %v95
        %v97 = vld [vmem:[%s43 + $0x64] sm:%s36]
        %98 = vst [vmem:[%s44 + $0x68] sm:%s36] %v97
        %v99 = vld [vmem:[%s43 + $0x6c] sm:%s36]
        %100 = vst [vmem:[%s44 + $0x6c] sm:%s36] %v99
        %v101 = vld [vmem:[%s43 + $0x70] sm:%s36]
        %102 = vst [vmem:[%s44 + $0x70] sm:%s36] %v101
        %v103 = vld [vmem:[%s43 + $0x78] sm:%s36]
        %104 = vst [vmem:[%s44 + $0x74] sm:%s36] %v103
        %v105 = vld [vmem:[%s43 + $0x74] sm:%s36]
        %106 = vst [vmem:[%s44 + $0x78] sm:%s36] %v105
        %v107 = vld [vmem:[%s43 + $0x7c] sm:%s36]
        %108 = vst [vmem:[%s44 + $0x7c] sm:%s36] %v107
        %v109 = vld [vmem:[%s43 + $0x80] sm:%s36]
        %110 = vst [vmem:[%s44 + $0x80] sm:%s36] %v109
        %v111 = vld [vmem:[%s43 + $0x88] sm:%s36]
        %112 = vst [vmem:[%s44 + $0x84] sm:%s36] %v111
        %v113 = vld [vmem:[%s43 + $0x84] sm:%s36]
        %114 = vst [vmem:[%s44 + $0x88] sm:%s36] %v113
        %v115 = vld [vmem:[%s43 + $0x8c] sm:%s36]
        %116 = vst [vmem:[%s44 + $0x8c] sm:%s36] %v115
        %v117 = vld [vmem:[%s43 + $0x90] sm:%s36]
        %118 = vst [vmem:[%s44 + $0x90] sm:%s36] %v117
        %v119 = vld [vmem:[%s43 + $0x98] sm:%s36]
        %120 = vst [vmem:[%s44 + $0x94] sm:%s36] %v119
        %v121 = vld [vmem:[%s43 + $0x94] sm:%s36]
        %122 = vst [vmem:[%s44 + $0x98] sm:%s36] %v121
        %v123 = vld [vmem:[%s43 + $0x9c] sm:%s36]
        %124 = vst [vmem:[%s44 + $0x9c] sm:%s36] %v123
        %v125 = vld [vmem:[%s43 + $0xa0] sm:%s36]
        %126 = vst [vmem:[%s44 + $0xa0] sm:%s36] %v125
        %v127 = vld [vmem:[%s43 + $0xa8] sm:%s36]
        %128 = vst [vmem:[%s44 + $0xa4] sm:%s36] %v127
        %v129 = vld [vmem:[%s43 + $0xa4] sm:%s36]
        %130 = vst [vmem:[%s44 + $0xa8] sm:%s36] %v129
        %v131 = vld [vmem:[%s43 + $0xac] sm:%s36]
        %132 = vst [vmem:[%s44 + $0xac] sm:%s36] %v131
        %v133 = vld [vmem:[%s43 + $0xb0] sm:%s36]
        %134 = vst [vmem:[%s44 + $0xb0] sm:%s36] %v133
        %v135 = vld [vmem:[%s43 + $0xb8] sm:%s36]
        %136 = vst [vmem:[%s44 + $0xb4] sm:%s36] %v135
        %v137 = vld [vmem:[%s43 + $0xb4] sm:%s36]
        %138 = vst [vmem:[%s44 + $0xb8] sm:%s36] %v137
        %v139 = vld [vmem:[%s43 + $0xbc] sm:%s36]
        %140 = vst [vmem:[%s44 + $0xbc] sm:%s36] %v139
        %v141 = vld [vmem:[%s43 + $0xc0] sm:%s36]
        %142 = vst [vmem:[%s44 + $0xc0] sm:%s36] %v141
        %v143 = vld [vmem:[%s43 + $0xc8] sm:%s36]
        %144 = vst [vmem:[%s44 + $0xc4] sm:%s36] %v143
        %v145 = vld [vmem:[%s43 + $0xc4] sm:%s36]
        %146 = vst [vmem:[%s44 + $0xc8] sm:%s36] %v145
        %v147 = vld [vmem:[%s43 + $0xcc] sm:%s36]
        %148 = vst [vmem:[%s44 + $0xcc] sm:%s36] %v147
        %v149 = vld [vmem:[%s43 + $0xd0] sm:%s36]
        %150 = vst [vmem:[%s44 + $0xd0] sm:%s36] %v149
        %v151 = vld [vmem:[%s43 + $0xd8] sm:%s36]
        %152 = vst [vmem:[%s44 + $0xd4] sm:%s36] %v151
        %v153 = vld [vmem:[%s43 + $0xd4] sm:%s36]
        %154 = vst [vmem:[%s44 + $0xd8] sm:%s36] %v153
        %v155 = vld [vmem:[%s43 + $0xdc] sm:%s36]
        %156 = vst [vmem:[%s44 + $0xdc] sm:%s36] %v155
        %v157 = vld [vmem:[%s43 + $0xe0] sm:%s36]
        %158 = vst [vmem:[%s44 + $0xe0] sm:%s36] %v157
        %v159 = vld [vmem:[%s43 + $0xe8] sm:%s36]
        %160 = vst [vmem:[%s44 + $0xe4] sm:%s36] %v159
        %v161 = vld [vmem:[%s43 + $0xe4] sm:%s36]
        %162 = vst [vmem:[%s44 + $0xe8] sm:%s36] %v161
        %v163 = vld [vmem:[%s43 + $0xec] sm:%s36]
        %164 = vst [vmem:[%s44 + $0xec] sm:%s36] %v163
        %v165 = vld [vmem:[%s43 + $0xf0] sm:%s36]
        %166 = vst [vmem:[%s44 + $0xf0] sm:%s36] %v165
        %v167 = vld [vmem:[%s43 + $0xf8] sm:%s36]
        %168 = vst [vmem:[%s44 + $0xf4] sm:%s36] %v167
        %v169 = vld [vmem:[%s43 + $0xf4] sm:%s36]
        %170 = vst [vmem:[%s44 + $0xf8] sm:%s36] %v169
        %v171 = vld [vmem:[%s43 + $0xfc] sm:%s36]
        %172 = vst [vmem:[%s44 + $0xfc] sm:%s36] %v171
        %v173 = vld [vmem:[%s43 + $0x100] sm:%s36]
        %174 = vst [vmem:[%s44 + $0x100] sm:%s36] %v173
        %v175 = vld [vmem:[%s43 + $0x108] sm:%s36]
        %176 = vst [vmem:[%s44 + $0x104] sm:%s36] %v175
        %v177 = vld [vmem:[%s43 + $0x104] sm:%s36]
        %178 = vst [vmem:[%s44 + $0x108] sm:%s36] %v177
        %v179 = vld [vmem:[%s43 + $0x10c] sm:%s36]
        %180 = vst [vmem:[%s44 + $0x10c] sm:%s36] %v179
        %v181 = vld [vmem:[%s43 + $0x110] sm:%s36]
        %182 = vst [vmem:[%s44 + $0x110] sm:%s36] %v181
        %v183 = vld [vmem:[%s43 + $0x118] sm:%s36]
        %184 = vst [vmem:[%s44 + $0x114] sm:%s36] %v183
        %v185 = vld [vmem:[%s43 + $0x114] sm:%s36]
        %186 = vst [vmem:[%s44 + $0x118] sm:%s36] %v185
        %v187 = vld [vmem:[%s43 + $0x11c] sm:%s36]
        %188 = vst [vmem:[%s44 + $0x11c] sm:%s36] %v187
        %v189 = vld [vmem:[%s43 + $0x120] sm:%s36]
        %190 = vst [vmem:[%s44 + $0x120] sm:%s36] %v189
        %v191 = vld [vmem:[%s43 + $0x128] sm:%s36]
        %192 = vst [vmem:[%s44 + $0x124] sm:%s36] %v191
        %v193 = vld [vmem:[%s43 + $0x124] sm:%s36]
        %194 = vst [vmem:[%s44 + $0x128] sm:%s36] %v193
        %v195 = vld [vmem:[%s43 + $0x12c] sm:%s36]
        %196 = vst [vmem:[%s44 + $0x12c] sm:%s36] %v195
        %v197 = vld [vmem:[%s43 + $0x130] sm:%s36]
        %198 = vst [vmem:[%s44 + $0x130] sm:%s36] %v197
        %v199 = vld [vmem:[%s43 + $0x138] sm:%s36]
        %200 = vst [vmem:[%s44 + $0x134] sm:%s36] %v199
        %v201 = vld [vmem:[%s43 + $0x134] sm:%s36]
        %202 = vst [vmem:[%s44 + $0x138] sm:%s36] %v201
        %v203 = vld [vmem:[%s43 + $0x13c] sm:%s36]
        %204 = vst [vmem:[%s44 + $0x13c] sm:%s36] %v203
        %v205 = vld [vmem:[%s43 + $0x140] sm:%s36]
        %206 = vst [vmem:[%s44 + $0x140] sm:%s36] %v205
        %v207 = vld [vmem:[%s43 + $0x148] sm:%s36]
        %208 = vst [vmem:[%s44 + $0x144] sm:%s36] %v207
        %v209 = vld [vmem:[%s43 + $0x144] sm:%s36]
        %210 = vst [vmem:[%s44 + $0x148] sm:%s36] %v209
        %v211 = vld [vmem:[%s43 + $0x14c] sm:%s36]
        %212 = vst [vmem:[%s44 + $0x14c] sm:%s36] %v211
        %v213 = vld [vmem:[%s43 + $0x150] sm:%s36]
        %214 = vst [vmem:[%s44 + $0x150] sm:%s36] %v213
        %v215 = vld [vmem:[%s43 + $0x158] sm:%s36]
        %216 = vst [vmem:[%s44 + $0x154] sm:%s36] %v215
        %v217 = vld [vmem:[%s43 + $0x154] sm:%s36]
        %218 = vst [vmem:[%s44 + $0x158] sm:%s36] %v217
        %v219 = vld [vmem:[%s43 + $0x15c] sm:%s36]
        %220 = vst [vmem:[%s44 + $0x15c] sm:%s36] %v219
        %v221 = vld [vmem:[%s43 + $0x160] sm:%s36]
        %222 = vst [vmem:[%s44 + $0x160] sm:%s36] %v221
        %v223 = vld [vmem:[%s43 + $0x168] sm:%s36]
        %224 = vst [vmem:[%s44 + $0x164] sm:%s36] %v223
        %v225 = vld [vmem:[%s43 + $0x164] sm:%s36]
        %226 = vst [vmem:[%s44 + $0x168] sm:%s36] %v225
        %v227 = vld [vmem:[%s43 + $0x16c] sm:%s36]
        %228 = vst [vmem:[%s44 + $0x16c] sm:%s36] %v227
        %v229 = vld [vmem:[%s43 + $0x170] sm:%s36]
        %230 = vst [vmem:[%s44 + $0x170] sm:%s36] %v229
        %v231 = vld [vmem:[%s43 + $0x178] sm:%s36]
        %232 = vst [vmem:[%s44 + $0x174] sm:%s36] %v231
        %v233 = vld [vmem:[%s43 + $0x174] sm:%s36]
        %234 = vst [vmem:[%s44 + $0x178] sm:%s36] %v233
        %v235 = vld [vmem:[%s43 + $0x17c] sm:%s36]
        %236 = vst [vmem:[%s44 + $0x17c] sm:%s36] %v235
        %v237 = vld [vmem:[%s43 + $0x180] sm:%s36]
        %238 = vst [vmem:[%s44 + $0x180] sm:%s36] %v237
        %v239 = vld [vmem:[%s43 + $0x188] sm:%s36]
        %240 = vst [vmem:[%s44 + $0x184] sm:%s36] %v239
        %v241 = vld [vmem:[%s43 + $0x184] sm:%s36]
        %242 = vst [vmem:[%s44 + $0x188] sm:%s36] %v241
        %v243 = vld [vmem:[%s43 + $0x18c] sm:%s36]
        %244 = vst [vmem:[%s44 + $0x18c] sm:%s36] %v243
        %v245 = vld [vmem:[%s43 + $0x190] sm:%s36]
        %246 = vst [vmem:[%s44 + $0x190] sm:%s36] %v245
        %v247 = vld [vmem:[%s43 + $0x198] sm:%s36]
        %248 = vst [vmem:[%s44 + $0x194] sm:%s36] %v247
        %v249 = vld [vmem:[%s43 + $0x194] sm:%s36]
        %250 = vst [vmem:[%s44 + $0x198] sm:%s36] %v249
        %v251 = vld [vmem:[%s43 + $0x19c] sm:%s36]
        %252 = vst [vmem:[%s44 + $0x19c] sm:%s36] %v251
        %v253 = vld [vmem:[%s43 + $0x1a0] sm:%s36]
        %254 = vst [vmem:[%s44 + $0x1a0] sm:%s36] %v253
        %v255 = vld [vmem:[%s43 + $0x1a8] sm:%s36]
        %256 = vst [vmem:[%s44 + $0x1a4] sm:%s36] %v255
        %v257 = vld [vmem:[%s43 + $0x1a4] sm:%s36]
        %258 = vst [vmem:[%s44 + $0x1a8] sm:%s36] %v257
        %v259 = vld [vmem:[%s43 + $0x1ac] sm:%s36]
        %260 = vst [vmem:[%s44 + $0x1ac] sm:%s36] %v259
        %v261 = vld [vmem:[%s43 + $0x1b0] sm:%s36]
        %262 = vst [vmem:[%s44 + $0x1b0] sm:%s36] %v261
        %v263 = vld [vmem:[%s43 + $0x1b8] sm:%s36]
        %264 = vst [vmem:[%s44 + $0x1b4] sm:%s36] %v263
        %v265 = vld [vmem:[%s43 + $0x1b4] sm:%s36]
        %266 = vst [vmem:[%s44 + $0x1b8] sm:%s36] %v265
        %v267 = vld [vmem:[%s43 + $0x1bc] sm:%s36]
        %268 = vst [vmem:[%s44 + $0x1bc] sm:%s36] %v267
        %v269 = vld [vmem:[%s43 + $0x1c0] sm:%s36]
        %270 = vst [vmem:[%s44 + $0x1c0] sm:%s36] %v269
        %v271 = vld [vmem:[%s43 + $0x1c8] sm:%s36]
        %272 = vst [vmem:[%s44 + $0x1c4] sm:%s36] %v271
        %v273 = vld [vmem:[%s43 + $0x1c4] sm:%s36]
        %274 = vst [vmem:[%s44 + $0x1c8] sm:%s36] %v273
        %v275 = vld [vmem:[%s43 + $0x1cc] sm:%s36]
        %276 = vst [vmem:[%s44 + $0x1cc] sm:%s36] %v275
        %v277 = vld [vmem:[%s43 + $0x1d0] sm:%s36]
        %278 = vst [vmem:[%s44 + $0x1d0] sm:%s36] %v277
        %v279 = vld [vmem:[%s43 + $0x1d8] sm:%s36]
        %280 = vst [vmem:[%s44 + $0x1d4] sm:%s36] %v279
        %v281 = vld [vmem:[%s43 + $0x1d4] sm:%s36]
        %282 = vst [vmem:[%s44 + $0x1d8] sm:%s36] %v281
        %v283 = vld [vmem:[%s43 + $0x1dc] sm:%s36]
        %284 = vst [vmem:[%s44 + $0x1dc] sm:%s36] %v283
        %v285 = vld [vmem:[%s43 + $0x1e0] sm:%s36]
        %286 = vst [vmem:[%s44 + $0x1e0] sm:%s36] %v285
        %v287 = vld [vmem:[%s43 + $0x1e8] sm:%s36]
        %288 = vst [vmem:[%s44 + $0x1e4] sm:%s36] %v287
        %v289 = vld [vmem:[%s43 + $0x1e4] sm:%s36]
        %290 = vst [vmem:[%s44 + $0x1e8] sm:%s36] %v289
        %v291 = vld [vmem:[%s43 + $0x1ec] sm:%s36]
        %292 = vst [vmem:[%s44 + $0x1ec] sm:%s36] %v291
        %v293 = vld [vmem:[%s43 + $0x1f0] sm:%s36]
        %294 = vst [vmem:[%s44 + $0x1f0] sm:%s36] %v293
        %v295 = vld [vmem:[%s43 + $0x1f8] sm:%s36]
        %296 = vst [vmem:[%s44 + $0x1f4] sm:%s36] %v295
        %v297 = vld [vmem:[%s43 + $0x1f4] sm:%s36]
        %298 = vst [vmem:[%s44 + $0x1f8] sm:%s36] %v297
        %v299 = vld [vmem:[%s43 + $0x1fc] sm:%s36]
        %300 = vst [vmem:[%s44 + $0x1fc] sm:%s36] %v299
        %v301 = vld [vmem:[%s43 + $0x200] sm:%s36]
        %302 = vst [vmem:[%s44 + $0x200] sm:%s36] %v301
        %v303 = vld [vmem:[%s43 + $0x208] sm:%s36]
        %304 = vst [vmem:[%s44 + $0x204] sm:%s36] %v303
        %v305 = vld [vmem:[%s43 + $0x204] sm:%s36]
        %306 = vst [vmem:[%s44 + $0x208] sm:%s36] %v305
        %v307 = vld [vmem:[%s43 + $0x20c] sm:%s36]
        %308 = vst [vmem:[%s44 + $0x20c] sm:%s36] %v307
        %v309 = vld [vmem:[%s43 + $0x210] sm:%s36]
        %310 = vst [vmem:[%s44 + $0x210] sm:%s36] %v309
        %v311 = vld [vmem:[%s43 + $0x218] sm:%s36]
        %312 = vst [vmem:[%s44 + $0x214] sm:%s36] %v311
        %v313 = vld [vmem:[%s43 + $0x214] sm:%s36]
        %314 = vst [vmem:[%s44 + $0x218] sm:%s36] %v313
        %v315 = vld [vmem:[%s43 + $0x21c] sm:%s36]
        %316 = vst [vmem:[%s44 + $0x21c] sm:%s36] %v315
        %v317 = vld [vmem:[%s43 + $0x220] sm:%s36]
        %318 = vst [vmem:[%s44 + $0x220] sm:%s36] %v317
        %v319 = vld [vmem:[%s43 + $0x228] sm:%s36]
        %320 = vst [vmem:[%s44 + $0x224] sm:%s36] %v319
        %v321 = vld [vmem:[%s43 + $0x224] sm:%s36]
        %322 = vst [vmem:[%s44 + $0x228] sm:%s36] %v321
        %v323 = vld [vmem:[%s43 + $0x22c] sm:%s36]
        %324 = vst [vmem:[%s44 + $0x22c] sm:%s36] %v323
        %v325 = vld [vmem:[%s43 + $0x230] sm:%s36]
        %326 = vst [vmem:[%s44 + $0x230] sm:%s36] %v325
        %v327 = vld [vmem:[%s43 + $0x238] sm:%s36]
        %328 = vst [vmem:[%s44 + $0x234] sm:%s36] %v327
        %v329 = vld [vmem:[%s43 + $0x234] sm:%s36]
        %330 = vst [vmem:[%s44 + $0x238] sm:%s36] %v329
        %v331 = vld [vmem:[%s43 + $0x23c] sm:%s36]
        %332 = vst [vmem:[%s44 + $0x23c] sm:%s36] %v331
        %v333 = vld [vmem:[%s43 + $0x240] sm:%s36]
        %334 = vst [vmem:[%s44 + $0x240] sm:%s36] %v333
        %v335 = vld [vmem:[%s43 + $0x248] sm:%s36]
        %336 = vst [vmem:[%s44 + $0x244] sm:%s36] %v335
        %v337 = vld [vmem:[%s43 + $0x244] sm:%s36]
        %338 = vst [vmem:[%s44 + $0x248] sm:%s36] %v337
        %v339 = vld [vmem:[%s43 + $0x24c] sm:%s36]
        %340 = vst [vmem:[%s44 + $0x24c] sm:%s36] %v339
        %v341 = vld [vmem:[%s43 + $0x250] sm:%s36]
        %342 = vst [vmem:[%s44 + $0x250] sm:%s36] %v341
        %v343 = vld [vmem:[%s43 + $0x258] sm:%s36]
        %344 = vst [vmem:[%s44 + $0x254] sm:%s36] %v343
        %v345 = vld [vmem:[%s43 + $0x254] sm:%s36]
        %346 = vst [vmem:[%s44 + $0x258] sm:%s36] %v345
        %v347 = vld [vmem:[%s43 + $0x25c] sm:%s36]
        %348 = vst [vmem:[%s44 + $0x25c] sm:%s36] %v347
        %v349 = vld [vmem:[%s43 + $0x260] sm:%s36]
        %350 = vst [vmem:[%s44 + $0x260] sm:%s36] %v349
        %v351 = vld [vmem:[%s43 + $0x268] sm:%s36]
        %352 = vst [vmem:[%s44 + $0x264] sm:%s36] %v351
        %v353 = vld [vmem:[%s43 + $0x264] sm:%s36]
        %354 = vst [vmem:[%s44 + $0x268] sm:%s36] %v353
        %v355 = vld [vmem:[%s43 + $0x26c] sm:%s36]
        %356 = vst [vmem:[%s44 + $0x26c] sm:%s36] %v355
        %v357 = vld [vmem:[%s43 + $0x270] sm:%s36]
        %358 = vst [vmem:[%s44 + $0x270] sm:%s36] %v357
        %v359 = vld [vmem:[%s43 + $0x278] sm:%s36]
        %360 = vst [vmem:[%s44 + $0x274] sm:%s36] %v359
        %v361 = vld [vmem:[%s43 + $0x274] sm:%s36]
        %362 = vst [vmem:[%s44 + $0x278] sm:%s36] %v361
        %v363 = vld [vmem:[%s43 + $0x27c] sm:%s36]
        %364 = vst [vmem:[%s44 + $0x27c] sm:%s36] %v363
      $region38: #{forward.1} parent=32 // loop_footer
        %s42 = sadd.s32 1, %s38
      $region39: #{forward.1} parent=32 // loop_footer_branch
        %37 = sbr.rel target = $region35
      $region40: #{forward.1} parent=32 // loop_exit
        _
    $region33: #{forward.1} parent=1 // pred_fallthru
      _
    // Predicated region
    $region59: #{forward.1} parent=1 // pred_check
      _
    $region60: #{forward.1} parent=1 // pred_check_branch
      %714 = sbr.rel (0) target = $region62
    $region61: #{forward.1} parent=1 // pred_region
      %715 = vsyncadd [#allocation9], 10240
    $region62: #{forward.1} parent=1 // pred_fallthru
      _
    %s716 = scalar_lea.sflag [#allocation9], 1
    %p718 = scmp.lt.u32.totalorder 320, 8
    %p719 = pneg %p718
    // Predicated region
    $region63: #{forward.1} parent=1 // pred_check
      _
    $region64: #{forward.1} parent=1 // pred_check_branch
      %721 = sbr.rel (%p718) target = $region66
    $region65: #{forward.1} parent=1 // pred_region
      %s736 = sand.u32 320, 7
      %p737 = scmp.eq.s32.totalorder %s736, 0
      // Predicated region
      $region78: #{forward.1} parent=65 // pred_check
        %p738 = pneg %p737
      $region79: #{forward.1} parent=65 // pred_check_branch
        %740 = sbr.rel (%p738) target = $region81
      $region80: #{forward.1} parent=65 // pred_region
        loop: start=0, step=1, limit=1
        $region82: #{forward.1} parent=80 // loop_pre_header
          _
        $region83: #{forward.1} parent=80 // loop_header
          %s742 = sphi 0, %s746
          %p743 = scmp.ge.s32.totalorder %s742, 1
          %s747 = sphi %s3, %s3
          %s748 = sphi [#allocation7], [#allocation7]
        $region84: #{forward.1} parent=80 // loop_header_branch
          %745 = sbr.rel (%p743) target = $region88
        $region85: #{forward.1} parent=80 // loop_body
          %v749 = vld [vmem:[%s747] sm:$0xff]
          %750 = vst [vmem:[%s748] sm:$0xff] %v749
          %v751 = vld [vmem:[%s747 + $0x8] sm:$0xff]
          %752 = vst [vmem:[%s748 + $0x8] sm:$0xff] %v751
          %v753 = vld [vmem:[%s747 + $0x10] sm:$0xff]
          %754 = vst [vmem:[%s748 + $0x10] sm:$0xff] %v753
          %v755 = vld [vmem:[%s747 + $0x18] sm:$0xff]
          %756 = vst [vmem:[%s748 + $0x18] sm:$0xff] %v755
          %v757 = vld [vmem:[%s747 + $0x20] sm:$0xff]
          %758 = vst [vmem:[%s748 + $0x20] sm:$0xff] %v757
          %v759 = vld [vmem:[%s747 + $0x28] sm:$0xff]
          %760 = vst [vmem:[%s748 + $0x28] sm:$0xff] %v759
          %v761 = vld [vmem:[%s747 + $0x30] sm:$0xff]
          %762 = vst [vmem:[%s748 + $0x30] sm:$0xff] %v761
          %v763 = vld [vmem:[%s747 + $0x38] sm:$0xff]
          %764 = vst [vmem:[%s748 + $0x38] sm:$0xff] %v763
          %v765 = vld [vmem:[%s747 + $0x40] sm:$0xff]
          %766 = vst [vmem:[%s748 + $0x40] sm:$0xff] %v765
          %v767 = vld [vmem:[%s747 + $0x48] sm:$0xff]
          %768 = vst [vmem:[%s748 + $0x48] sm:$0xff] %v767
          %v769 = vld [vmem:[%s747 + $0x50] sm:$0xff]
          %770 = vst [vmem:[%s748 + $0x50] sm:$0xff] %v769
          %v771 = vld [vmem:[%s747 + $0x58] sm:$0xff]
          %772 = vst [vmem:[%s748 + $0x58] sm:$0xff] %v771
          %v773 = vld [vmem:[%s747 + $0x60] sm:$0xff]
          %774 = vst [vmem:[%s748 + $0x60] sm:$0xff] %v773
          %v775 = vld [vmem:[%s747 + $0x68] sm:$0xff]
          %776 = vst [vmem:[%s748 + $0x68] sm:$0xff] %v775
          %v777 = vld [vmem:[%s747 + $0x70] sm:$0xff]
          %778 = vst [vmem:[%s748 + $0x70] sm:$0xff] %v777
          %v779 = vld [vmem:[%s747 + $0x78] sm:$0xff]
          %780 = vst [vmem:[%s748 + $0x78] sm:$0xff] %v779
          %v781 = vld [vmem:[%s747 + $0x80] sm:$0xff]
          %782 = vst [vmem:[%s748 + $0x80] sm:$0xff] %v781
          %v783 = vld [vmem:[%s747 + $0x88] sm:$0xff]
          %784 = vst [vmem:[%s748 + $0x88] sm:$0xff] %v783
          %v785 = vld [vmem:[%s747 + $0x90] sm:$0xff]
          %786 = vst [vmem:[%s748 + $0x90] sm:$0xff] %v785
          %v787 = vld [vmem:[%s747 + $0x98] sm:$0xff]
          %788 = vst [vmem:[%s748 + $0x98] sm:$0xff] %v787
          %v789 = vld [vmem:[%s747 + $0xa0] sm:$0xff]
          %790 = vst [vmem:[%s748 + $0xa0] sm:$0xff] %v789
          %v791 = vld [vmem:[%s747 + $0xa8] sm:$0xff]
          %792 = vst [vmem:[%s748 + $0xa8] sm:$0xff] %v791
          %v793 = vld [vmem:[%s747 + $0xb0] sm:$0xff]
          %794 = vst [vmem:[%s748 + $0xb0] sm:$0xff] %v793
          %v795 = vld [vmem:[%s747 + $0xb8] sm:$0xff]
          %796 = vst [vmem:[%s748 + $0xb8] sm:$0xff] %v795
          %v797 = vld [vmem:[%s747 + $0xc0] sm:$0xff]
          %798 = vst [vmem:[%s748 + $0xc0] sm:$0xff] %v797
          %v799 = vld [vmem:[%s747 + $0xc8] sm:$0xff]
          %800 = vst [vmem:[%s748 + $0xc8] sm:$0xff] %v799
          %v801 = vld [vmem:[%s747 + $0xd0] sm:$0xff]
          %802 = vst [vmem:[%s748 + $0xd0] sm:$0xff] %v801
          %v803 = vld [vmem:[%s747 + $0xd8] sm:$0xff]
          %804 = vst [vmem:[%s748 + $0xd8] sm:$0xff] %v803
          %v805 = vld [vmem:[%s747 + $0xe0] sm:$0xff]
          %806 = vst [vmem:[%s748 + $0xe0] sm:$0xff] %v805
          %v807 = vld [vmem:[%s747 + $0xe8] sm:$0xff]
          %808 = vst [vmem:[%s748 + $0xe8] sm:$0xff] %v807
          %v809 = vld [vmem:[%s747 + $0xf0] sm:$0xff]
          %810 = vst [vmem:[%s748 + $0xf0] sm:$0xff] %v809
          %v811 = vld [vmem:[%s747 + $0xf8] sm:$0xff]
          %812 = vst [vmem:[%s748 + $0xf8] sm:$0xff] %v811
          %v813 = vld [vmem:[%s747 + $0x100] sm:$0xff]
          %814 = vst [vmem:[%s748 + $0x100] sm:$0xff] %v813
          %v815 = vld [vmem:[%s747 + $0x108] sm:$0xff]
          %816 = vst [vmem:[%s748 + $0x108] sm:$0xff] %v815
          %v817 = vld [vmem:[%s747 + $0x110] sm:$0xff]
          %818 = vst [vmem:[%s748 + $0x110] sm:$0xff] %v817
          %v819 = vld [vmem:[%s747 + $0x118] sm:$0xff]
          %820 = vst [vmem:[%s748 + $0x118] sm:$0xff] %v819
          %v821 = vld [vmem:[%s747 + $0x120] sm:$0xff]
          %822 = vst [vmem:[%s748 + $0x120] sm:$0xff] %v821
          %v823 = vld [vmem:[%s747 + $0x128] sm:$0xff]
          %824 = vst [vmem:[%s748 + $0x128] sm:$0xff] %v823
          %v825 = vld [vmem:[%s747 + $0x130] sm:$0xff]
          %826 = vst [vmem:[%s748 + $0x130] sm:$0xff] %v825
          %v827 = vld [vmem:[%s747 + $0x138] sm:$0xff]
          %828 = vst [vmem:[%s748 + $0x138] sm:$0xff] %v827
        $region86: #{forward.1} parent=80 // loop_footer
          %s746 = sadd.s32 1, %s742
        $region87: #{forward.1} parent=80 // loop_footer_branch
          %741 = sbr.rel target = $region83
        $region88: #{forward.1} parent=80 // loop_exit
          _
      $region81: #{forward.1} parent=65 // pred_fallthru
        _
      %p829 = pneg %p737
      // Predicated region
      $region89: #{forward.1} parent=65 // pred_check
        _
      $region90: #{forward.1} parent=65 // pred_check_branch
        %831 = sbr.rel (%p737) target = $region92
      $region91: #{forward.1} parent=65 // pred_region
        %s832 = sand.u32 320, 7
      $region92: #{forward.1} parent=65 // pred_fallthru
        _
    $region66: #{forward.1} parent=1 // pred_fallthru
      _
    // Predicated region
    $region67: #{forward.1} parent=1 // pred_check
      %p722 = pneg %p718
    $region68: #{forward.1} parent=1 // pred_check_branch
      %724 = sbr.rel (%p722) target = $region70
    $region69: #{forward.1} parent=1 // pred_region
      %s725 = sshllo.u32 0, 320
      loop: start=0, step=1, limit=1
      $region71: #{forward.1} parent=69 // loop_pre_header
        _
      $region72: #{forward.1} parent=69 // loop_header
        %s727 = sphi 0, %s731
        %p728 = scmp.ge.s32.totalorder %s727, 1
        %s732 = sphi %s3, %s3
        %s733 = sphi [#allocation7], [#allocation7]
      $region73: #{forward.1} parent=69 // loop_header_branch
        %730 = sbr.rel (%p728) target = $region77
      $region74: #{forward.1} parent=69 // loop_body
        %v734 = vld [vmem:[%s732] sm:%s725]
        %735 = vst [vmem:[%s733] sm:%s725] %v734
      $region75: #{forward.1} parent=69 // loop_footer
        %s731 = sadd.s32 1, %s727
      $region76: #{forward.1} parent=69 // loop_footer_branch
        %726 = sbr.rel target = $region72
      $region77: #{forward.1} parent=69 // loop_exit
        _
    $region70: #{forward.1} parent=1 // pred_fallthru
      _
    // Predicated region
    $region93: #{forward.1} parent=1 // pred_check
      _
    $region94: #{forward.1} parent=1 // pred_check_branch
      %835 = sbr.rel (0) target = $region96
    $region95: #{forward.1} parent=1 // pred_region
      %836 = vsyncadd %s716, 5120
    $region96: #{forward.1} parent=1 // pred_fallthru
      _
    %s837 = scalar_lea.sflag [#allocation9], 2
    %p839 = scmp.lt.u32.totalorder 120, 8
    %p840 = pneg %p839
    // Predicated region
    $region97: #{forward.1} parent=1 // pred_check
      _
    $region98: #{forward.1} parent=1 // pred_check_branch
      %842 = sbr.rel (%p839) target = $region100
    $region99: #{forward.1} parent=1 // pred_region
      %s857 = sand.u32 120, 7
      %p858 = scmp.eq.s32.totalorder %s857, 0
      // Predicated region
      $region112: #{forward.1} parent=99 // pred_check
        %p859 = pneg %p858
      $region113: #{forward.1} parent=99 // pred_check_branch
        %861 = sbr.rel (%p859) target = $region115
      $region114: #{forward.1} parent=99 // pred_region
        loop: start=0, step=1, limit=1
        $region116: #{forward.1} parent=114 // loop_pre_header
          _
        $region117: #{forward.1} parent=114 // loop_header
          %s863 = sphi 0, %s867
          %p864 = scmp.ge.s32.totalorder %s863, 1
          %s868 = sphi %s4, %s4
          %s869 = sphi [#allocation8], [#allocation8]
        $region118: #{forward.1} parent=114 // loop_header_branch
          %866 = sbr.rel (%p864) target = $region122
        $region119: #{forward.1} parent=114 // loop_body
          %v870 = vld [vmem:[%s868] sm:$0xff]
          %871 = vst [vmem:[%s869] sm:$0xff] %v870
          %v872 = vld [vmem:[%s868 + $0x8] sm:$0xff]
          %873 = vst [vmem:[%s869 + $0x8] sm:$0xff] %v872
          %v874 = vld [vmem:[%s868 + $0x10] sm:$0xff]
          %875 = vst [vmem:[%s869 + $0x10] sm:$0xff] %v874
          %v876 = vld [vmem:[%s868 + $0x18] sm:$0xff]
          %877 = vst [vmem:[%s869 + $0x18] sm:$0xff] %v876
          %v878 = vld [vmem:[%s868 + $0x20] sm:$0xff]
          %879 = vst [vmem:[%s869 + $0x20] sm:$0xff] %v878
          %v880 = vld [vmem:[%s868 + $0x28] sm:$0xff]
          %881 = vst [vmem:[%s869 + $0x28] sm:$0xff] %v880
          %v882 = vld [vmem:[%s868 + $0x30] sm:$0xff]
          %883 = vst [vmem:[%s869 + $0x30] sm:$0xff] %v882
          %v884 = vld [vmem:[%s868 + $0x38] sm:$0xff]
          %885 = vst [vmem:[%s869 + $0x38] sm:$0xff] %v884
          %v886 = vld [vmem:[%s868 + $0x40] sm:$0xff]
          %887 = vst [vmem:[%s869 + $0x40] sm:$0xff] %v886
          %v888 = vld [vmem:[%s868 + $0x48] sm:$0xff]
          %889 = vst [vmem:[%s869 + $0x48] sm:$0xff] %v888
          %v890 = vld [vmem:[%s868 + $0x50] sm:$0xff]
          %891 = vst [vmem:[%s869 + $0x50] sm:$0xff] %v890
          %v892 = vld [vmem:[%s868 + $0x58] sm:$0xff]
          %893 = vst [vmem:[%s869 + $0x58] sm:$0xff] %v892
          %v894 = vld [vmem:[%s868 + $0x60] sm:$0xff]
          %895 = vst [vmem:[%s869 + $0x60] sm:$0xff] %v894
          %v896 = vld [vmem:[%s868 + $0x68] sm:$0xff]
          %897 = vst [vmem:[%s869 + $0x68] sm:$0xff] %v896
          %v898 = vld [vmem:[%s868 + $0x70] sm:$0xff]
          %899 = vst [vmem:[%s869 + $0x70] sm:$0xff] %v898
        $region120: #{forward.1} parent=114 // loop_footer
          %s867 = sadd.s32 1, %s863
        $region121: #{forward.1} parent=114 // loop_footer_branch
          %862 = sbr.rel target = $region117
        $region122: #{forward.1} parent=114 // loop_exit
          _
      $region115: #{forward.1} parent=99 // pred_fallthru
        _
      %p900 = pneg %p858
      // Predicated region
      $region123: #{forward.1} parent=99 // pred_check
        _
      $region124: #{forward.1} parent=99 // pred_check_branch
        %902 = sbr.rel (%p858) target = $region126
      $region125: #{forward.1} parent=99 // pred_region
        %s903 = sand.u32 120, 7
      $region126: #{forward.1} parent=99 // pred_fallthru
        _
    $region100: #{forward.1} parent=1 // pred_fallthru
      _
    // Predicated region
    $region101: #{forward.1} parent=1 // pred_check
      %p843 = pneg %p839
    $region102: #{forward.1} parent=1 // pred_check_branch
      %845 = sbr.rel (%p843) target = $region104
    $region103: #{forward.1} parent=1 // pred_region
      %s846 = sshllo.u32 0, 120
      loop: start=0, step=1, limit=1
      $region105: #{forward.1} parent=103 // loop_pre_header
        _
      $region106: #{forward.1} parent=103 // loop_header
        %s848 = sphi 0, %s852
        %p849 = scmp.ge.s32.totalorder %s848, 1
        %s853 = sphi %s4, %s4
        %s854 = sphi [#allocation8], [#allocation8]
      $region107: #{forward.1} parent=103 // loop_header_branch
        %851 = sbr.rel (%p849) target = $region111
      $region108: #{forward.1} parent=103 // loop_body
        %v855 = vld [vmem:[%s853] sm:%s846]
        %856 = vst [vmem:[%s854] sm:%s846] %v855
      $region109: #{forward.1} parent=103 // loop_footer
        %s852 = sadd.s32 1, %s848
      $region110: #{forward.1} parent=103 // loop_footer_branch
        %847 = sbr.rel target = $region106
      $region111: #{forward.1} parent=103 // loop_exit
        _
    $region104: #{forward.1} parent=1 // pred_fallthru
      _
    // Predicated region
    $region127: #{forward.1} parent=1 // pred_check
      _
    $region128: #{forward.1} parent=1 // pred_check_branch
      %906 = sbr.rel (0) target = $region130
    $region129: #{forward.1} parent=1 // pred_region
      %907 = vsyncadd %s837, 1920
    $region130: #{forward.1} parent=1 // pred_fallthru
      _
    %v908 = vld [vmem:[%s0] sm:$0xff]
    %v909 = vld [vmem:[%s0 + $0x8] sm:$0xff]
    %v910 = vld [vmem:[%s0 + $0x10] sm:$0xff]
    %v911 = vld [vmem:[%s0 + $0x18] sm:$0xff]
    %v912 = vld [vmem:[%s0 + $0x20] sm:$0xff]
    %v913 = vld [vmem:[%s0 + $0x28] sm:$0xff]
    %v914 = vld [vmem:[%s0 + $0x30] sm:$0xff]
    %v915 = vld [vmem:[%s0 + $0x38] sm:$0xff]
    %v916 = vld [vmem:[%s0 + $0x40] sm:$0xff]
    %v917 = vld [vmem:[%s0 + $0x48] sm:$0x7]
    %v918 = vpack.c.bf16 %v909, %v908
    %v919 = vpack.c.bf16 %v911, %v910
    %v920 = vpack.c.bf16 %v913, %v912
    %v921 = vpack.c.bf16 %v915, %v914
    %v922 = vpack.c.bf16 %v917, %v916
    %v923 = vld [vmem:[%s1] sm:$0xff]
    %v924 = vld [vmem:[%s1 + $0x8] sm:$0xff]
    %v925 = vld [vmem:[%s1 + $0x10] sm:$0xff]
    %v926 = vld [vmem:[%s1 + $0x18] sm:$0xff]
    %v927 = vld [vmem:[%s1 + $0x20] sm:$0xff]
    %v928 = vld [vmem:[%s1 + $0x28] sm:$0xff]
    %v929 = vld [vmem:[%s1 + $0x30] sm:$0xff]
    %v930 = vld [vmem:[%s1 + $0x38] sm:$0xff]
    %v931 = vld [vmem:[%s1 + $0x40] sm:$0xff]
    %v932 = vld [vmem:[%s1 + $0x48] sm:$0xff]
    %v933 = vld [vmem:[%s1 + $0x50] sm:$0xff]
    %v934 = vld [vmem:[%s1 + $0x58] sm:$0xff]
    %v935 = vld [vmem:[%s1 + $0x60] sm:$0xff]
    %v936 = vld [vmem:[%s1 + $0x68] sm:$0xff]
    %v937 = vld [vmem:[%s1 + $0x70] sm:$0xff]
    %v938 = vld [vmem:[%s1 + $0x78] sm:$0xff]
    %v939 = vld [vmem:[%s0 + $0x1] sm:$0xff]
    %v940 = vld [vmem:[%s0 + $0x9] sm:$0xff]
    %v941 = vld [vmem:[%s0 + $0x11] sm:$0xff]
    %v942 = vld [vmem:[%s0 + $0x19] sm:$0xff]
    %v943 = vld [vmem:[%s0 + $0x21] sm:$0xff]
    %v944 = vld [vmem:[%s0 + $0x29] sm:$0xff]
    %v945 = vld [vmem:[%s0 + $0x31] sm:$0xff]
    %v946 = vld [vmem:[%s0 + $0x39] sm:$0xff]
    %v947 = vld [vmem:[%s0 + $0x41] sm:$0xff]
    %v948 = vld [vmem:[%s0 + $0x49] sm:$0x7]
    %v949 = vpack.c.bf16 %v940, %v939
    %v950 = vpack.c.bf16 %v942, %v941
    %v951 = vpack.c.bf16 %v944, %v943
    %v952 = vpack.c.bf16 %v946, %v945
    %v953 = vpack.c.bf16 %v948, %v947
    %s954 = scalar_lea.vmem %s1, 128
    %v955 = vld [vmem:[%s954] sm:$0xff]
    %v956 = vld [vmem:[%s954 + $0x8] sm:$0xff]
    %v957 = vld [vmem:[%s954 + $0x10] sm:$0xff]
    %v958 = vld [vmem:[%s954 + $0x18] sm:$0xff]
    %v959 = vld [vmem:[%s954 + $0x20] sm:$0xff]
    %v960 = vld [vmem:[%s954 + $0x28] sm:$0xff]
    %v961 = vld [vmem:[%s954 + $0x30] sm:$0xff]
    %v962 = vld [vmem:[%s954 + $0x38] sm:$0xff]
    %v963 = vld [vmem:[%s954 + $0x40] sm:$0xff]
    %v964 = vld [vmem:[%s954 + $0x48] sm:$0xff]
    %v965 = vld [vmem:[%s954 + $0x50] sm:$0xff]
    %v966 = vld [vmem:[%s954 + $0x58] sm:$0xff]
    %v967 = vld [vmem:[%s954 + $0x60] sm:$0xff]
    %v968 = vld [vmem:[%s954 + $0x68] sm:$0xff]
    %v969 = vld [vmem:[%s954 + $0x70] sm:$0xff]
    %v970 = vld [vmem:[%s954 + $0x78] sm:$0xff]
    %v987 = vunpack.c.l.b16 %v955
    %v988 = vunpack.c.h.b16 %v955
    %v989 = vunpack.c.l.b16 %v956
    %v990 = vunpack.c.h.b16 %v956
    %v991 = vunpack.c.l.b16 %v957
    %v992 = vunpack.c.h.b16 %v957
    %v993 = vunpack.c.l.b16 %v958
    %v994 = vunpack.c.h.b16 %v958
    %v995 = vunpack.c.l.b16 %v959
    %v996 = vunpack.c.h.b16 %v959
    %v997 = vunpack.c.l.b16 %v960
    %v998 = vunpack.c.h.b16 %v960
    %v999 = vunpack.c.l.b16 %v961
    %v1000 = vunpack.c.h.b16 %v961
    %v1001 = vunpack.c.l.b16 %v962
    %v1002 = vunpack.c.h.b16 %v962
    %v1003 = vunpack.c.l.b16 %v963
    %v1004 = vunpack.c.h.b16 %v963
    %v1005 = vunpack.c.l.b16 %v964
    %v1006 = vunpack.c.h.b16 %v964
    %v1007 = vunpack.c.l.b16 %v965
    %v1008 = vunpack.c.h.b16 %v965
    %v1009 = vunpack.c.l.b16 %v966
    %v1010 = vunpack.c.h.b16 %v966
    %v1011 = vunpack.c.l.b16 %v967
    %v1012 = vunpack.c.h.b16 %v967
    %v1013 = vunpack.c.l.b16 %v968
    %v1014 = vunpack.c.h.b16 %v968
    %v1015 = vunpack.c.l.b16 %v969
    %v1016 = vunpack.c.h.b16 %v969
    %v1017 = vunpack.c.l.b16 %v970
    %v1018 = vunpack.c.h.b16 %v970
    %v1019 = vpack.c.b16 %v989, %v987
    %v1020 = vpack.c.b16 %v990, %v988
    %v1021 = vpack.c.b16 %v993, %v991
    %v1022 = vpack.c.b16 %v994, %v992
    %v1023 = vpack.c.b16 %v997, %v995
    %v1024 = vpack.c.b16 %v998, %v996
    %v1025 = vpack.c.b16 %v1001, %v999
    %v1026 = vpack.c.b16 %v1002, %v1000
    %v1027 = vpack.c.b16 %v1005, %v1003
    %v1028 = vpack.c.b16 %v1006, %v1004
    %v1029 = vpack.c.b16 %v1009, %v1007
    %v1030 = vpack.c.b16 %v1010, %v1008
    %v1031 = vpack.c.b16 %v1013, %v1011
    %v1032 = vpack.c.b16 %v1014, %v1012
    %v1033 = vpack.c.b16 %v1017, %v1015
    %v1034 = vpack.c.b16 %v1018, %v1016
    %1051 = vmatprep.subr.bf16.mxu0 %v1020
    %1052 = vmatpush1.bf16.msra.mxu0 %v1019
    %1053 = vmatprep.subr.bf16.mxu0 %v1022
    %1054 = vmatpush1.bf16.msra.mxu0 %v1021
    %1055 = vmatprep.subr.bf16.mxu0 %v1024
    %1056 = vmatpush1.bf16.msra.mxu0 %v1023
    %1057 = vmatprep.subr.bf16.mxu0 %v1026
    %1058 = vmatpush1.bf16.msra.mxu0 %v1025
    %1059 = vmatprep.subr.bf16.mxu0 %v1028
    %1060 = vmatpush1.bf16.msra.mxu0 %v1027
    %1061 = vmatprep.subr.bf16.mxu0 %v1030
    %1062 = vmatpush1.bf16.msra.mxu0 %v1029
    %1063 = vmatprep.subr.bf16.mxu0 %v1032
    %1064 = vmatpush1.bf16.msra.mxu0 %v1031
    %1065 = vmatprep.subr.bf16.mxu0 %v1034
    %1066 = vmatpush1.bf16.msra.mxu0 %v1033
    %1067 = vmatprep.subr.bf16.mxu0 0
    %1068 = vmatpush1.bf16.msra.mxu0 0
    %1069 = vmatprep.subr.bf16.mxu0 0
    %1070 = vmatpush1.bf16.msra.mxu0 0
    %1071 = vmatprep.subr.bf16.mxu0 0
    %1072 = vmatpush1.bf16.msra.mxu0 0
    %1073 = vmatprep.subr.bf16.mxu0 0
    %1074 = vmatpush1.bf16.msra.mxu0 0
    %1075 = vmatprep.subr.bf16.mxu0 0
    %1076 = vmatpush1.bf16.msra.mxu0 0
    %1077 = vmatprep.subr.bf16.mxu0 0
    %1078 = vmatpush1.bf16.msra.mxu0 0
    %1079 = vmatprep.subr.bf16.mxu0 0
    %1080 = vmatpush1.bf16.msra.mxu0 0
    %1081 = vmatprep.subr.bf16.mxu0 0
    %1082 = vmatpush1.bf16.msra.mxu0 0
    %1083 = vmatprep.mubr.bf16.mxu0 0
    %1084 = vmatmul.mubr.bf16.gmra.mrb[0].mxu0 %v949
    %v1085 = vpop.f32.mrb[0].mxu0
    %v1086 = vadd.f32 0.0, %v1085
    %v1087 = vpop.f32.mrb[0].mxu0
    %v1088 = vadd.f32 0.0, %v1087
    %v1089 = vpop.f32.mrb[0].mxu0
    %v1090 = vadd.f32 0.0, %v1089
    %v1091 = vpop.f32.mrb[0].mxu0
    %v1092 = vadd.f32 0.0, %v1091
    %1093 = vmatprep.mubr.bf16.mxu0 0
    %1094 = vmatmul.mubr.bf16.gmra.mrb[0].mxu0 %v950
    %v1095 = vpop.f32.mrb[0].mxu0
    %v1096 = vadd.f32 0.0, %v1095
    %v1097 = vpop.f32.mrb[0].mxu0
    %v1098 = vadd.f32 0.0, %v1097
    %v1099 = vpop.f32.mrb[0].mxu0
    %v1100 = vadd.f32 0.0, %v1099
    %v1101 = vpop.f32.mrb[0].mxu0
    %v1102 = vadd.f32 0.0, %v1101
    %1103 = vmatprep.mubr.bf16.mxu0 0
    %1104 = vmatmul.mubr.bf16.gmra.mrb[0].mxu0 %v951
    %v1105 = vpop.f32.mrb[0].mxu0
    %v1106 = vadd.f32 0.0, %v1105
    %v1107 = vpop.f32.mrb[0].mxu0
    %v1108 = vadd.f32 0.0, %v1107
    %v1109 = vpop.f32.mrb[0].mxu0
    %v1110 = vadd.f32 0.0, %v1109
    %v1111 = vpop.f32.mrb[0].mxu0
    %v1112 = vadd.f32 0.0, %v1111
    %1113 = vmatprep.mubr.bf16.mxu0 0
    %1114 = vmatmul.mubr.bf16.gmra.mrb[0].mxu0 %v952
    %v1115 = vpop.f32.mrb[0].mxu0
    %v1116 = vadd.f32 0.0, %v1115
    %v1117 = vpop.f32.mrb[0].mxu0
    %v1118 = vadd.f32 0.0, %v1117
    %v1119 = vpop.f32.mrb[0].mxu0
    %v1120 = vadd.f32 0.0, %v1119
    %v1121 = vpop.f32.mrb[0].mxu0
    %v1122 = vadd.f32 0.0, %v1121
    %1123 = vmatprep.mubr.bf16.mxu0 0
    %1124 = vmatmul.mubr.bf16.gmra.mrb[0].mxu0 %v953
    %v1125 = vpop.f32.mrb[0].mxu0
    %v1126 = vadd.f32 0.0, %v1125
    %v1127 = vpop.f32.mrb[0].mxu0
    %v1128 = vadd.f32 0.0, %v1127
    %v1129 = vpop.f32.mrb[0].mxu0
    %v1130 = vadd.f32 0.0, %v1129
    %v1131 = vpop.f32.mrb[0].mxu0
    %v1132 = vadd.f32 0.0, %v1131
    %1133 = vdwg.mxu0
    %v1150 = vunpack.c.l.b16 %v923
    %v1151 = vunpack.c.h.b16 %v923
    %v1152 = vunpack.c.l.b16 %v924
    %v1153 = vunpack.c.h.b16 %v924
    %v1154 = vunpack.c.l.b16 %v925
    %v1155 = vunpack.c.h.b16 %v925
    %v1156 = vunpack.c.l.b16 %v926
    %v1157 = vunpack.c.h.b16 %v926
    %v1158 = vunpack.c.l.b16 %v927
    %v1159 = vunpack.c.h.b16 %v927
    %v1160 = vunpack.c.l.b16 %v928
    %v1161 = vunpack.c.h.b16 %v928
    %v1162 = vunpack.c.l.b16 %v929
    %v1163 = vunpack.c.h.b16 %v929
    %v1164 = vunpack.c.l.b16 %v930
    %v1165 = vunpack.c.h.b16 %v930
    %v1166 = vunpack.c.l.b16 %v931
    %v1167 = vunpack.c.h.b16 %v931
    %v1168 = vunpack.c.l.b16 %v932
    %v1169 = vunpack.c.h.b16 %v932
    %v1170 = vunpack.c.l.b16 %v933
    %v1171 = vunpack.c.h.b16 %v933
    %v1172 = vunpack.c.l.b16 %v934
    %v1173 = vunpack.c.h.b16 %v934
    %v1174 = vunpack.c.l.b16 %v935
    %v1175 = vunpack.c.h.b16 %v935
    %v1176 = vunpack.c.l.b16 %v936
    %v1177 = vunpack.c.h.b16 %v936
    %v1178 = vunpack.c.l.b16 %v937
    %v1179 = vunpack.c.h.b16 %v937
    %v1180 = vunpack.c.l.b16 %v938
    %v1181 = vunpack.c.h.b16 %v938
    %v1182 = vpack.c.b16 %v1152, %v1150
    %v1183 = vpack.c.b16 %v1153, %v1151
    %v1184 = vpack.c.b16 %v1156, %v1154
    %v1185 = vpack.c.b16 %v1157, %v1155
    %v1186 = vpack.c.b16 %v1160, %v1158
    %v1187 = vpack.c.b16 %v1161, %v1159
    %v1188 = vpack.c.b16 %v1164, %v1162
    %v1189 = vpack.c.b16 %v1165, %v1163
    %v1190 = vpack.c.b16 %v1168, %v1166
    %v1191 = vpack.c.b16 %v1169, %v1167
    %v1192 = vpack.c.b16 %v1172, %v1170
    %v1193 = vpack.c.b16 %v1173, %v1171
    %v1194 = vpack.c.b16 %v1176, %v1174
    %v1195 = vpack.c.b16 %v1177, %v1175
    %v1196 = vpack.c.b16 %v1180, %v1178
    %v1197 = vpack.c.b16 %v1181, %v1179
    %1214 = vmatprep.subr.bf16.mxu0 %v1183
    %1215 = vmatpush1.bf16.msra.mxu0 %v1182
    %1216 = vmatprep.subr.bf16.mxu0 %v1185
    %1217 = vmatpush1.bf16.msra.mxu0 %v1184
    %1218 = vmatprep.subr.bf16.mxu0 %v1187
    %1219 = vmatpush1.bf16.msra.mxu0 %v1186
    %1220 = vmatprep.subr.bf16.mxu0 %v1189
    %1221 = vmatpush1.bf16.msra.mxu0 %v1188
    %1222 = vmatprep.subr.bf16.mxu0 %v1191
    %1223 = vmatpush1.bf16.msra.mxu0 %v1190
    %1224 = vmatprep.subr.bf16.mxu0 %v1193
    %1225 = vmatpush1.bf16.msra.mxu0 %v1192
    %1226 = vmatprep.subr.bf16.mxu0 %v1195
    %1227 = vmatpush1.bf16.msra.mxu0 %v1194
    %1228 = vmatprep.subr.bf16.mxu0 %v1197
    %1229 = vmatpush1.bf16.msra.mxu0 %v1196
    %1230 = vmatprep.subr.bf16.mxu0 0
    %1231 = vmatpush1.bf16.msra.mxu0 0
    %1232 = vmatprep.subr.bf16.mxu0 0
    %1233 = vmatpush1.bf16.msra.mxu0 0
    %1234 = vmatprep.subr.bf16.mxu0 0
    %1235 = vmatpush1.bf16.msra.mxu0 0
    %1236 = vmatprep.subr.bf16.mxu0 0
    %1237 = vmatpush1.bf16.msra.mxu0 0
    %1238 = vmatprep.subr.bf16.mxu0 0
    %1239 = vmatpush1.bf16.msra.mxu0 0
    %1240 = vmatprep.subr.bf16.mxu0 0
    %1241 = vmatpush1.bf16.msra.mxu0 0
    %1242 = vmatprep.subr.bf16.mxu0 0
    %1243 = vmatpush1.bf16.msra.mxu0 0
    %1244 = vmatprep.subr.bf16.mxu0 0
    %1245 = vmatpush1.bf16.msra.mxu0 0
    %1246 = vmatprep.mubr.bf16.mxu0 0
    %1247 = vmatmul.mubr.bf16.gmra.mrb[0].mxu0 %v918
    %v1248 = vpop.f32.mrb[0].mxu0
    %v1249 = vadd.f32 %v1086, %v1248
    %v1250 = vpop.f32.mrb[0].mxu0
    %v1251 = vadd.f32 %v1088, %v1250
    %v1252 = vpop.f32.mrb[0].mxu0
    %v1253 = vadd.f32 %v1090, %v1252
    %v1254 = vpop.f32.mrb[0].mxu0
    %v1255 = vadd.f32 %v1092, %v1254
    %1256 = vmatprep.mubr.bf16.mxu0 0
    %1257 = vmatmul.mubr.bf16.gmra.mrb[0].mxu0 %v919
    %v1258 = vpop.f32.mrb[0].mxu0
    %v1259 = vadd.f32 %v1096, %v1258
    %v1260 = vpop.f32.mrb[0].mxu0
    %v1261 = vadd.f32 %v1098, %v1260
    %v1262 = vpop.f32.mrb[0].mxu0
    %v1263 = vadd.f32 %v1100, %v1262
    %v1264 = vpop.f32.mrb[0].mxu0
    %v1265 = vadd.f32 %v1102, %v1264
    %1266 = vmatprep.mubr.bf16.mxu0 0
    %1267 = vmatmul.mubr.bf16.gmra.mrb[0].mxu0 %v920
    %v1268 = vpop.f32.mrb[0].mxu0
    %v1269 = vadd.f32 %v1106, %v1268
    %v1270 = vpop.f32.mrb[0].mxu0
    %v1271 = vadd.f32 %v1108, %v1270
    %v1272 = vpop.f32.mrb[0].mxu0
    %v1273 = vadd.f32 %v1110, %v1272
    %v1274 = vpop.f32.mrb[0].mxu0
    %v1275 = vadd.f32 %v1112, %v1274
    %1276 = vmatprep.mubr.bf16.mxu0 0
    %1277 = vmatmul.mubr.bf16.gmra.mrb[0].mxu0 %v921
    %v1278 = vpop.f32.mrb[0].mxu0
    %v1279 = vadd.f32 %v1116, %v1278
    %v1280 = vpop.f32.mrb[0].mxu0
    %v1281 = vadd.f32 %v1118, %v1280
    %v1282 = vpop.f32.mrb[0].mxu0
    %v1283 = vadd.f32 %v1120, %v1282
    %v1284 = vpop.f32.mrb[0].mxu0
    %v1285 = vadd.f32 %v1122, %v1284
    %1286 = vmatprep.mubr.bf16.mxu0 0
    %1287 = vmatmul.mubr.bf16.gmra.mrb[0].mxu0 %v922
    %v1288 = vpop.f32.mrb[0].mxu0
    %v1289 = vadd.f32 %v1126, %v1288
    %v1290 = vpop.f32.mrb[0].mxu0
    %v1291 = vadd.f32 %v1128, %v1290
    %v1292 = vpop.f32.mrb[0].mxu0
    %v1293 = vadd.f32 %v1130, %v1292
    %v1294 = vpop.f32.mrb[0].mxu0
    %v1295 = vadd.f32 %v1132, %v1294
    %1296 = vdwg.mxu0
    %v1297 = vld [vmem:[%s0 + $0x2] sm:$0xff]
    %v1298 = vld [vmem:[%s0 + $0xa] sm:$0xff]
    %v1299 = vld [vmem:[%s0 + $0x12] sm:$0xff]
    %v1300 = vld [vmem:[%s0 + $0x1a] sm:$0xff]
    %v1301 = vld [vmem:[%s0 + $0x22] sm:$0xff]
    %v1302 = vld [vmem:[%s0 + $0x2a] sm:$0xff]
    %v1303 = vld [vmem:[%s0 + $0x32] sm:$0xff]
    %v1304 = vld [vmem:[%s0 + $0x3a] sm:$0xff]
    %v1305 = vld [vmem:[%s0 + $0x42] sm:$0xff]
    %v1306 = vld [vmem:[%s0 + $0x4a] sm:$0x7]
    %v1307 = vpack.c.bf16 %v1298, %v1297
    %v1308 = vpack.c.bf16 %v1300, %v1299
    %v1309 = vpack.c.bf16 %v1302, %v1301
    %v1310 = vpack.c.bf16 %v1304, %v1303
    %v1311 = vpack.c.bf16 %v1306, %v1305
    %s1312 = scalar_lea.vmem %s1, 256
    %v1313 = vld [vmem:[%s1312] sm:$0xff]
    %v1314 = vld [vmem:[%s1312 + $0x8] sm:$0xff]
    %v1315 = vld [vmem:[%s1312 + $0x10] sm:$0xff]
    %v1316 = vld [vmem:[%s1312 + $0x18] sm:$0xff]
    %v1317 = vld [vmem:[%s1312 + $0x20] sm:$0xff]
    %v1318 = vld [vmem:[%s1312 + $0x28] sm:$0xff]
    %v1319 = vld [vmem:[%s1312 + $0x30] sm:$0xff]
    %v1320 = vld [vmem:[%s1312 + $0x38] sm:$0xff]
    %v1321 = vld [vmem:[%s1312 + $0x40] sm:$0xff]
    %v1322 = vld [vmem:[%s1312 + $0x48] sm:$0xff]
    %v1323 = vld [vmem:[%s1312 + $0x50] sm:$0xff]
    %v1324 = vld [vmem:[%s1312 + $0x58] sm:$0xff]
    %v1325 = vld [vmem:[%s1312 + $0x60] sm:$0xff]
    %v1326 = vld [vmem:[%s1312 + $0x68] sm:$0xff]
    %v1327 = vld [vmem:[%s1312 + $0x70] sm:$0xff]
    %v1328 = vld [vmem:[%s1312 + $0x78] sm:$0xff]
    %v1345 = vunpack.c.l.b16 %v1313
    %v1346 = vunpack.c.h.b16 %v1313
    %v1347 = vunpack.c.l.b16 %v1314
    %v1348 = vunpack.c.h.b16 %v1314
    %v1349 = vunpack.c.l.b16 %v1315
    %v1350 = vunpack.c.h.b16 %v1315
    %v1351 = vunpack.c.l.b16 %v1316
    %v1352 = vunpack.c.h.b16 %v1316
    %v1353 = vunpack.c.l.b16 %v1317
    %v1354 = vunpack.c.h.b16 %v1317
    %v1355 = vunpack.c.l.b16 %v1318
    %v1356 = vunpack.c.h.b16 %v1318
    %v1357 = vunpack.c.l.b16 %v1319
    %v1358 = vunpack.c.h.b16 %v1319
    %v1359 = vunpack.c.l.b16 %v1320
    %v1360 = vunpack.c.h.b16 %v1320
    %v1361 = vunpack.c.l.b16 %v1321
    %v1362 = vunpack.c.h.b16 %v1321
    %v1363 = vunpack.c.l.b16 %v1322
    %v1364 = vunpack.c.h.b16 %v1322
    %v1365 = vunpack.c.l.b16 %v1323
    %v1366 = vunpack.c.h.b16 %v1323
    %v1367 = vunpack.c.l.b16 %v1324
    %v1368 = vunpack.c.h.b16 %v1324
    %v1369 = vunpack.c.l.b16 %v1325
    %v1370 = vunpack.c.h.b16 %v1325
    %v1371 = vunpack.c.l.b16 %v1326
    %v1372 = vunpack.c.h.b16 %v1326
    %v1373 = vunpack.c.l.b16 %v1327
    %v1374 = vunpack.c.h.b16 %v1327
    %v1375 = vunpack.c.l.b16 %v1328
    %v1376 = vunpack.c.h.b16 %v1328
    %v1377 = vpack.c.b16 %v1347, %v1345
    %v1378 = vpack.c.b16 %v1348, %v1346
    %v1379 = vpack.c.b16 %v1351, %v1349
    %v1380 = vpack.c.b16 %v1352, %v1350
    %v1381 = vpack.c.b16 %v1355, %v1353
    %v1382 = vpack.c.b16 %v1356, %v1354
    %v1383 = vpack.c.b16 %v1359, %v1357
    %v1384 = vpack.c.b16 %v1360, %v1358
    %v1385 = vpack.c.b16 %v1363, %v1361
    %v1386 = vpack.c.b16 %v1364, %v1362
    %v1387 = vpack.c.b16 %v1367, %v1365
    %v1388 = vpack.c.b16 %v1368, %v1366
    %v1389 = vpack.c.b16 %v1371, %v1369
    %v1390 = vpack.c.b16 %v1372, %v1370
    %v1391 = vpack.c.b16 %v1375, %v1373
    %v1392 = vpack.c.b16 %v1376, %v1374
    %1409 = vmatprep.subr.bf16.mxu0 %v1378
    %1410 = vmatpush1.bf16.msra.mxu0 %v1377
    %1411 = vmatprep.subr.bf16.mxu0 %v1380
    %1412 = vmatpush1.bf16.msra.mxu0 %v1379
    %1413 = vmatprep.subr.bf16.mxu0 %v1382
    %1414 = vmatpush1.bf16.msra.mxu0 %v1381
    %1415 = vmatprep.subr.bf16.mxu0 %v1384
    %1416 = vmatpush1.bf16.msra.mxu0 %v1383
    %1417 = vmatprep.subr.bf16.mxu0 %v1386
    %1418 = vmatpush1.bf16.msra.mxu0 %v1385
    %1419 = vmatprep.subr.bf16.mxu0 %v1388
    %1420 = vmatpush1.bf16.msra.mxu0 %v1387
    %1421 = vmatprep.subr.bf16.mxu0 %v1390
    %1422 = vmatpush1.bf16.msra.mxu0 %v1389
    %1423 = vmatprep.subr.bf16.mxu0 %v1392
    %1424 = vmatpush1.bf16.msra.mxu0 %v1391
    %1425 = vmatprep.subr.bf16.mxu0 0
    %1426 = vmatpush1.bf16.msra.mxu0 0
    %1427 = vmatprep.subr.bf16.mxu0 0
    %1428 = vmatpush1.bf16.msra.mxu0 0
    %1429 = vmatprep.subr.bf16.mxu0 0
    %1430 = vmatpush1.bf16.msra.mxu0 0
    %1431 = vmatprep.subr.bf16.mxu0 0
    %1432 = vmatpush1.bf16.msra.mxu0 0
    %1433 = vmatprep.subr.bf16.mxu0 0
    %1434 = vmatpush1.bf16.msra.mxu0 0
    %1435 = vmatprep.subr.bf16.mxu0 0
    %1436 = vmatpush1.bf16.msra.mxu0 0
    %1437 = vmatprep.subr.bf16.mxu0 0
    %1438 = vmatpush1.bf16.msra.mxu0 0
    %1439 = vmatprep.subr.bf16.mxu0 0
    %1440 = vmatpush1.bf16.msra.mxu0 0
    %1441 = vmatprep.mubr.bf16.mxu0 0
    %1442 = vmatmul.mubr.bf16.gmra.mrb[0].mxu0 %v1307
    %v1443 = vpop.f32.mrb[0].mxu0
    %v1444 = vadd.f32 0.0, %v1443
    %v1445 = vpop.f32.mrb[0].mxu0
    %v1446 = vadd.f32 0.0, %v1445
    %v1447 = vpop.f32.mrb[0].mxu0
    %v1448 = vadd.f32 0.0, %v1447
    %v1449 = vpop.f32.mrb[0].mxu0
    %v1450 = vadd.f32 0.0, %v1449
    %1451 = vmatprep.mubr.bf16.mxu0 0
    %1452 = vmatmul.mubr.bf16.gmra.mrb[0].mxu0 %v1308
    %v1453 = vpop.f32.mrb[0].mxu0
    %v1454 = vadd.f32 0.0, %v1453
    %v1455 = vpop.f32.mrb[0].mxu0
    %v1456 = vadd.f32 0.0, %v1455
    %v1457 = vpop.f32.mrb[0].mxu0
    %v1458 = vadd.f32 0.0, %v1457
    %v1459 = vpop.f32.mrb[0].mxu0
    %v1460 = vadd.f32 0.0, %v1459
    %1461 = vmatprep.mubr.bf16.mxu0 0
    %1462 = vmatmul.mubr.bf16.gmra.mrb[0].mxu0 %v1309
    %v1463 = vpop.f32.mrb[0].mxu0
    %v1464 = vadd.f32 0.0, %v1463
    %v1465 = vpop.f32.mrb[0].mxu0
    %v1466 = vadd.f32 0.0, %v1465
    %v1467 = vpop.f32.mrb[0].mxu0
    %v1468 = vadd.f32 0.0, %v1467
    %v1469 = vpop.f32.mrb[0].mxu0
    %v1470 = vadd.f32 0.0, %v1469
    %1471 = vmatprep.mubr.bf16.mxu0 0
    %1472 = vmatmul.mubr.bf16.gmra.mrb[0].mxu0 %v1310
    %v1473 = vpop.f32.mrb[0].mxu0
    %v1474 = vadd.f32 0.0, %v1473
    %v1475 = vpop.f32.mrb[0].mxu0
    %v1476 = vadd.f32 0.0, %v1475
    %v1477 = vpop.f32.mrb[0].mxu0
    %v1478 = vadd.f32 0.0, %v1477
    %v1479 = vpop.f32.mrb[0].mxu0
    %v1480 = vadd.f32 0.0, %v1479
    %1481 = vmatprep.mubr.bf16.mxu0 0
    %1482 = vmatmul.mubr.bf16.gmra.mrb[0].mxu0 %v1311
    %v1483 = vpop.f32.mrb[0].mxu0
    %v1484 = vadd.f32 0.0, %v1483
    %v1485 = vpop.f32.mrb[0].mxu0
    %v1486 = vadd.f32 0.0, %v1485
    %v1487 = vpop.f32.mrb[0].mxu0
    %v1488 = vadd.f32 0.0, %v1487
    %v1489 = vpop.f32.mrb[0].mxu0
    %v1490 = vadd.f32 0.0, %v1489
    %1491 = vdwg.mxu0
    %v1492 = vadd.f32 %v1249, %v1444
    %v1493 = vadd.f32 %v1251, %v1446
    %v1494 = vadd.f32 %v1253, %v1448
    %v1495 = vadd.f32 %v1255, %v1450
    %v1496 = vadd.f32 %v1259, %v1454
    %v1497 = vadd.f32 %v1261, %v1456
    %v1498 = vadd.f32 %v1263, %v1458
    %v1499 = vadd.f32 %v1265, %v1460
    %v1500 = vadd.f32 %v1269, %v1464
    %v1501 = vadd.f32 %v1271, %v1466
    %v1502 = vadd.f32 %v1273, %v1468
    %v1503 = vadd.f32 %v1275, %v1470
    %v1504 = vadd.f32 %v1279, %v1474
    %v1505 = vadd.f32 %v1281, %v1476
    %v1506 = vadd.f32 %v1283, %v1478
    %v1507 = vadd.f32 %v1285, %v1480
    %v1508 = vadd.f32 %v1289, %v1484
    %v1509 = vadd.f32 %v1291, %v1486
    %v1510 = vadd.f32 %v1293, %v1488
    %v1511 = vadd.f32 %v1295, %v1490
    %v1512 = vld [vmem:[%s0 + $0x3] sm:$0xff]
    %v1513 = vld [vmem:[%s0 + $0xb] sm:$0xff]
    %v1514 = vld [vmem:[%s0 + $0x13] sm:$0xff]
    %v1515 = vld [vmem:[%s0 + $0x1b] sm:$0xff]
    %v1516 = vld [vmem:[%s0 + $0x23] sm:$0xff]
    %v1517 = vld [vmem:[%s0 + $0x2b] sm:$0xff]
    %v1518 = vld [vmem:[%s0 + $0x33] sm:$0xff]
    %v1519 = vld [vmem:[%s0 + $0x3b] sm:$0xff]
    %v1520 = vld [vmem:[%s0 + $0x43] sm:$0xff]
    %v1521 = vld [vmem:[%s0 + $0x4b] sm:$0x7]
    %v1522 = vpack.c.bf16 %v1513, %v1512
    %v1523 = vpack.c.bf16 %v1515, %v1514
    %v1524 = vpack.c.bf16 %v1517, %v1516
    %v1525 = vpack.c.bf16 %v1519, %v1518
    %v1526 = vpack.c.bf16 %v1521, %v1520
    %s1527 = scalar_lea.vmem %s1, 384
    %v1528 = vld [vmem:[%s1527] sm:$0xff]
    %v1529 = vld [vmem:[%s1527 + $0x8] sm:$0xff]
    %v1530 = vld [vmem:[%s1527 + $0x10] sm:$0xff]
    %v1531 = vld [vmem:[%s1527 + $0x18] sm:$0xff]
    %v1532 = vld [vmem:[%s1527 + $0x20] sm:$0xff]
    %v1533 = vld [vmem:[%s1527 + $0x28] sm:$0xff]
    %v1534 = vld [vmem:[%s1527 + $0x30] sm:$0xff]
    %v1535 = vld [vmem:[%s1527 + $0x38] sm:$0xff]
    %v1536 = vld [vmem:[%s1527 + $0x40] sm:$0xff]
    %v1537 = vld [vmem:[%s1527 + $0x48] sm:$0xff]
    %v1538 = vld [vmem:[%s1527 + $0x50] sm:$0xff]
    %v1539 = vld [vmem:[%s1527 + $0x58] sm:$0xff]
    %v1540 = vld [vmem:[%s1527 + $0x60] sm:$0xff]
    %v1541 = vld [vmem:[%s1527 + $0x68] sm:$0xff]
    %v1542 = vld [vmem:[%s1527 + $0x70] sm:$0xff]
    %v1543 = vld [vmem:[%s1527 + $0x78] sm:$0xff]
    %v1560 = vunpack.c.l.b16 %v1528
    %v1561 = vunpack.c.h.b16 %v1528
    %v1562 = vunpack.c.l.b16 %v1529
    %v1563 = vunpack.c.h.b16 %v1529
    %v1564 = vunpack.c.l.b16 %v1530
    %v1565 = vunpack.c.h.b16 %v1530
    %v1566 = vunpack.c.l.b16 %v1531
    %v1567 = vunpack.c.h.b16 %v1531
    %v1568 = vunpack.c.l.b16 %v1532
    %v1569 = vunpack.c.h.b16 %v1532
    %v1570 = vunpack.c.l.b16 %v1533
    %v1571 = vunpack.c.h.b16 %v1533
    %v1572 = vunpack.c.l.b16 %v1534
    %v1573 = vunpack.c.h.b16 %v1534
    %v1574 = vunpack.c.l.b16 %v1535
    %v1575 = vunpack.c.h.b16 %v1535
    %v1576 = vunpack.c.l.b16 %v1536
    %v1577 = vunpack.c.h.b16 %v1536
    %v1578 = vunpack.c.l.b16 %v1537
    %v1579 = vunpack.c.h.b16 %v1537
    %v1580 = vunpack.c.l.b16 %v1538
    %v1581 = vunpack.c.h.b16 %v1538
    %v1582 = vunpack.c.l.b16 %v1539
    %v1583 = vunpack.c.h.b16 %v1539
    %v1584 = vunpack.c.l.b16 %v1540
    %v1585 = vunpack.c.h.b16 %v1540
    %v1586 = vunpack.c.l.b16 %v1541
    %v1587 = vunpack.c.h.b16 %v1541
    %v1588 = vunpack.c.l.b16 %v1542
    %v1589 = vunpack.c.h.b16 %v1542
    %v1590 = vunpack.c.l.b16 %v1543
    %v1591 = vunpack.c.h.b16 %v1543
    %v1592 = vpack.c.b16 %v1562, %v1560
    %v1593 = vpack.c.b16 %v1563, %v1561
    %v1594 = vpack.c.b16 %v1566, %v1564
    %v1595 = vpack.c.b16 %v1567, %v1565
    %v1596 = vpack.c.b16 %v1570, %v1568
    %v1597 = vpack.c.b16 %v1571, %v1569
    %v1598 = vpack.c.b16 %v1574, %v1572
    %v1599 = vpack.c.b16 %v1575, %v1573
    %v1600 = vpack.c.b16 %v1578, %v1576
    %v1601 = vpack.c.b16 %v1579, %v1577
    %v1602 = vpack.c.b16 %v1582, %v1580
    %v1603 = vpack.c.b16 %v1583, %v1581
    %v1604 = vpack.c.b16 %v1586, %v1584
    %v1605 = vpack.c.b16 %v1587, %v1585
    %v1606 = vpack.c.b16 %v1590, %v1588
    %v1607 = vpack.c.b16 %v1591, %v1589
    %1624 = vmatprep.subr.bf16.mxu0 %v1593
    %1625 = vmatpush1.bf16.msra.mxu0 %v1592
    %1626 = vmatprep.subr.bf16.mxu0 %v1595
    %1627 = vmatpush1.bf16.msra.mxu0 %v1594
    %1628 = vmatprep.subr.bf16.mxu0 %v1597
    %1629 = vmatpush1.bf16.msra.mxu0 %v1596
    %1630 = vmatprep.subr.bf16.mxu0 %v1599
    %1631 = vmatpush1.bf16.msra.mxu0 %v1598
    %1632 = vmatprep.subr.bf16.mxu0 %v1601
    %1633 = vmatpush1.bf16.msra.mxu0 %v1600
    %1634 = vmatprep.subr.bf16.mxu0 %v1603
    %1635 = vmatpush1.bf16.msra.mxu0 %v1602
    %1636 = vmatprep.subr.bf16.mxu0 %v1605
    %1637 = vmatpush1.bf16.msra.mxu0 %v1604
    %1638 = vmatprep.subr.bf16.mxu0 %v1607
    %1639 = vmatpush1.bf16.msra.mxu0 %v1606
    %1640 = vmatprep.subr.bf16.mxu0 0
    %1641 = vmatpush1.bf16.msra.mxu0 0
    %1642 = vmatprep.subr.bf16.mxu0 0
    %1643 = vmatpush1.bf16.msra.mxu0 0
    %1644 = vmatprep.subr.bf16.mxu0 0
    %1645 = vmatpush1.bf16.msra.mxu0 0
    %1646 = vmatprep.subr.bf16.mxu0 0
    %1647 = vmatpush1.bf16.msra.mxu0 0
    %1648 = vmatprep.subr.bf16.mxu0 0
    %1649 = vmatpush1.bf16.msra.mxu0 0
    %1650 = vmatprep.subr.bf16.mxu0 0
    %1651 = vmatpush1.bf16.msra.mxu0 0
    %1652 = vmatprep.subr.bf16.mxu0 0
    %1653 = vmatpush1.bf16.msra.mxu0 0
    %1654 = vmatprep.subr.bf16.mxu0 0
    %1655 = vmatpush1.bf16.msra.mxu0 0
    %1656 = vmatprep.mubr.bf16.mxu0 0
    %1657 = vmatmul.mubr.bf16.gmra.mrb[0].mxu0 %v1522
    %v1658 = vpop.f32.mrb[0].mxu0
    %v1659 = vadd.f32 0.0, %v1658
    %v1660 = vpop.f32.mrb[0].mxu0
    %v1661 = vadd.f32 0.0, %v1660
    %v1662 = vpop.f32.mrb[0].mxu0
    %v1663 = vadd.f32 0.0, %v1662
    %v1664 = vpop.f32.mrb[0].mxu0
    %v1665 = vadd.f32 0.0, %v1664
    %1666 = vmatprep.mubr.bf16.mxu0 0
    %1667 = vmatmul.mubr.bf16.gmra.mrb[0].mxu0 %v1523
    %v1668 = vpop.f32.mrb[0].mxu0
    %v1669 = vadd.f32 0.0, %v1668
    %v1670 = vpop.f32.mrb[0].mxu0
    %v1671 = vadd.f32 0.0, %v1670
    %v1672 = vpop.f32.mrb[0].mxu0
    %v1673 = vadd.f32 0.0, %v1672
    %v1674 = vpop.f32.mrb[0].mxu0
    %v1675 = vadd.f32 0.0, %v1674
    %1676 = vmatprep.mubr.bf16.mxu0 0
    %1677 = vmatmul.mubr.bf16.gmra.mrb[0].mxu0 %v1524
    %v1678 = vpop.f32.mrb[0].mxu0
    %v1679 = vadd.f32 0.0, %v1678
    %v1680 = vpop.f32.mrb[0].mxu0
    %v1681 = vadd.f32 0.0, %v1680
    %v1682 = vpop.f32.mrb[0].mxu0
    %v1683 = vadd.f32 0.0, %v1682
    %v1684 = vpop.f32.mrb[0].mxu0
    %v1685 = vadd.f32 0.0, %v1684
    %1686 = vmatprep.mubr.bf16.mxu0 0
    %1687 = vmatmul.mubr.bf16.gmra.mrb[0].mxu0 %v1525
    %v1688 = vpop.f32.mrb[0].mxu0
    %v1689 = vadd.f32 0.0, %v1688
    %v1690 = vpop.f32.mrb[0].mxu0
    %v1691 = vadd.f32 0.0, %v1690
    %v1692 = vpop.f32.mrb[0].mxu0
    %v1693 = vadd.f32 0.0, %v1692
    %v1694 = vpop.f32.mrb[0].mxu0
    %v1695 = vadd.f32 0.0, %v1694
    %1696 = vmatprep.mubr.bf16.mxu0 0
    %1697 = vmatmul.mubr.bf16.gmra.mrb[0].mxu0 %v1526
    %v1698 = vpop.f32.mrb[0].mxu0
    %v1699 = vadd.f32 0.0, %v1698
    %v1700 = vpop.f32.mrb[0].mxu0
    %v1701 = vadd.f32 0.0, %v1700
    %v1702 = vpop.f32.mrb[0].mxu0
    %v1703 = vadd.f32 0.0, %v1702
    %v1704 = vpop.f32.mrb[0].mxu0
    %v1705 = vadd.f32 0.0, %v1704
    %1706 = vdwg.mxu0
    %v1707 = vadd.f32 %v1492, %v1659
    %v1708 = vadd.f32 %v1493, %v1661
    %v1709 = vadd.f32 %v1494, %v1663
    %v1710 = vadd.f32 %v1495, %v1665
    %v1711 = vadd.f32 %v1496, %v1669
    %v1712 = vadd.f32 %v1497, %v1671
    %v1713 = vadd.f32 %v1498, %v1673
    %v1714 = vadd.f32 %v1499, %v1675
    %v1715 = vadd.f32 %v1500, %v1679
    %v1716 = vadd.f32 %v1501, %v1681
    %v1717 = vadd.f32 %v1502, %v1683
    %v1718 = vadd.f32 %v1503, %v1685
    %v1719 = vadd.f32 %v1504, %v1689
    %v1720 = vadd.f32 %v1505, %v1691
    %v1721 = vadd.f32 %v1506, %v1693
    %v1722 = vadd.f32 %v1507, %v1695
    %v1723 = vadd.f32 %v1508, %v1699
    %v1724 = vadd.f32 %v1509, %v1701
    %v1725 = vadd.f32 %v1510, %v1703
    %v1726 = vadd.f32 %v1511, %v1705
    %v1727 = vld [vmem:[%s0 + $0x4] sm:$0xff]
    %v1728 = vld [vmem:[%s0 + $0xc] sm:$0xff]
    %v1729 = vld [vmem:[%s0 + $0x14] sm:$0xff]
    %v1730 = vld [vmem:[%s0 + $0x1c] sm:$0xff]
    %v1731 = vld [vmem:[%s0 + $0x24] sm:$0xff]
    %v1732 = vld [vmem:[%s0 + $0x2c] sm:$0xff]
    %v1733 = vld [vmem:[%s0 + $0x34] sm:$0xff]
    %v1734 = vld [vmem:[%s0 + $0x3c] sm:$0xff]
    %v1735 = vld [vmem:[%s0 + $0x44] sm:$0xff]
    %v1736 = vld [vmem:[%s0 + $0x4c] sm:$0x7]
    %v1737 = vpack.c.bf16 %v1728, %v1727
    %v1738 = vpack.c.bf16 %v1730, %v1729
    %v1739 = vpack.c.bf16 %v1732, %v1731
    %v1740 = vpack.c.bf16 %v1734, %v1733
    %v1741 = vpack.c.bf16 %v1736, %v1735
    %s1742 = scalar_lea.vmem %s1, 512
    %v1743 = vld [vmem:[%s1742] sm:$0xff]
    %v1744 = vld [vmem:[%s1742 + $0x8] sm:$0xff]
    %v1745 = vld [vmem:[%s1742 + $0x10] sm:$0xff]
    %v1746 = vld [vmem:[%s1742 + $0x18] sm:$0xff]
    %v1747 = vld [vmem:[%s1742 + $0x20] sm:$0xff]
    %v1748 = vld [vmem:[%s1742 + $0x28] sm:$0xff]
    %v1749 = vld [vmem:[%s1742 + $0x30] sm:$0xff]
    %v1750 = vld [vmem:[%s1742 + $0x38] sm:$0xff]
    %v1751 = vld [vmem:[%s1742 + $0x40] sm:$0xff]
    %v1752 = vld [vmem:[%s1742 + $0x48] sm:$0xff]
    %v1753 = vld [vmem:[%s1742 + $0x50] sm:$0xff]
    %v1754 = vld [vmem:[%s1742 + $0x58] sm:$0xff]
    %v1755 = vld [vmem:[%s1742 + $0x60] sm:$0xff]
    %v1756 = vld [vmem:[%s1742 + $0x68] sm:$0xff]
    %v1757 = vld [vmem:[%s1742 + $0x70] sm:$0xff]
    %v1758 = vld [vmem:[%s1742 + $0x78] sm:$0xff]
    %v1775 = vunpack.c.l.b16 %v1743
    %v1776 = vunpack.c.h.b16 %v1743
    %v1777 = vunpack.c.l.b16 %v1744
    %v1778 = vunpack.c.h.b16 %v1744
    %v1779 = vunpack.c.l.b16 %v1745
    %v1780 = vunpack.c.h.b16 %v1745
    %v1781 = vunpack.c.l.b16 %v1746
    %v1782 = vunpack.c.h.b16 %v1746
    %v1783 = vunpack.c.l.b16 %v1747
    %v1784 = vunpack.c.h.b16 %v1747
    %v1785 = vunpack.c.l.b16 %v1748
    %v1786 = vunpack.c.h.b16 %v1748
    %v1787 = vunpack.c.l.b16 %v1749
    %v1788 = vunpack.c.h.b16 %v1749
    %v1789 = vunpack.c.l.b16 %v1750
    %v1790 = vunpack.c.h.b16 %v1750
    %v1791 = vunpack.c.l.b16 %v1751
    %v1792 = vunpack.c.h.b16 %v1751
    %v1793 = vunpack.c.l.b16 %v1752
    %v1794 = vunpack.c.h.b16 %v1752
    %v1795 = vunpack.c.l.b16 %v1753
    %v1796 = vunpack.c.h.b16 %v1753
    %v1797 = vunpack.c.l.b16 %v1754
    %v1798 = vunpack.c.h.b16 %v1754
    %v1799 = vunpack.c.l.b16 %v1755
    %v1800 = vunpack.c.h.b16 %v1755
    %v1801 = vunpack.c.l.b16 %v1756
    %v1802 = vunpack.c.h.b16 %v1756
    %v1803 = vunpack.c.l.b16 %v1757
    %v1804 = vunpack.c.h.b16 %v1757
    %v1805 = vunpack.c.l.b16 %v1758
    %v1806 = vunpack.c.h.b16 %v1758
    %v1807 = vpack.c.b16 %v1777, %v1775
    %v1808 = vpack.c.b16 %v1778, %v1776
    %v1809 = vpack.c.b16 %v1781, %v1779
    %v1810 = vpack.c.b16 %v1782, %v1780
    %v1811 = vpack.c.b16 %v1785, %v1783
    %v1812 = vpack.c.b16 %v1786, %v1784
    %v1813 = vpack.c.b16 %v1789, %v1787
    %v1814 = vpack.c.b16 %v1790, %v1788
    %v1815 = vpack.c.b16 %v1793, %v1791
    %v1816 = vpack.c.b16 %v1794, %v1792
    %v1817 = vpack.c.b16 %v1797, %v1795
    %v1818 = vpack.c.b16 %v1798, %v1796
    %v1819 = vpack.c.b16 %v1801, %v1799
    %v1820 = vpack.c.b16 %v1802, %v1800
    %v1821 = vpack.c.b16 %v1805, %v1803
    %v1822 = vpack.c.b16 %v1806, %v1804
    %1839 = vmatprep.subr.bf16.mxu0 %v1808
    %1840 = vmatpush1.bf16.msra.mxu0 %v1807
    %1841 = vmatprep.subr.bf16.mxu0 %v1810
    %1842 = vmatpush1.bf16.msra.mxu0 %v1809
    %1843 = vmatprep.subr.bf16.mxu0 %v1812
    %1844 = vmatpush1.bf16.msra.mxu0 %v1811
    %1845 = vmatprep.subr.bf16.mxu0 %v1814
    %1846 = vmatpush1.bf16.msra.mxu0 %v1813
    %1847 = vmatprep.subr.bf16.mxu0 %v1816
    %1848 = vmatpush1.bf16.msra.mxu0 %v1815
    %1849 = vmatprep.subr.bf16.mxu0 %v1818
    %1850 = vmatpush1.bf16.msra.mxu0 %v1817
    %1851 = vmatprep.subr.bf16.mxu0 %v1820
    %1852 = vmatpush1.bf16.msra.mxu0 %v1819
    %1853 = vmatprep.subr.bf16.mxu0 %v1822
    %1854 = vmatpush1.bf16.msra.mxu0 %v1821
    %1855 = vmatprep.subr.bf16.mxu0 0
    %1856 = vmatpush1.bf16.msra.mxu0 0
    %1857 = vmatprep.subr.bf16.mxu0 0
    %1858 = vmatpush1.bf16.msra.mxu0 0
    %1859 = vmatprep.subr.bf16.mxu0 0
    %1860 = vmatpush1.bf16.msra.mxu0 0
    %1861 = vmatprep.subr.bf16.mxu0 0
    %1862 = vmatpush1.bf16.msra.mxu0 0
    %1863 = vmatprep.subr.bf16.mxu0 0
    %1864 = vmatpush1.bf16.msra.mxu0 0
    %1865 = vmatprep.subr.bf16.mxu0 0
    %1866 = vmatpush1.bf16.msra.mxu0 0
    %1867 = vmatprep.subr.bf16.mxu0 0
    %1868 = vmatpush1.bf16.msra.mxu0 0
    %1869 = vmatprep.subr.bf16.mxu0 0
    %1870 = vmatpush1.bf16.msra.mxu0 0
    %1871 = vmatprep.mubr.bf16.mxu0 0
    %1872 = vmatmul.mubr.bf16.gmra.mrb[0].mxu0 %v1737
    %v1873 = vpop.f32.mrb[0].mxu0
    %v1874 = vadd.f32 0.0, %v1873
    %v1875 = vpop.f32.mrb[0].mxu0
    %v1876 = vadd.f32 0.0, %v1875
    %v1877 = vpop.f32.mrb[0].mxu0
    %v1878 = vadd.f32 0.0, %v1877
    %v1879 = vpop.f32.mrb[0].mxu0
    %v1880 = vadd.f32 0.0, %v1879
    %1881 = vmatprep.mubr.bf16.mxu0 0
    %1882 = vmatmul.mubr.bf16.gmra.mrb[0].mxu0 %v1738
    %v1883 = vpop.f32.mrb[0].mxu0
    %v1884 = vadd.f32 0.0, %v1883
    %v1885 = vpop.f32.mrb[0].mxu0
    %v1886 = vadd.f32 0.0, %v1885
    %v1887 = vpop.f32.mrb[0].mxu0
    %v1888 = vadd.f32 0.0, %v1887
    %v1889 = vpop.f32.mrb[0].mxu0
    %v1890 = vadd.f32 0.0, %v1889
    %1891 = vmatprep.mubr.bf16.mxu0 0
    %1892 = vmatmul.mubr.bf16.gmra.mrb[0].mxu0 %v1739
    %v1893 = vpop.f32.mrb[0].mxu0
    %v1894 = vadd.f32 0.0, %v1893
    %v1895 = vpop.f32.mrb[0].mxu0
    %v1896 = vadd.f32 0.0, %v1895
    %v1897 = vpop.f32.mrb[0].mxu0
    %v1898 = vadd.f32 0.0, %v1897
    %v1899 = vpop.f32.mrb[0].mxu0
    %v1900 = vadd.f32 0.0, %v1899
    %1901 = vmatprep.mubr.bf16.mxu0 0
    %1902 = vmatmul.mubr.bf16.gmra.mrb[0].mxu0 %v1740
    %v1903 = vpop.f32.mrb[0].mxu0
    %v1904 = vadd.f32 0.0, %v1903
    %v1905 = vpop.f32.mrb[0].mxu0
    %v1906 = vadd.f32 0.0, %v1905
    %v1907 = vpop.f32.mrb[0].mxu0
    %v1908 = vadd.f32 0.0, %v1907
    %v1909 = vpop.f32.mrb[0].mxu0
    %v1910 = vadd.f32 0.0, %v1909
    %1911 = vmatprep.mubr.bf16.mxu0 0
    %1912 = vmatmul.mubr.bf16.gmra.mrb[0].mxu0 %v1741
    %v1913 = vpop.f32.mrb[0].mxu0
    %v1914 = vadd.f32 0.0, %v1913
    %v1915 = vpop.f32.mrb[0].mxu0
    %v1916 = vadd.f32 0.0, %v1915
    %v1917 = vpop.f32.mrb[0].mxu0
    %v1918 = vadd.f32 0.0, %v1917
    %v1919 = vpop.f32.mrb[0].mxu0
    %v1920 = vadd.f32 0.0, %v1919
    %1921 = vdwg.mxu0
    %v1922 = vadd.f32 %v1707, %v1874
    %v1923 = vadd.f32 %v1708, %v1876
    %v1924 = vadd.f32 %v1709, %v1878
    %v1925 = vadd.f32 %v1710, %v1880
    %v1926 = vadd.f32 %v1711, %v1884
    %v1927 = vadd.f32 %v1712, %v1886
    %v1928 = vadd.f32 %v1713, %v1888
    %v1929 = vadd.f32 %v1714, %v1890
    %v1930 = vadd.f32 %v1715, %v1894
    %v1931 = vadd.f32 %v1716, %v1896
    %v1932 = vadd.f32 %v1717, %v1898
    %v1933 = vadd.f32 %v1718, %v1900
    %v1934 = vadd.f32 %v1719, %v1904
    %v1935 = vadd.f32 %v1720, %v1906
    %v1936 = vadd.f32 %v1721, %v1908
    %v1937 = vadd.f32 %v1722, %v1910
    %v1938 = vadd.f32 %v1723, %v1914
    %v1939 = vadd.f32 %v1724, %v1916
    %v1940 = vadd.f32 %v1725, %v1918
    %v1941 = vadd.f32 %v1726, %v1920
    %v1942 = vmax.f32 %v1922, 0.0
    %v1943 = vmax.f32 %v1923, 0.0
    %v1944 = vmax.f32 %v1924, 0.0
    %v1945 = vmax.f32 %v1925, 0.0
    %v1946 = vmax.f32 %v1926, 0.0
    %v1947 = vmax.f32 %v1927, 0.0
    %v1948 = vmax.f32 %v1928, 0.0
    %v1949 = vmax.f32 %v1929, 0.0
    %v1950 = vmax.f32 %v1930, 0.0
    %v1951 = vmax.f32 %v1931, 0.0
    %v1952 = vmax.f32 %v1932, 0.0
    %v1953 = vmax.f32 %v1933, 0.0
    %v1954 = vmax.f32 %v1934, 0.0
    %v1955 = vmax.f32 %v1935, 0.0
    %v1956 = vmax.f32 %v1936, 0.0
    %v1957 = vmax.f32 %v1937, 0.0
    %v1958 = vmax.f32 %v1938, 0.0
    %v1959 = vmax.f32 %v1939, 0.0
    %v1960 = vmax.f32 %v1940, 0.0
    %v1961 = vmax.f32 %v1941, 0.0
    %1962 = vst [vmem:[#allocation2] sm:$0xff] %v1942
    %1963 = vst [vmem:[#allocation2 + $0x8] sm:$0xff] %v1943
    %1964 = vst [vmem:[#allocation2 + $0x10] sm:$0xff] %v1944
    %1965 = vst [vmem:[#allocation2 + $0x18] sm:$0xff] %v1945
    %1966 = vst [vmem:[#allocation2 + $0x20] sm:$0xff] %v1946
    %1967 = vst [vmem:[#allocation2 + $0x28] sm:$0xff] %v1947
    %1968 = vst [vmem:[#allocation2 + $0x30] sm:$0xff] %v1948
    %1969 = vst [vmem:[#allocation2 + $0x38] sm:$0xff] %v1949
    %1970 = vst [vmem:[#allocation2 + $0x40] sm:$0xff] %v1950
    %1971 = vst [vmem:[#allocation2 + $0x48] sm:$0xff] %v1951
    %1972 = vst [vmem:[#allocation2 + $0x50] sm:$0xff] %v1952
    %1973 = vst [vmem:[#allocation2 + $0x58] sm:$0xff] %v1953
    %1974 = vst [vmem:[#allocation2 + $0x60] sm:$0xff] %v1954
    %1975 = vst [vmem:[#allocation2 + $0x68] sm:$0xff] %v1955
    %1976 = vst [vmem:[#allocation2 + $0x70] sm:$0xff] %v1956
    %1977 = vst [vmem:[#allocation2 + $0x78] sm:$0xff] %v1957
    %1978 = vst [vmem:[#allocation2 + $0x80] sm:$0xff] %v1958
    %1979 = vst [vmem:[#allocation2 + $0x88] sm:$0xff] %v1959
    %1980 = vst [vmem:[#allocation2 + $0x90] sm:$0x7] %v1960
    %1981 = vst [vmem:[#allocation2 + $0x98] sm:$0x7] %v1961
    %v1982 = vld [vmem:[#allocation2] sm:$0xff]
    %v1983 = vld [vmem:[#allocation2 + $0x10] sm:$0xff]
    %v1984 = vld [vmem:[#allocation2 + $0x20] sm:$0xff]
    %v1985 = vld [vmem:[#allocation2 + $0x30] sm:$0xff]
    %v1986 = vld [vmem:[#allocation2 + $0x40] sm:$0xff]
    %v1987 = vld [vmem:[#allocation2 + $0x50] sm:$0xff]
    %v1988 = vld [vmem:[#allocation2 + $0x60] sm:$0xff]
    %v1989 = vld [vmem:[#allocation2 + $0x70] sm:$0xff]
    %v1990 = vld [vmem:[#allocation2 + $0x80] sm:$0xff]
    %v1991 = vld [vmem:[#allocation2 + $0x90] sm:$0x3]
    %v1992 = vld [vmem:[#allocation2 + $0x8] sm:$0xff]
    %v1993 = vld [vmem:[#allocation2 + $0x18] sm:$0xff]
    %v1994 = vld [vmem:[#allocation2 + $0x28] sm:$0xff]
    %v1995 = vld [vmem:[#allocation2 + $0x38] sm:$0xff]
    %v1996 = vld [vmem:[#allocation2 + $0x48] sm:$0xff]
    %v1997 = vld [vmem:[#allocation2 + $0x58] sm:$0xff]
    %v1998 = vld [vmem:[#allocation2 + $0x68] sm:$0xff]
    %v1999 = vld [vmem:[#allocation2 + $0x78] sm:$0xff]
    %v2000 = vld [vmem:[#allocation2 + $0x88] sm:$0xff]
    %v2001 = vld [vmem:[#allocation2 + $0x98] sm:$0x3]
    %v2002 = vmax.f32 %v1982, %v1992
    %v2003 = vmax.f32 %v1983, %v1993
    %v2004 = vmax.f32 %v1984, %v1994
    %v2005 = vmax.f32 %v1985, %v1995
    %v2006 = vmax.f32 %v1986, %v1996
    %v2007 = vmax.f32 %v1987, %v1997
    %v2008 = vmax.f32 %v1988, %v1998
    %v2009 = vmax.f32 %v1989, %v1999
    %v2010 = vmax.f32 %v1990, %v2000
    %v2011 = vmax.f32 %v1991, %v2001
    %v2012 = vld [vmem:[#allocation2] sm:$0xfe]
    %v2013 = vld [vmem:[#allocation2 + $0x90] sm:$0x7]
    %v2014 = vld [vmem:[#allocation2 + $0x8] sm:$0xfe]
    %v2015 = vld [vmem:[#allocation2 + $0x98] sm:$0x7]
    %v2016 = vmax.f32 %v2012, %v2014
    %v2017 = vmax.f32 %v2013, %v2015
    %vm2028 = vcmask 1046528
    %v2029 = vrot.slane %v2016, 1
    %v2030 = vrot.slane %v2003, 1
    %v2031 = vsel %vm2028, %v2029, %v2030
    %v2032 = vrot.slane %v2004, 1
    %v2033 = vsel %vm2028, %v2030, %v2032
    %v2034 = vrot.slane %v2005, 1
    %v2035 = vsel %vm2028, %v2032, %v2034
    %v2036 = vrot.slane %v2006, 1
    %v2037 = vsel %vm2028, %v2034, %v2036
    %v2038 = vrot.slane %v2007, 1
    %v2039 = vsel %vm2028, %v2036, %v2038
    %v2040 = vrot.slane %v2008, 1
    %v2041 = vsel %vm2028, %v2038, %v2040
    %v2042 = vrot.slane %v2009, 1
    %v2043 = vsel %vm2028, %v2040, %v2042
    %v2044 = vrot.slane %v2010, 1
    %v2045 = vsel %vm2028, %v2042, %v2044
    %v2046 = vrot.slane %v2017, 1
    %v2047 = vsel %vm2028, %v2044, %v2046
    %v2058 = vmax.f32 %v2002, %v2031
    %v2059 = vmax.f32 %v2003, %v2033
    %v2060 = vmax.f32 %v2004, %v2035
    %v2061 = vmax.f32 %v2005, %v2037
    %v2062 = vmax.f32 %v2006, %v2039
    %v2063 = vmax.f32 %v2007, %v2041
    %v2064 = vmax.f32 %v2008, %v2043
    %v2065 = vmax.f32 %v2009, %v2045
    %v2066 = vmax.f32 %v2010, %v2047
    %v2067 = vmax.f32 %v2011, %v2046
    %2068 = vst [vmem:[#allocation3] sm:$0xff] %v2058
    %2069 = vst [vmem:[#allocation3 + $0x8] sm:$0xff] %v2059
    %2070 = vst [vmem:[#allocation3 + $0x10] sm:$0xff] %v2060
    %2071 = vst [vmem:[#allocation3 + $0x18] sm:$0xff] %v2061
    %2072 = vst [vmem:[#allocation3 + $0x20] sm:$0xff] %v2062
    %2073 = vst [vmem:[#allocation3 + $0x28] sm:$0xff] %v2063
    %2074 = vst [vmem:[#allocation3 + $0x30] sm:$0xff] %v2064
    %2075 = vst [vmem:[#allocation3 + $0x38] sm:$0xff] %v2065
    %2076 = vst [vmem:[#allocation3 + $0x40] sm:$0xff] %v2066
    %2077 = vst [vmem:[#allocation3 + $0x48] sm:$0x3] %v2067
    %s2078 = smul.u32 4, 5
    %s2079 = smul.u32 %s2078, 16
    %s2080 = smul.u32 %s2079, 2
    %s2081 = sshll.u32 %s2080, 4
    %2082 = dma.done [#allocation9], %s2081
    %v2083 = vld [vmem:[#allocation3] sm:$0xff]
    %v2084 = vld [vmem:[#allocation3 + $0x8] sm:$0xff]
    %v2085 = vld [vmem:[#allocation3 + $0x10] sm:$0xff]
    %v2086 = vld [vmem:[#allocation3 + $0x18] sm:$0xff]
    %v2087 = vld [vmem:[#allocation3 + $0x20] sm:$0xff]
    %v2088 = vld [vmem:[#allocation3 + $0x28] sm:$0xff]
    %v2089 = vld [vmem:[#allocation3 + $0x30] sm:$0xff]
    %v2090 = vld [vmem:[#allocation3 + $0x38] sm:$0xff]
    %v2091 = vld [vmem:[#allocation3 + $0x40] sm:$0x3]
    %v2092 = vpack.c.bf16 %v2084, %v2083
    %v2093 = vpack.c.bf16 %v2086, %v2085
    %v2094 = vpack.c.bf16 %v2088, %v2087
    %v2095 = vpack.c.bf16 %v2090, %v2089
    %v2096 = vpack.c.bf16 %v2091, %v2091
    %v2097 = vld [vmem:[#allocation6] sm:$0xff]
    %v2098 = vld [vmem:[#allocation6 + $0x8] sm:$0xff]
    %v2099 = vld [vmem:[#allocation6 + $0x10] sm:$0xff]
    %v2100 = vld [vmem:[#allocation6 + $0x18] sm:$0xff]
    %v2101 = vld [vmem:[#allocation6 + $0x20] sm:$0xff]
    %v2102 = vld [vmem:[#allocation6 + $0x28] sm:$0xff]
    %v2103 = vld [vmem:[#allocation6 + $0x30] sm:$0xff]
    %v2104 = vld [vmem:[#allocation6 + $0x38] sm:$0xff]
    %v2105 = vld [vmem:[#allocation6 + $0x40] sm:$0xff]
    %v2106 = vld [vmem:[#allocation6 + $0x48] sm:$0xff]
    %v2107 = vld [vmem:[#allocation6 + $0x50] sm:$0xff]
    %v2108 = vld [vmem:[#allocation6 + $0x58] sm:$0xff]
    %v2109 = vld [vmem:[#allocation6 + $0x60] sm:$0xff]
    %v2110 = vld [vmem:[#allocation6 + $0x68] sm:$0xff]
    %v2111 = vld [vmem:[#allocation6 + $0x70] sm:$0xff]
    %v2112 = vld [vmem:[#allocation6 + $0x78] sm:$0xff]
    %v2113 = vld [vmem:[#allocation3 + $0x2] sm:$0xff]
    %v2114 = vld [vmem:[#allocation3 + $0xa] sm:$0xff]
    %v2115 = vld [vmem:[#allocation3 + $0x12] sm:$0xff]
    %v2116 = vld [vmem:[#allocation3 + $0x1a] sm:$0xff]
    %v2117 = vld [vmem:[#allocation3 + $0x22] sm:$0xff]
    %v2118 = vld [vmem:[#allocation3 + $0x2a] sm:$0xff]
    %v2119 = vld [vmem:[#allocation3 + $0x32] sm:$0xff]
    %v2120 = vld [vmem:[#allocation3 + $0x3a] sm:$0xff]
    %v2121 = vld [vmem:[#allocation3 + $0x42] sm:$0x3]
    %v2122 = vpack.c.bf16 %v2114, %v2113
    %v2123 = vpack.c.bf16 %v2116, %v2115
    %v2124 = vpack.c.bf16 %v2118, %v2117
    %v2125 = vpack.c.bf16 %v2120, %v2119
    %v2126 = vpack.c.bf16 %v2121, %v2121
    %s2127 = scalar_lea.vmem [#allocation6], 128
    %v2128 = vld [vmem:[%s2127] sm:$0xff]
    %v2129 = vld [vmem:[%s2127 + $0x8] sm:$0xff]
    %v2130 = vld [vmem:[%s2127 + $0x10] sm:$0xff]
    %v2131 = vld [vmem:[%s2127 + $0x18] sm:$0xff]
    %v2132 = vld [vmem:[%s2127 + $0x20] sm:$0xff]
    %v2133 = vld [vmem:[%s2127 + $0x28] sm:$0xff]
    %v2134 = vld [vmem:[%s2127 + $0x30] sm:$0xff]
    %v2135 = vld [vmem:[%s2127 + $0x38] sm:$0xff]
    %v2136 = vld [vmem:[%s2127 + $0x40] sm:$0xff]
    %v2137 = vld [vmem:[%s2127 + $0x48] sm:$0xff]
    %v2138 = vld [vmem:[%s2127 + $0x50] sm:$0xff]
    %v2139 = vld [vmem:[%s2127 + $0x58] sm:$0xff]
    %v2140 = vld [vmem:[%s2127 + $0x60] sm:$0xff]
    %v2141 = vld [vmem:[%s2127 + $0x68] sm:$0xff]
    %v2142 = vld [vmem:[%s2127 + $0x70] sm:$0xff]
    %v2143 = vld [vmem:[%s2127 + $0x78] sm:$0xff]
    %2144 = vmatprep.subr.bf16.mxu0 %v2129
    %2145 = vmatpush1.bf16.msra.mxu0 %v2128
    %2146 = vmatprep.subr.bf16.mxu0 %v2131
    %2147 = vmatpush1.bf16.msra.mxu0 %v2130
    %2148 = vmatprep.subr.bf16.mxu0 %v2133
    %2149 = vmatpush1.bf16.msra.mxu0 %v2132
    %2150 = vmatprep.subr.bf16.mxu0 %v2135
    %2151 = vmatpush1.bf16.msra.mxu0 %v2134
    %2152 = vmatprep.subr.bf16.mxu0 %v2137
    %2153 = vmatpush1.bf16.msra.mxu0 %v2136
    %2154 = vmatprep.subr.bf16.mxu0 %v2139
    %2155 = vmatpush1.bf16.msra.mxu0 %v2138
    %2156 = vmatprep.subr.bf16.mxu0 %v2141
    %2157 = vmatpush1.bf16.msra.mxu0 %v2140
    %2158 = vmatprep.subr.bf16.mxu0 %v2143
    %2159 = vmatpush1.bf16.msra.mxu0 %v2142
    %2160 = vmatprep.subr.bf16.mxu0 0
    %2161 = vmatpush1.bf16.msra.mxu0 0
    %2162 = vmatprep.subr.bf16.mxu0 0
    %2163 = vmatpush1.bf16.msra.mxu0 0
    %2164 = vmatprep.subr.bf16.mxu0 0
    %2165 = vmatpush1.bf16.msra.mxu0 0
    %2166 = vmatprep.subr.bf16.mxu0 0
    %2167 = vmatpush1.bf16.msra.mxu0 0
    %2168 = vmatprep.subr.bf16.mxu0 0
    %2169 = vmatpush1.bf16.msra.mxu0 0
    %2170 = vmatprep.subr.bf16.mxu0 0
    %2171 = vmatpush1.bf16.msra.mxu0 0
    %2172 = vmatprep.subr.bf16.mxu0 0
    %2173 = vmatpush1.bf16.msra.mxu0 0
    %2174 = vmatprep.subr.bf16.mxu0 0
    %2175 = vmatpush1.bf16.msra.mxu0 0
    %2176 = vmatprep.mubr.bf16.mxu0 0
    %2177 = vmatmul.mubr.bf16.gmra.mrb[0].mxu0 %v2122
    %v2178 = vpop.f32.mrb[0].mxu0
    %v2179 = vadd.f32 0.0, %v2178
    %v2180 = vpop.f32.mrb[0].mxu0
    %v2181 = vadd.f32 0.0, %v2180
    %v2182 = vpop.f32.mrb[0].mxu0
    %v2183 = vadd.f32 0.0, %v2182
    %v2184 = vpop.f32.mrb[0].mxu0
    %v2185 = vadd.f32 0.0, %v2184
    %2186 = vmatprep.mubr.bf16.mxu0 0
    %2187 = vmatmul.mubr.bf16.gmra.mrb[0].mxu0 %v2123
    %v2188 = vpop.f32.mrb[0].mxu0
    %v2189 = vadd.f32 0.0, %v2188
    %v2190 = vpop.f32.mrb[0].mxu0
    %v2191 = vadd.f32 0.0, %v2190
    %v2192 = vpop.f32.mrb[0].mxu0
    %v2193 = vadd.f32 0.0, %v2192
    %v2194 = vpop.f32.mrb[0].mxu0
    %v2195 = vadd.f32 0.0, %v2194
    %2196 = vmatprep.mubr.bf16.mxu0 0
    %2197 = vmatmul.mubr.bf16.gmra.mrb[0].mxu0 %v2124
    %v2198 = vpop.f32.mrb[0].mxu0
    %v2199 = vadd.f32 0.0, %v2198
    %v2200 = vpop.f32.mrb[0].mxu0
    %v2201 = vadd.f32 0.0, %v2200
    %v2202 = vpop.f32.mrb[0].mxu0
    %v2203 = vadd.f32 0.0, %v2202
    %v2204 = vpop.f32.mrb[0].mxu0
    %v2205 = vadd.f32 0.0, %v2204
    %2206 = vmatprep.mubr.bf16.mxu0 0
    %2207 = vmatmul.mubr.bf16.gmra.mrb[0].mxu0 %v2125
    %v2208 = vpop.f32.mrb[0].mxu0
    %v2209 = vadd.f32 0.0, %v2208
    %v2210 = vpop.f32.mrb[0].mxu0
    %v2211 = vadd.f32 0.0, %v2210
    %v2212 = vpop.f32.mrb[0].mxu0
    %v2213 = vadd.f32 0.0, %v2212
    %v2214 = vpop.f32.mrb[0].mxu0
    %v2215 = vadd.f32 0.0, %v2214
    %2216 = vmatprep.mubr.bf16.mxu0 0
    %2217 = vmatmul.mubr.bf16.gmra.mrb[0].mxu0 %v2126
    %v2218 = vpop.f32.mrb[0].mxu0
    %v2219 = vadd.f32 0.0, %v2218
    %v2220 = vpop.f32.mrb[0].mxu0
    %v2221 = vadd.f32 0.0, %v2220
    %v2222 = vpop.f32.mrb[0].mxu0
    %v2223 = vpop.f32.mrb[0].mxu0
    %2224 = vdwg.mxu0
    %2225 = vmatprep.subr.bf16.mxu0 %v2098
    %2226 = vmatpush1.bf16.msra.mxu0 %v2097
    %2227 = vmatprep.subr.bf16.mxu0 %v2100
    %2228 = vmatpush1.bf16.msra.mxu0 %v2099
    %2229 = vmatprep.subr.bf16.mxu0 %v2102
    %2230 = vmatpush1.bf16.msra.mxu0 %v2101
    %2231 = vmatprep.subr.bf16.mxu0 %v2104
    %2232 = vmatpush1.bf16.msra.mxu0 %v2103
    %2233 = vmatprep.subr.bf16.mxu0 %v2106
    %2234 = vmatpush1.bf16.msra.mxu0 %v2105
    %2235 = vmatprep.subr.bf16.mxu0 %v2108
    %2236 = vmatpush1.bf16.msra.mxu0 %v2107
    %2237 = vmatprep.subr.bf16.mxu0 %v2110
    %2238 = vmatpush1.bf16.msra.mxu0 %v2109
    %2239 = vmatprep.subr.bf16.mxu0 %v2112
    %2240 = vmatpush1.bf16.msra.mxu0 %v2111
    %2241 = vmatprep.subr.bf16.mxu0 0
    %2242 = vmatpush1.bf16.msra.mxu0 0
    %2243 = vmatprep.subr.bf16.mxu0 0
    %2244 = vmatpush1.bf16.msra.mxu0 0
    %2245 = vmatprep.subr.bf16.mxu0 0
    %2246 = vmatpush1.bf16.msra.mxu0 0
    %2247 = vmatprep.subr.bf16.mxu0 0
    %2248 = vmatpush1.bf16.msra.mxu0 0
    %2249 = vmatprep.subr.bf16.mxu0 0
    %2250 = vmatpush1.bf16.msra.mxu0 0
    %2251 = vmatprep.subr.bf16.mxu0 0
    %2252 = vmatpush1.bf16.msra.mxu0 0
    %2253 = vmatprep.subr.bf16.mxu0 0
    %2254 = vmatpush1.bf16.msra.mxu0 0
    %2255 = vmatprep.subr.bf16.mxu0 0
    %2256 = vmatpush1.bf16.msra.mxu0 0
    %2257 = vmatprep.mubr.bf16.mxu0 0
    %2258 = vmatmul.mubr.bf16.gmra.mrb[0].mxu0 %v2092
    %v2259 = vpop.f32.mrb[0].mxu0
    %v2260 = vadd.f32 %v2179, %v2259
    %v2261 = vpop.f32.mrb[0].mxu0
    %v2262 = vadd.f32 %v2181, %v2261
    %v2263 = vpop.f32.mrb[0].mxu0
    %v2264 = vadd.f32 %v2183, %v2263
    %v2265 = vpop.f32.mrb[0].mxu0
    %v2266 = vadd.f32 %v2185, %v2265
    %2267 = vmatprep.mubr.bf16.mxu0 0
    %2268 = vmatmul.mubr.bf16.gmra.mrb[0].mxu0 %v2093
    %v2269 = vpop.f32.mrb[0].mxu0
    %v2270 = vadd.f32 %v2189, %v2269
    %v2271 = vpop.f32.mrb[0].mxu0
    %v2272 = vadd.f32 %v2191, %v2271
    %v2273 = vpop.f32.mrb[0].mxu0
    %v2274 = vadd.f32 %v2193, %v2273
    %v2275 = vpop.f32.mrb[0].mxu0
    %v2276 = vadd.f32 %v2195, %v2275
    %2277 = vmatprep.mubr.bf16.mxu0 0
    %2278 = vmatmul.mubr.bf16.gmra.mrb[0].mxu0 %v2094
    %v2279 = vpop.f32.mrb[0].mxu0
    %v2280 = vadd.f32 %v2199, %v2279
    %v2281 = vpop.f32.mrb[0].mxu0
    %v2282 = vadd.f32 %v2201, %v2281
    %v2283 = vpop.f32.mrb[0].mxu0
    %v2284 = vadd.f32 %v2203, %v2283
    %v2285 = vpop.f32.mrb[0].mxu0
    %v2286 = vadd.f32 %v2205, %v2285
    %2287 = vmatprep.mubr.bf16.mxu0 0
    %2288 = vmatmul.mubr.bf16.gmra.mrb[0].mxu0 %v2095
    %v2289 = vpop.f32.mrb[0].mxu0
    %v2290 = vadd.f32 %v2209, %v2289
    %v2291 = vpop.f32.mrb[0].mxu0
    %v2292 = vadd.f32 %v2211, %v2291
    %v2293 = vpop.f32.mrb[0].mxu0
    %v2294 = vadd.f32 %v2213, %v2293
    %v2295 = vpop.f32.mrb[0].mxu0
    %v2296 = vadd.f32 %v2215, %v2295
    %2297 = vmatprep.mubr.bf16.mxu0 0
    %2298 = vmatmul.mubr.bf16.gmra.mrb[0].mxu0 %v2096
    %v2299 = vpop.f32.mrb[0].mxu0
    %v2300 = vadd.f32 %v2219, %v2299
    %v2301 = vpop.f32.mrb[0].mxu0
    %v2302 = vadd.f32 %v2221, %v2301
    %v2303 = vpop.f32.mrb[0].mxu0
    %v2304 = vpop.f32.mrb[0].mxu0
    %2305 = vdwg.mxu0
    %v2306 = vld [vmem:[#allocation3 + $0x4] sm:$0xff]
    %v2307 = vld [vmem:[#allocation3 + $0xc] sm:$0xff]
    %v2308 = vld [vmem:[#allocation3 + $0x14] sm:$0xff]
    %v2309 = vld [vmem:[#allocation3 + $0x1c] sm:$0xff]
    %v2310 = vld [vmem:[#allocation3 + $0x24] sm:$0xff]
    %v2311 = vld [vmem:[#allocation3 + $0x2c] sm:$0xff]
    %v2312 = vld [vmem:[#allocation3 + $0x34] sm:$0xff]
    %v2313 = vld [vmem:[#allocation3 + $0x3c] sm:$0xff]
    %v2314 = vld [vmem:[#allocation3 + $0x44] sm:$0x3]
    %v2315 = vpack.c.bf16 %v2307, %v2306
    %v2316 = vpack.c.bf16 %v2309, %v2308
    %v2317 = vpack.c.bf16 %v2311, %v2310
    %v2318 = vpack.c.bf16 %v2313, %v2312
    %v2319 = vpack.c.bf16 %v2314, %v2314
    %s2320 = scalar_lea.vmem [#allocation6], 256
    %v2321 = vld [vmem:[%s2320] sm:$0xff]
    %v2322 = vld [vmem:[%s2320 + $0x8] sm:$0xff]
    %v2323 = vld [vmem:[%s2320 + $0x10] sm:$0xff]
    %v2324 = vld [vmem:[%s2320 + $0x18] sm:$0xff]
    %v2325 = vld [vmem:[%s2320 + $0x20] sm:$0xff]
    %v2326 = vld [vmem:[%s2320 + $0x28] sm:$0xff]
    %v2327 = vld [vmem:[%s2320 + $0x30] sm:$0xff]
    %v2328 = vld [vmem:[%s2320 + $0x38] sm:$0xff]
    %v2329 = vld [vmem:[%s2320 + $0x40] sm:$0xff]
    %v2330 = vld [vmem:[%s2320 + $0x48] sm:$0xff]
    %v2331 = vld [vmem:[%s2320 + $0x50] sm:$0xff]
    %v2332 = vld [vmem:[%s2320 + $0x58] sm:$0xff]
    %v2333 = vld [vmem:[%s2320 + $0x60] sm:$0xff]
    %v2334 = vld [vmem:[%s2320 + $0x68] sm:$0xff]
    %v2335 = vld [vmem:[%s2320 + $0x70] sm:$0xff]
    %v2336 = vld [vmem:[%s2320 + $0x78] sm:$0xff]
    %2337 = vmatprep.subr.bf16.mxu0 %v2322
    %2338 = vmatpush1.bf16.msra.mxu0 %v2321
    %2339 = vmatprep.subr.bf16.mxu0 %v2324
    %2340 = vmatpush1.bf16.msra.mxu0 %v2323
    %2341 = vmatprep.subr.bf16.mxu0 %v2326
    %2342 = vmatpush1.bf16.msra.mxu0 %v2325
    %2343 = vmatprep.subr.bf16.mxu0 %v2328
    %2344 = vmatpush1.bf16.msra.mxu0 %v2327
    %2345 = vmatprep.subr.bf16.mxu0 %v2330
    %2346 = vmatpush1.bf16.msra.mxu0 %v2329
    %2347 = vmatprep.subr.bf16.mxu0 %v2332
    %2348 = vmatpush1.bf16.msra.mxu0 %v2331
    %2349 = vmatprep.subr.bf16.mxu0 %v2334
    %2350 = vmatpush1.bf16.msra.mxu0 %v2333
    %2351 = vmatprep.subr.bf16.mxu0 %v2336
    %2352 = vmatpush1.bf16.msra.mxu0 %v2335
    %2353 = vmatprep.subr.bf16.mxu0 0
    %2354 = vmatpush1.bf16.msra.mxu0 0
    %2355 = vmatprep.subr.bf16.mxu0 0
    %2356 = vmatpush1.bf16.msra.mxu0 0
    %2357 = vmatprep.subr.bf16.mxu0 0
    %2358 = vmatpush1.bf16.msra.mxu0 0
    %2359 = vmatprep.subr.bf16.mxu0 0
    %2360 = vmatpush1.bf16.msra.mxu0 0
    %2361 = vmatprep.subr.bf16.mxu0 0
    %2362 = vmatpush1.bf16.msra.mxu0 0
    %2363 = vmatprep.subr.bf16.mxu0 0
    %2364 = vmatpush1.bf16.msra.mxu0 0
    %2365 = vmatprep.subr.bf16.mxu0 0
    %2366 = vmatpush1.bf16.msra.mxu0 0
    %2367 = vmatprep.subr.bf16.mxu0 0
    %2368 = vmatpush1.bf16.msra.mxu0 0
    %2369 = vmatprep.mubr.bf16.mxu0 0
    %2370 = vmatmul.mubr.bf16.gmra.mrb[0].mxu0 %v2315
    %v2371 = vpop.f32.mrb[0].mxu0
    %v2372 = vadd.f32 0.0, %v2371
    %v2373 = vpop.f32.mrb[0].mxu0
    %v2374 = vadd.f32 0.0, %v2373
    %v2375 = vpop.f32.mrb[0].mxu0
    %v2376 = vadd.f32 0.0, %v2375
    %v2377 = vpop.f32.mrb[0].mxu0
    %v2378 = vadd.f32 0.0, %v2377
    %2379 = vmatprep.mubr.bf16.mxu0 0
    %2380 = vmatmul.mubr.bf16.gmra.mrb[0].mxu0 %v2316
    %v2381 = vpop.f32.mrb[0].mxu0
    %v2382 = vadd.f32 0.0, %v2381
    %v2383 = vpop.f32.mrb[0].mxu0
    %v2384 = vadd.f32 0.0, %v2383
    %v2385 = vpop.f32.mrb[0].mxu0
    %v2386 = vadd.f32 0.0, %v2385
    %v2387 = vpop.f32.mrb[0].mxu0
    %v2388 = vadd.f32 0.0, %v2387
    %2389 = vmatprep.mubr.bf16.mxu0 0
    %2390 = vmatmul.mubr.bf16.gmra.mrb[0].mxu0 %v2317
    %v2391 = vpop.f32.mrb[0].mxu0
    %v2392 = vadd.f32 0.0, %v2391
    %v2393 = vpop.f32.mrb[0].mxu0
    %v2394 = vadd.f32 0.0, %v2393
    %v2395 = vpop.f32.mrb[0].mxu0
    %v2396 = vadd.f32 0.0, %v2395
    %v2397 = vpop.f32.mrb[0].mxu0
    %v2398 = vadd.f32 0.0, %v2397
    %2399 = vmatprep.mubr.bf16.mxu0 0
    %2400 = vmatmul.mubr.bf16.gmra.mrb[0].mxu0 %v2318
    %v2401 = vpop.f32.mrb[0].mxu0
    %v2402 = vadd.f32 0.0, %v2401
    %v2403 = vpop.f32.mrb[0].mxu0
    %v2404 = vadd.f32 0.0, %v2403
    %v2405 = vpop.f32.mrb[0].mxu0
    %v2406 = vadd.f32 0.0, %v2405
    %v2407 = vpop.f32.mrb[0].mxu0
    %v2408 = vadd.f32 0.0, %v2407
    %2409 = vmatprep.mubr.bf16.mxu0 0
    %2410 = vmatmul.mubr.bf16.gmra.mrb[0].mxu0 %v2319
    %v2411 = vpop.f32.mrb[0].mxu0
    %v2412 = vadd.f32 0.0, %v2411
    %v2413 = vpop.f32.mrb[0].mxu0
    %v2414 = vadd.f32 0.0, %v2413
    %v2415 = vpop.f32.mrb[0].mxu0
    %v2416 = vpop.f32.mrb[0].mxu0
    %2417 = vdwg.mxu0
    %v2418 = vadd.f32 %v2260, %v2372
    %v2419 = vadd.f32 %v2262, %v2374
    %v2420 = vadd.f32 %v2264, %v2376
    %v2421 = vadd.f32 %v2266, %v2378
    %v2422 = vadd.f32 %v2270, %v2382
    %v2423 = vadd.f32 %v2272, %v2384
    %v2424 = vadd.f32 %v2274, %v2386
    %v2425 = vadd.f32 %v2276, %v2388
    %v2426 = vadd.f32 %v2280, %v2392
    %v2427 = vadd.f32 %v2282, %v2394
    %v2428 = vadd.f32 %v2284, %v2396
    %v2429 = vadd.f32 %v2286, %v2398
    %v2430 = vadd.f32 %v2290, %v2402
    %v2431 = vadd.f32 %v2292, %v2404
    %v2432 = vadd.f32 %v2294, %v2406
    %v2433 = vadd.f32 %v2296, %v2408
    %v2434 = vadd.f32 %v2300, %v2412
    %v2435 = vadd.f32 %v2302, %v2414
    %v2436 = vld [vmem:[#allocation3 + $0x6] sm:$0xff]
    %v2437 = vld [vmem:[#allocation3 + $0xe] sm:$0xff]
    %v2438 = vld [vmem:[#allocation3 + $0x16] sm:$0xff]
    %v2439 = vld [vmem:[#allocation3 + $0x1e] sm:$0xff]
    %v2440 = vld [vmem:[#allocation3 + $0x26] sm:$0xff]
    %v2441 = vld [vmem:[#allocation3 + $0x2e] sm:$0xff]
    %v2442 = vld [vmem:[#allocation3 + $0x36] sm:$0xff]
    %v2443 = vld [vmem:[#allocation3 + $0x3e] sm:$0xff]
    %v2444 = vld [vmem:[#allocation3 + $0x46] sm:$0x3]
    %v2445 = vpack.c.bf16 %v2437, %v2436
    %v2446 = vpack.c.bf16 %v2439, %v2438
    %v2447 = vpack.c.bf16 %v2441, %v2440
    %v2448 = vpack.c.bf16 %v2443, %v2442
    %v2449 = vpack.c.bf16 %v2444, %v2444
    %s2450 = scalar_lea.vmem [#allocation6], 384
    %v2451 = vld [vmem:[%s2450] sm:$0xff]
    %v2452 = vld [vmem:[%s2450 + $0x8] sm:$0xff]
    %v2453 = vld [vmem:[%s2450 + $0x10] sm:$0xff]
    %v2454 = vld [vmem:[%s2450 + $0x18] sm:$0xff]
    %v2455 = vld [vmem:[%s2450 + $0x20] sm:$0xff]
    %v2456 = vld [vmem:[%s2450 + $0x28] sm:$0xff]
    %v2457 = vld [vmem:[%s2450 + $0x30] sm:$0xff]
    %v2458 = vld [vmem:[%s2450 + $0x38] sm:$0xff]
    %v2459 = vld [vmem:[%s2450 + $0x40] sm:$0xff]
    %v2460 = vld [vmem:[%s2450 + $0x48] sm:$0xff]
    %v2461 = vld [vmem:[%s2450 + $0x50] sm:$0xff]
    %v2462 = vld [vmem:[%s2450 + $0x58] sm:$0xff]
    %v2463 = vld [vmem:[%s2450 + $0x60] sm:$0xff]
    %v2464 = vld [vmem:[%s2450 + $0x68] sm:$0xff]
    %v2465 = vld [vmem:[%s2450 + $0x70] sm:$0xff]
    %v2466 = vld [vmem:[%s2450 + $0x78] sm:$0xff]
    %2467 = vmatprep.subr.bf16.mxu0 %v2452
    %2468 = vmatpush1.bf16.msra.mxu0 %v2451
    %2469 = vmatprep.subr.bf16.mxu0 %v2454
    %2470 = vmatpush1.bf16.msra.mxu0 %v2453
    %2471 = vmatprep.subr.bf16.mxu0 %v2456
    %2472 = vmatpush1.bf16.msra.mxu0 %v2455
    %2473 = vmatprep.subr.bf16.mxu0 %v2458
    %2474 = vmatpush1.bf16.msra.mxu0 %v2457
    %2475 = vmatprep.subr.bf16.mxu0 %v2460
    %2476 = vmatpush1.bf16.msra.mxu0 %v2459
    %2477 = vmatprep.subr.bf16.mxu0 %v2462
    %2478 = vmatpush1.bf16.msra.mxu0 %v2461
    %2479 = vmatprep.subr.bf16.mxu0 %v2464
    %2480 = vmatpush1.bf16.msra.mxu0 %v2463
    %2481 = vmatprep.subr.bf16.mxu0 %v2466
    %2482 = vmatpush1.bf16.msra.mxu0 %v2465
    %2483 = vmatprep.subr.bf16.mxu0 0
    %2484 = vmatpush1.bf16.msra.mxu0 0
    %2485 = vmatprep.subr.bf16.mxu0 0
    %2486 = vmatpush1.bf16.msra.mxu0 0
    %2487 = vmatprep.subr.bf16.mxu0 0
    %2488 = vmatpush1.bf16.msra.mxu0 0
    %2489 = vmatprep.subr.bf16.mxu0 0
    %2490 = vmatpush1.bf16.msra.mxu0 0
    %2491 = vmatprep.subr.bf16.mxu0 0
    %2492 = vmatpush1.bf16.msra.mxu0 0
    %2493 = vmatprep.subr.bf16.mxu0 0
    %2494 = vmatpush1.bf16.msra.mxu0 0
    %2495 = vmatprep.subr.bf16.mxu0 0
    %2496 = vmatpush1.bf16.msra.mxu0 0
    %2497 = vmatprep.subr.bf16.mxu0 0
    %2498 = vmatpush1.bf16.msra.mxu0 0
    %2499 = vmatprep.mubr.bf16.mxu0 0
    %2500 = vmatmul.mubr.bf16.gmra.mrb[0].mxu0 %v2445
    %v2501 = vpop.f32.mrb[0].mxu0
    %v2502 = vadd.f32 0.0, %v2501
    %v2503 = vpop.f32.mrb[0].mxu0
    %v2504 = vadd.f32 0.0, %v2503
    %v2505 = vpop.f32.mrb[0].mxu0
    %v2506 = vadd.f32 0.0, %v2505
    %v2507 = vpop.f32.mrb[0].mxu0
    %v2508 = vadd.f32 0.0, %v2507
    %2509 = vmatprep.mubr.bf16.mxu0 0
    %2510 = vmatmul.mubr.bf16.gmra.mrb[0].mxu0 %v2446
    %v2511 = vpop.f32.mrb[0].mxu0
    %v2512 = vadd.f32 0.0, %v2511
    %v2513 = vpop.f32.mrb[0].mxu0
    %v2514 = vadd.f32 0.0, %v2513
    %v2515 = vpop.f32.mrb[0].mxu0
    %v2516 = vadd.f32 0.0, %v2515
    %v2517 = vpop.f32.mrb[0].mxu0
    %v2518 = vadd.f32 0.0, %v2517
    %2519 = vmatprep.mubr.bf16.mxu0 0
    %2520 = vmatmul.mubr.bf16.gmra.mrb[0].mxu0 %v2447
    %v2521 = vpop.f32.mrb[0].mxu0
    %v2522 = vadd.f32 0.0, %v2521
    %v2523 = vpop.f32.mrb[0].mxu0
    %v2524 = vadd.f32 0.0, %v2523
    %v2525 = vpop.f32.mrb[0].mxu0
    %v2526 = vadd.f32 0.0, %v2525
    %v2527 = vpop.f32.mrb[0].mxu0
    %v2528 = vadd.f32 0.0, %v2527
    %2529 = vmatprep.mubr.bf16.mxu0 0
    %2530 = vmatmul.mubr.bf16.gmra.mrb[0].mxu0 %v2448
    %v2531 = vpop.f32.mrb[0].mxu0
    %v2532 = vadd.f32 0.0, %v2531
    %v2533 = vpop.f32.mrb[0].mxu0
    %v2534 = vadd.f32 0.0, %v2533
    %v2535 = vpop.f32.mrb[0].mxu0
    %v2536 = vadd.f32 0.0, %v2535
    %v2537 = vpop.f32.mrb[0].mxu0
    %v2538 = vadd.f32 0.0, %v2537
    %2539 = vmatprep.mubr.bf16.mxu0 0
    %2540 = vmatmul.mubr.bf16.gmra.mrb[0].mxu0 %v2449
    %v2541 = vpop.f32.mrb[0].mxu0
    %v2542 = vadd.f32 0.0, %v2541
    %v2543 = vpop.f32.mrb[0].mxu0
    %v2544 = vadd.f32 0.0, %v2543
    %v2545 = vpop.f32.mrb[0].mxu0
    %v2546 = vpop.f32.mrb[0].mxu0
    %2547 = vdwg.mxu0
    %v2548 = vadd.f32 %v2418, %v2502
    %v2549 = vadd.f32 %v2419, %v2504
    %v2550 = vadd.f32 %v2420, %v2506
    %v2551 = vadd.f32 %v2421, %v2508
    %v2552 = vadd.f32 %v2422, %v2512
    %v2553 = vadd.f32 %v2423, %v2514
    %v2554 = vadd.f32 %v2424, %v2516
    %v2555 = vadd.f32 %v2425, %v2518
    %v2556 = vadd.f32 %v2426, %v2522
    %v2557 = vadd.f32 %v2427, %v2524
    %v2558 = vadd.f32 %v2428, %v2526
    %v2559 = vadd.f32 %v2429, %v2528
    %v2560 = vadd.f32 %v2430, %v2532
    %v2561 = vadd.f32 %v2431, %v2534
    %v2562 = vadd.f32 %v2432, %v2536
    %v2563 = vadd.f32 %v2433, %v2538
    %v2564 = vadd.f32 %v2434, %v2542
    %v2565 = vadd.f32 %v2435, %v2544
    %v2566 = vld [vmem:[#allocation3 + $0x8] sm:$0xff]
    %v2567 = vld [vmem:[#allocation3 + $0x10] sm:$0xff]
    %v2568 = vld [vmem:[#allocation3 + $0x18] sm:$0xff]
    %v2569 = vld [vmem:[#allocation3 + $0x20] sm:$0xff]
    %v2570 = vld [vmem:[#allocation3 + $0x28] sm:$0xff]
    %v2571 = vld [vmem:[#allocation3 + $0x30] sm:$0xff]
    %v2572 = vld [vmem:[#allocation3 + $0x38] sm:$0xff]
    %v2573 = vld [vmem:[#allocation3 + $0x40] sm:$0xff]
    %v2574 = vld [vmem:[#allocation3 + $0x48] sm:$0x3]
    %v2575 = vpack.c.bf16 %v2567, %v2566
    %v2576 = vpack.c.bf16 %v2569, %v2568
    %v2577 = vpack.c.bf16 %v2571, %v2570
    %v2578 = vpack.c.bf16 %v2573, %v2572
    %v2579 = vpack.c.bf16 %v2574, %v2574
    %s2580 = scalar_lea.vmem [#allocation6], 512
    %v2581 = vld [vmem:[%s2580] sm:$0xff]
    %v2582 = vld [vmem:[%s2580 + $0x8] sm:$0xff]
    %v2583 = vld [vmem:[%s2580 + $0x10] sm:$0xff]
    %v2584 = vld [vmem:[%s2580 + $0x18] sm:$0xff]
    %v2585 = vld [vmem:[%s2580 + $0x20] sm:$0xff]
    %v2586 = vld [vmem:[%s2580 + $0x28] sm:$0xff]
    %v2587 = vld [vmem:[%s2580 + $0x30] sm:$0xff]
    %v2588 = vld [vmem:[%s2580 + $0x38] sm:$0xff]
    %v2589 = vld [vmem:[%s2580 + $0x40] sm:$0xff]
    %v2590 = vld [vmem:[%s2580 + $0x48] sm:$0xff]
    %v2591 = vld [vmem:[%s2580 + $0x50] sm:$0xff]
    %v2592 = vld [vmem:[%s2580 + $0x58] sm:$0xff]
    %v2593 = vld [vmem:[%s2580 + $0x60] sm:$0xff]
    %v2594 = vld [vmem:[%s2580 + $0x68] sm:$0xff]
    %v2595 = vld [vmem:[%s2580 + $0x70] sm:$0xff]
    %v2596 = vld [vmem:[%s2580 + $0x78] sm:$0xff]
    %2597 = vmatprep.subr.bf16.mxu0 %v2582
    %2598 = vmatpush1.bf16.msra.mxu0 %v2581
    %2599 = vmatprep.subr.bf16.mxu0 %v2584
    %2600 = vmatpush1.bf16.msra.mxu0 %v2583
    %2601 = vmatprep.subr.bf16.mxu0 %v2586
    %2602 = vmatpush1.bf16.msra.mxu0 %v2585
    %2603 = vmatprep.subr.bf16.mxu0 %v2588
    %2604 = vmatpush1.bf16.msra.mxu0 %v2587
    %2605 = vmatprep.subr.bf16.mxu0 %v2590
    %2606 = vmatpush1.bf16.msra.mxu0 %v2589
    %2607 = vmatprep.subr.bf16.mxu0 %v2592
    %2608 = vmatpush1.bf16.msra.mxu0 %v2591
    %2609 = vmatprep.subr.bf16.mxu0 %v2594
    %2610 = vmatpush1.bf16.msra.mxu0 %v2593
    %2611 = vmatprep.subr.bf16.mxu0 %v2596
    %2612 = vmatpush1.bf16.msra.mxu0 %v2595
    %2613 = vmatprep.subr.bf16.mxu0 0
    %2614 = vmatpush1.bf16.msra.mxu0 0
    %2615 = vmatprep.subr.bf16.mxu0 0
    %2616 = vmatpush1.bf16.msra.mxu0 0
    %2617 = vmatprep.subr.bf16.mxu0 0
    %2618 = vmatpush1.bf16.msra.mxu0 0
    %2619 = vmatprep.subr.bf16.mxu0 0
    %2620 = vmatpush1.bf16.msra.mxu0 0
    %2621 = vmatprep.subr.bf16.mxu0 0
    %2622 = vmatpush1.bf16.msra.mxu0 0
    %2623 = vmatprep.subr.bf16.mxu0 0
    %2624 = vmatpush1.bf16.msra.mxu0 0
    %2625 = vmatprep.subr.bf16.mxu0 0
    %2626 = vmatpush1.bf16.msra.mxu0 0
    %2627 = vmatprep.subr.bf16.mxu0 0
    %2628 = vmatpush1.bf16.msra.mxu0 0
    %2629 = vmatprep.mubr.bf16.mxu0 0
    %2630 = vmatmul.mubr.bf16.gmra.mrb[0].mxu0 %v2575
    %v2631 = vpop.f32.mrb[0].mxu0
    %v2632 = vadd.f32 0.0, %v2631
    %v2633 = vpop.f32.mrb[0].mxu0
    %v2634 = vadd.f32 0.0, %v2633
    %v2635 = vpop.f32.mrb[0].mxu0
    %v2636 = vadd.f32 0.0, %v2635
    %v2637 = vpop.f32.mrb[0].mxu0
    %v2638 = vadd.f32 0.0, %v2637
    %2639 = vmatprep.mubr.bf16.mxu0 0
    %2640 = vmatmul.mubr.bf16.gmra.mrb[0].mxu0 %v2576
    %v2641 = vpop.f32.mrb[0].mxu0
    %v2642 = vadd.f32 0.0, %v2641
    %v2643 = vpop.f32.mrb[0].mxu0
    %v2644 = vadd.f32 0.0, %v2643
    %v2645 = vpop.f32.mrb[0].mxu0
    %v2646 = vadd.f32 0.0, %v2645
    %v2647 = vpop.f32.mrb[0].mxu0
    %v2648 = vadd.f32 0.0, %v2647
    %2649 = vmatprep.mubr.bf16.mxu0 0
    %2650 = vmatmul.mubr.bf16.gmra.mrb[0].mxu0 %v2577
    %v2651 = vpop.f32.mrb[0].mxu0
    %v2652 = vadd.f32 0.0, %v2651
    %v2653 = vpop.f32.mrb[0].mxu0
    %v2654 = vadd.f32 0.0, %v2653
    %v2655 = vpop.f32.mrb[0].mxu0
    %v2656 = vadd.f32 0.0, %v2655
    %v2657 = vpop.f32.mrb[0].mxu0
    %v2658 = vadd.f32 0.0, %v2657
    %2659 = vmatprep.mubr.bf16.mxu0 0
    %2660 = vmatmul.mubr.bf16.gmra.mrb[0].mxu0 %v2578
    %v2661 = vpop.f32.mrb[0].mxu0
    %v2662 = vadd.f32 0.0, %v2661
    %v2663 = vpop.f32.mrb[0].mxu0
    %v2664 = vadd.f32 0.0, %v2663
    %v2665 = vpop.f32.mrb[0].mxu0
    %v2666 = vadd.f32 0.0, %v2665
    %v2667 = vpop.f32.mrb[0].mxu0
    %v2668 = vadd.f32 0.0, %v2667
    %2669 = vmatprep.mubr.bf16.mxu0 0
    %2670 = vmatmul.mubr.bf16.gmra.mrb[0].mxu0 %v2579
    %v2671 = vpop.f32.mrb[0].mxu0
    %v2672 = vadd.f32 0.0, %v2671
    %v2673 = vpop.f32.mrb[0].mxu0
    %v2674 = vadd.f32 0.0, %v2673
    %v2675 = vpop.f32.mrb[0].mxu0
    %v2676 = vpop.f32.mrb[0].mxu0
    %2677 = vdwg.mxu0
    %v2678 = vadd.f32 %v2548, %v2632
    %v2679 = vadd.f32 %v2549, %v2634
    %v2680 = vadd.f32 %v2550, %v2636
    %v2681 = vadd.f32 %v2551, %v2638
    %v2682 = vadd.f32 %v2552, %v2642
    %v2683 = vadd.f32 %v2553, %v2644
    %v2684 = vadd.f32 %v2554, %v2646
    %v2685 = vadd.f32 %v2555, %v2648
    %v2686 = vadd.f32 %v2556, %v2652
    %v2687 = vadd.f32 %v2557, %v2654
    %v2688 = vadd.f32 %v2558, %v2656
    %v2689 = vadd.f32 %v2559, %v2658
    %v2690 = vadd.f32 %v2560, %v2662
    %v2691 = vadd.f32 %v2561, %v2664
    %v2692 = vadd.f32 %v2562, %v2666
    %v2693 = vadd.f32 %v2563, %v2668
    %v2694 = vadd.f32 %v2564, %v2672
    %v2695 = vadd.f32 %v2565, %v2674
    %v2696 = vmax.f32 %v2678, 0.0
    %v2697 = vmax.f32 %v2679, 0.0
    %v2698 = vmax.f32 %v2680, 0.0
    %v2699 = vmax.f32 %v2681, 0.0
    %v2700 = vmax.f32 %v2682, 0.0
    %v2701 = vmax.f32 %v2683, 0.0
    %v2702 = vmax.f32 %v2684, 0.0
    %v2703 = vmax.f32 %v2685, 0.0
    %v2704 = vmax.f32 %v2686, 0.0
    %v2705 = vmax.f32 %v2687, 0.0
    %v2706 = vmax.f32 %v2688, 0.0
    %v2707 = vmax.f32 %v2689, 0.0
    %v2708 = vmax.f32 %v2690, 0.0
    %v2709 = vmax.f32 %v2691, 0.0
    %v2710 = vmax.f32 %v2692, 0.0
    %v2711 = vmax.f32 %v2693, 0.0
    %v2712 = vmax.f32 %v2694, 0.0
    %v2713 = vmax.f32 %v2695, 0.0
    %2714 = vst [vmem:[#allocation4] sm:$0xff] %v2696
    %2715 = vst [vmem:[#allocation4 + $0x8] sm:$0xff] %v2697
    %2716 = vst [vmem:[#allocation4 + $0x10] sm:$0xff] %v2698
    %2717 = vst [vmem:[#allocation4 + $0x18] sm:$0xff] %v2699
    %2718 = vst [vmem:[#allocation4 + $0x20] sm:$0xff] %v2700
    %2719 = vst [vmem:[#allocation4 + $0x28] sm:$0xff] %v2701
    %2720 = vst [vmem:[#allocation4 + $0x30] sm:$0xff] %v2702
    %2721 = vst [vmem:[#allocation4 + $0x38] sm:$0xff] %v2703
    %2722 = vst [vmem:[#allocation4 + $0x40] sm:$0xff] %v2704
    %2723 = vst [vmem:[#allocation4 + $0x48] sm:$0xff] %v2705
    %2724 = vst [vmem:[#allocation4 + $0x50] sm:$0xff] %v2706
    %2725 = vst [vmem:[#allocation4 + $0x58] sm:$0xff] %v2707
    %2726 = vst [vmem:[#allocation4 + $0x60] sm:$0xff] %v2708
    %2727 = vst [vmem:[#allocation4 + $0x68] sm:$0xff] %v2709
    %2728 = vst [vmem:[#allocation4 + $0x70] sm:$0xff] %v2710
    %2729 = vst [vmem:[#allocation4 + $0x78] sm:$0xff] %v2711
    %2730 = vst [vmem:[#allocation4 + $0x80] sm:$0x3] %v2712
    %2731 = vst [vmem:[#allocation4 + $0x88] sm:$0x3] %v2713
    %v2732 = vld [vmem:[#allocation4] sm:$0xff]
    %v2733 = vld [vmem:[#allocation4 + $0x10] sm:$0xff]
    %v2734 = vld [vmem:[#allocation4 + $0x20] sm:$0xff]
    %v2735 = vld [vmem:[#allocation4 + $0x30] sm:$0xff]
    %v2736 = vld [vmem:[#allocation4 + $0x40] sm:$0xff]
    %v2737 = vld [vmem:[#allocation4 + $0x50] sm:$0xff]
    %v2738 = vld [vmem:[#allocation4 + $0x60] sm:$0xff]
    %v2739 = vld [vmem:[#allocation4 + $0x70] sm:$0xff]
    %v2740 = vld [vmem:[#allocation4 + $0x8] sm:$0xff]
    %v2741 = vld [vmem:[#allocation4 + $0x18] sm:$0xff]
    %v2742 = vld [vmem:[#allocation4 + $0x28] sm:$0xff]
    %v2743 = vld [vmem:[#allocation4 + $0x38] sm:$0xff]
    %v2744 = vld [vmem:[#allocation4 + $0x48] sm:$0xff]
    %v2745 = vld [vmem:[#allocation4 + $0x58] sm:$0xff]
    %v2746 = vld [vmem:[#allocation4 + $0x68] sm:$0xff]
    %v2747 = vld [vmem:[#allocation4 + $0x78] sm:$0xff]
    %v2748 = vmax.f32 %v2732, %v2740
    %v2749 = vmax.f32 %v2733, %v2741
    %v2750 = vmax.f32 %v2734, %v2742
    %v2751 = vmax.f32 %v2735, %v2743
    %v2752 = vmax.f32 %v2736, %v2744
    %v2753 = vmax.f32 %v2737, %v2745
    %v2754 = vmax.f32 %v2738, %v2746
    %v2755 = vmax.f32 %v2739, %v2747
    %v2756 = vld [vmem:[#allocation4] sm:$0xfc]
    %v2757 = vld [vmem:[#allocation4 + $0x80] sm:$0x3]
    %v2758 = vld [vmem:[#allocation4 + $0x8] sm:$0xfc]
    %v2759 = vld [vmem:[#allocation4 + $0x88] sm:$0x3]
    %v2760 = vmax.f32 %v2756, %v2758
    %v2761 = vmax.f32 %v2757, %v2759
    %vm2771 = vcmask 1045504
    %v2772 = vrot.slane %v2760, 2
    %v2773 = vrot.slane %v2749, 2
    %v2774 = vsel %vm2771, %v2772, %v2773
    %v2775 = vrot.slane %v2750, 2
    %v2776 = vsel %vm2771, %v2773, %v2775
    %v2777 = vrot.slane %v2751, 2
    %v2778 = vsel %vm2771, %v2775, %v2777
    %v2779 = vrot.slane %v2752, 2
    %v2780 = vsel %vm2771, %v2777, %v2779
    %v2781 = vrot.slane %v2753, 2
    %v2782 = vsel %vm2771, %v2779, %v2781
    %v2783 = vrot.slane %v2754, 2
    %v2784 = vsel %vm2771, %v2781, %v2783
    %v2785 = vrot.slane %v2755, 2
    %v2786 = vsel %vm2771, %v2783, %v2785
    %v2787 = vrot.slane %v2761, 2
    %v2788 = vsel %vm2771, %v2785, %v2787
    %v2797 = vmax.f32 %v2748, %v2774
    %v2798 = vmax.f32 %v2749, %v2776
    %v2799 = vmax.f32 %v2750, %v2778
    %v2800 = vmax.f32 %v2751, %v2780
    %v2801 = vmax.f32 %v2752, %v2782
    %v2802 = vmax.f32 %v2753, %v2784
    %v2803 = vmax.f32 %v2754, %v2786
    %v2804 = vmax.f32 %v2755, %v2788
    %2805 = vst [vmem:[#allocation5] sm:$0xff] %v2797
    %2806 = vst [vmem:[#allocation5 + $0x8] sm:$0xff] %v2798
    %2807 = vst [vmem:[#allocation5 + $0x10] sm:$0xff] %v2799
    %2808 = vst [vmem:[#allocation5 + $0x18] sm:$0xff] %v2800
    %2809 = vst [vmem:[#allocation5 + $0x20] sm:$0xff] %v2801
    %2810 = vst [vmem:[#allocation5 + $0x28] sm:$0xff] %v2802
    %2811 = vst [vmem:[#allocation5 + $0x30] sm:$0xff] %v2803
    %2812 = vst [vmem:[#allocation5 + $0x38] sm:$0xff] %v2804
    %s2813 = smul.u32 %s2079, 1
    %s2814 = sshll.u32 %s2813, 4
    %2815 = dma.done %s716, %s2814
    %s2816 = smul.u32 120, 1
    %s2817 = sshll.u32 %s2816, 4
    %2818 = dma.done %s837, %s2817
    %v2819 = vld [vmem:[#allocation5] ss:$32 sm:$0x1]
    %v2820 = vld [vmem:[#allocation5] ss:$32 sm:$0x2]
    %v2821 = vor.u32 %v2819, %v2820
    %v2822 = vpack.c.bf16 %v2821, %v2821
    %v2823 = vld [vmem:[#allocation7] sm:$0xff]
    %v2824 = vld [vmem:[#allocation7 + $0x8] sm:$0xff]
    %v2825 = vld [vmem:[#allocation7 + $0x10] sm:$0xff]
    %v2826 = vld [vmem:[#allocation7 + $0x18] sm:$0xff]
    %v2827 = vld [vmem:[#allocation7 + $0x20] sm:$0xff]
    %v2828 = vld [vmem:[#allocation7 + $0x28] sm:$0xff]
    %v2829 = vld [vmem:[#allocation7 + $0x30] sm:$0xff]
    %v2830 = vld [vmem:[#allocation7 + $0x38] sm:$0xff]
    %s2831 = scalar_lea.vmem [#allocation5], 4
    %v2832 = vld [vmem:[%s2831] ss:$32 sm:$0x1]
    %v2833 = vld [vmem:[%s2831] ss:$32 sm:$0x2]
    %v2834 = vor.u32 %v2832, %v2833
    %v2835 = vpack.c.bf16 %v2834, %v2834
    %s2836 = scalar_lea.vmem [#allocation7], 64
    %v2837 = vld [vmem:[%s2836] sm:$0xff]
    %v2838 = vld [vmem:[%s2836 + $0x8] sm:$0xff]
    %v2839 = vld [vmem:[%s2836 + $0x10] sm:$0xff]
    %v2840 = vld [vmem:[%s2836 + $0x18] sm:$0xff]
    %v2841 = vld [vmem:[%s2836 + $0x20] sm:$0xff]
    %v2842 = vld [vmem:[%s2836 + $0x28] sm:$0xff]
    %v2843 = vld [vmem:[%s2836 + $0x30] sm:$0xff]
    %v2844 = vld [vmem:[%s2836 + $0x38] sm:$0xff]
    %2845 = vmatprep.subr.bf16.mxu0 0
    %2846 = vmatpush1.bf16.msra.mxu0 %v2837
    %2847 = vmatprep.subr.bf16.mxu0 0
    %2848 = vmatpush1.bf16.msra.mxu0 %v2838
    %2849 = vmatprep.subr.bf16.mxu0 0
    %2850 = vmatpush1.bf16.msra.mxu0 %v2839
    %2851 = vmatprep.subr.bf16.mxu0 0
    %2852 = vmatpush1.bf16.msra.mxu0 %v2840
    %2853 = vmatprep.subr.bf16.mxu0 0
    %2854 = vmatpush1.bf16.msra.mxu0 %v2841
    %2855 = vmatprep.subr.bf16.mxu0 0
    %2856 = vmatpush1.bf16.msra.mxu0 %v2842
    %2857 = vmatprep.subr.bf16.mxu0 0
    %2858 = vmatpush1.bf16.msra.mxu0 %v2843
    %2859 = vmatprep.subr.bf16.mxu0 0
    %2860 = vmatpush1.bf16.msra.mxu0 %v2844
    %2861 = vmatprep.subr.bf16.mxu0 0
    %2862 = vmatpush1.bf16.msra.mxu0 0
    %2863 = vmatprep.subr.bf16.mxu0 0
    %2864 = vmatpush1.bf16.msra.mxu0 0
    %2865 = vmatprep.subr.bf16.mxu0 0
    %2866 = vmatpush1.bf16.msra.mxu0 0
    %2867 = vmatprep.subr.bf16.mxu0 0
    %2868 = vmatpush1.bf16.msra.mxu0 0
    %2869 = vmatprep.subr.bf16.mxu0 0
    %2870 = vmatpush1.bf16.msra.mxu0 0
    %2871 = vmatprep.subr.bf16.mxu0 0
    %2872 = vmatpush1.bf16.msra.mxu0 0
    %2873 = vmatprep.subr.bf16.mxu0 0
    %2874 = vmatpush1.bf16.msra.mxu0 0
    %2875 = vmatprep.subr.bf16.mxu0 0
    %2876 = vmatpush1.bf16.msra.mxu0 0
    %2877 = vmatprep.mubr.bf16.mxu0 0
    %2878 = vmatmul.mubr.bf16.gmra.mrb[0].mxu0 %v2835
    %v2879 = vpop.f32.mrb[0].mxu0
    %v2880 = vadd.f32 0.0, %v2879
    %v2881 = vpop.f32.mrb[0].mxu0
    %v2882 = vpop.f32.mrb[0].mxu0
    %v2883 = vpop.f32.mrb[0].mxu0
    %2884 = vdwg.mxu0
    %2885 = vmatprep.subr.bf16.mxu0 0
    %2886 = vmatpush1.bf16.msra.mxu0 %v2823
    %2887 = vmatprep.subr.bf16.mxu0 0
    %2888 = vmatpush1.bf16.msra.mxu0 %v2824
    %2889 = vmatprep.subr.bf16.mxu0 0
    %2890 = vmatpush1.bf16.msra.mxu0 %v2825
    %2891 = vmatprep.subr.bf16.mxu0 0
    %2892 = vmatpush1.bf16.msra.mxu0 %v2826
    %2893 = vmatprep.subr.bf16.mxu0 0
    %2894 = vmatpush1.bf16.msra.mxu0 %v2827
    %2895 = vmatprep.subr.bf16.mxu0 0
    %2896 = vmatpush1.bf16.msra.mxu0 %v2828
    %2897 = vmatprep.subr.bf16.mxu0 0
    %2898 = vmatpush1.bf16.msra.mxu0 %v2829
    %2899 = vmatprep.subr.bf16.mxu0 0
    %2900 = vmatpush1.bf16.msra.mxu0 %v2830
    %2901 = vmatprep.subr.bf16.mxu0 0
    %2902 = vmatpush1.bf16.msra.mxu0 0
    %2903 = vmatprep.subr.bf16.mxu0 0
    %2904 = vmatpush1.bf16.msra.mxu0 0
    %2905 = vmatprep.subr.bf16.mxu0 0
    %2906 = vmatpush1.bf16.msra.mxu0 0
    %2907 = vmatprep.subr.bf16.mxu0 0
    %2908 = vmatpush1.bf16.msra.mxu0 0
    %2909 = vmatprep.subr.bf16.mxu0 0
    %2910 = vmatpush1.bf16.msra.mxu0 0
    %2911 = vmatprep.subr.bf16.mxu0 0
    %2912 = vmatpush1.bf16.msra.mxu0 0
    %2913 = vmatprep.subr.bf16.mxu0 0
    %2914 = vmatpush1.bf16.msra.mxu0 0
    %2915 = vmatprep.subr.bf16.mxu0 0
    %2916 = vmatpush1.bf16.msra.mxu0 0
    %2917 = vmatprep.mubr.bf16.mxu0 0
    %2918 = vmatmul.mubr.bf16.gmra.mrb[0].mxu0 %v2822
    %v2919 = vpop.f32.mrb[0].mxu0
    %v2920 = vadd.f32 %v2880, %v2919
    %v2921 = vpop.f32.mrb[0].mxu0
    %v2922 = vpop.f32.mrb[0].mxu0
    %v2923 = vpop.f32.mrb[0].mxu0
    %2924 = vdwg.mxu0
    %s2925 = scalar_lea.vmem [#allocation5], 8
    %v2926 = vld [vmem:[%s2925] ss:$32 sm:$0x1]
    %v2927 = vld [vmem:[%s2925] ss:$32 sm:$0x2]
    %v2928 = vor.u32 %v2926, %v2927
    %v2929 = vpack.c.bf16 %v2928, %v2928
    %s2930 = scalar_lea.vmem [#allocation7], 128
    %v2931 = vld [vmem:[%s2930] sm:$0xff]
    %v2932 = vld [vmem:[%s2930 + $0x8] sm:$0xff]
    %v2933 = vld [vmem:[%s2930 + $0x10] sm:$0xff]
    %v2934 = vld [vmem:[%s2930 + $0x18] sm:$0xff]
    %v2935 = vld [vmem:[%s2930 + $0x20] sm:$0xff]
    %v2936 = vld [vmem:[%s2930 + $0x28] sm:$0xff]
    %v2937 = vld [vmem:[%s2930 + $0x30] sm:$0xff]
    %v2938 = vld [vmem:[%s2930 + $0x38] sm:$0xff]
    %2939 = vmatprep.subr.bf16.mxu0 0
    %2940 = vmatpush1.bf16.msra.mxu0 %v2931
    %2941 = vmatprep.subr.bf16.mxu0 0
    %2942 = vmatpush1.bf16.msra.mxu0 %v2932
    %2943 = vmatprep.subr.bf16.mxu0 0
    %2944 = vmatpush1.bf16.msra.mxu0 %v2933
    %2945 = vmatprep.subr.bf16.mxu0 0
    %2946 = vmatpush1.bf16.msra.mxu0 %v2934
    %2947 = vmatprep.subr.bf16.mxu0 0
    %2948 = vmatpush1.bf16.msra.mxu0 %v2935
    %2949 = vmatprep.subr.bf16.mxu0 0
    %2950 = vmatpush1.bf16.msra.mxu0 %v2936
    %2951 = vmatprep.subr.bf16.mxu0 0
    %2952 = vmatpush1.bf16.msra.mxu0 %v2937
    %2953 = vmatprep.subr.bf16.mxu0 0
    %2954 = vmatpush1.bf16.msra.mxu0 %v2938
    %2955 = vmatprep.subr.bf16.mxu0 0
    %2956 = vmatpush1.bf16.msra.mxu0 0
    %2957 = vmatprep.subr.bf16.mxu0 0
    %2958 = vmatpush1.bf16.msra.mxu0 0
    %2959 = vmatprep.subr.bf16.mxu0 0
    %2960 = vmatpush1.bf16.msra.mxu0 0
    %2961 = vmatprep.subr.bf16.mxu0 0
    %2962 = vmatpush1.bf16.msra.mxu0 0
    %2963 = vmatprep.subr.bf16.mxu0 0
    %2964 = vmatpush1.bf16.msra.mxu0 0
    %2965 = vmatprep.subr.bf16.mxu0 0
    %2966 = vmatpush1.bf16.msra.mxu0 0
    %2967 = vmatprep.subr.bf16.mxu0 0
    %2968 = vmatpush1.bf16.msra.mxu0 0
    %2969 = vmatprep.subr.bf16.mxu0 0
    %2970 = vmatpush1.bf16.msra.mxu0 0
    %2971 = vmatprep.mubr.bf16.mxu0 0
    %2972 = vmatmul.mubr.bf16.gmra.mrb[0].mxu0 %v2929
    %v2973 = vpop.f32.mrb[0].mxu0
    %v2974 = vadd.f32 0.0, %v2973
    %v2975 = vpop.f32.mrb[0].mxu0
    %v2976 = vpop.f32.mrb[0].mxu0
    %v2977 = vpop.f32.mrb[0].mxu0
    %2978 = vdwg.mxu0
    %v2979 = vadd.f32 %v2920, %v2974
    %s2980 = scalar_lea.vmem [#allocation5], 12
    %v2981 = vld [vmem:[%s2980] ss:$32 sm:$0x1]
    %v2982 = vld [vmem:[%s2980] ss:$32 sm:$0x2]
    %v2983 = vor.u32 %v2981, %v2982
    %v2984 = vpack.c.bf16 %v2983, %v2983
    %s2985 = scalar_lea.vmem [#allocation7], 192
    %v2986 = vld [vmem:[%s2985] sm:$0xff]
    %v2987 = vld [vmem:[%s2985 + $0x8] sm:$0xff]
    %v2988 = vld [vmem:[%s2985 + $0x10] sm:$0xff]
    %v2989 = vld [vmem:[%s2985 + $0x18] sm:$0xff]
    %v2990 = vld [vmem:[%s2985 + $0x20] sm:$0xff]
    %v2991 = vld [vmem:[%s2985 + $0x28] sm:$0xff]
    %v2992 = vld [vmem:[%s2985 + $0x30] sm:$0xff]
    %v2993 = vld [vmem:[%s2985 + $0x38] sm:$0xff]
    %2994 = vmatprep.subr.bf16.mxu0 0
    %2995 = vmatpush1.bf16.msra.mxu0 %v2986
    %2996 = vmatprep.subr.bf16.mxu0 0
    %2997 = vmatpush1.bf16.msra.mxu0 %v2987
    %2998 = vmatprep.subr.bf16.mxu0 0
    %2999 = vmatpush1.bf16.msra.mxu0 %v2988
    %3000 = vmatprep.subr.bf16.mxu0 0
    %3001 = vmatpush1.bf16.msra.mxu0 %v2989
    %3002 = vmatprep.subr.bf16.mxu0 0
    %3003 = vmatpush1.bf16.msra.mxu0 %v2990
    %3004 = vmatprep.subr.bf16.mxu0 0
    %3005 = vmatpush1.bf16.msra.mxu0 %v2991
    %3006 = vmatprep.subr.bf16.mxu0 0
    %3007 = vmatpush1.bf16.msra.mxu0 %v2992
    %3008 = vmatprep.subr.bf16.mxu0 0
    %3009 = vmatpush1.bf16.msra.mxu0 %v2993
    %3010 = vmatprep.subr.bf16.mxu0 0
    %3011 = vmatpush1.bf16.msra.mxu0 0
    %3012 = vmatprep.subr.bf16.mxu0 0
    %3013 = vmatpush1.bf16.msra.mxu0 0
    %3014 = vmatprep.subr.bf16.mxu0 0
    %3015 = vmatpush1.bf16.msra.mxu0 0
    %3016 = vmatprep.subr.bf16.mxu0 0
    %3017 = vmatpush1.bf16.msra.mxu0 0
    %3018 = vmatprep.subr.bf16.mxu0 0
    %3019 = vmatpush1.bf16.msra.mxu0 0
    %3020 = vmatprep.subr.bf16.mxu0 0
    %3021 = vmatpush1.bf16.msra.mxu0 0
    %3022 = vmatprep.subr.bf16.mxu0 0
    %3023 = vmatpush1.bf16.msra.mxu0 0
    %3024 = vmatprep.subr.bf16.mxu0 0
    %3025 = vmatpush1.bf16.msra.mxu0 0
    %3026 = vmatprep.mubr.bf16.mxu0 0
    %3027 = vmatmul.mubr.bf16.gmra.mrb[0].mxu0 %v2984
    %v3028 = vpop.f32.mrb[0].mxu0
    %v3029 = vadd.f32 0.0, %v3028
    %v3030 = vpop.f32.mrb[0].mxu0
    %v3031 = vpop.f32.mrb[0].mxu0
    %v3032 = vpop.f32.mrb[0].mxu0
    %3033 = vdwg.mxu0
    %v3034 = vadd.f32 %v2979, %v3029
    %s3035 = scalar_lea.vmem [#allocation5], 16
    %v3036 = vld [vmem:[%s3035] ss:$32 sm:$0x1]
    %v3037 = vld [vmem:[%s3035] ss:$32 sm:$0x2]
    %v3038 = vor.u32 %v3036, %v3037
    %v3039 = vpack.c.bf16 %v3038, %v3038
    %s3040 = scalar_lea.vmem [#allocation7], 256
    %v3041 = vld [vmem:[%s3040] sm:$0xff]
    %v3042 = vld [vmem:[%s3040 + $0x8] sm:$0xff]
    %v3043 = vld [vmem:[%s3040 + $0x10] sm:$0xff]
    %v3044 = vld [vmem:[%s3040 + $0x18] sm:$0xff]
    %v3045 = vld [vmem:[%s3040 + $0x20] sm:$0xff]
    %v3046 = vld [vmem:[%s3040 + $0x28] sm:$0xff]
    %v3047 = vld [vmem:[%s3040 + $0x30] sm:$0xff]
    %v3048 = vld [vmem:[%s3040 + $0x38] sm:$0xff]
    %3049 = vmatprep.subr.bf16.mxu0 0
    %3050 = vmatpush1.bf16.msra.mxu0 %v3041
    %3051 = vmatprep.subr.bf16.mxu0 0
    %3052 = vmatpush1.bf16.msra.mxu0 %v3042
    %3053 = vmatprep.subr.bf16.mxu0 0
    %3054 = vmatpush1.bf16.msra.mxu0 %v3043
    %3055 = vmatprep.subr.bf16.mxu0 0
    %3056 = vmatpush1.bf16.msra.mxu0 %v3044
    %3057 = vmatprep.subr.bf16.mxu0 0
    %3058 = vmatpush1.bf16.msra.mxu0 %v3045
    %3059 = vmatprep.subr.bf16.mxu0 0
    %3060 = vmatpush1.bf16.msra.mxu0 %v3046
    %3061 = vmatprep.subr.bf16.mxu0 0
    %3062 = vmatpush1.bf16.msra.mxu0 %v3047
    %3063 = vmatprep.subr.bf16.mxu0 0
    %3064 = vmatpush1.bf16.msra.mxu0 %v3048
    %3065 = vmatprep.subr.bf16.mxu0 0
    %3066 = vmatpush1.bf16.msra.mxu0 0
    %3067 = vmatprep.subr.bf16.mxu0 0
    %3068 = vmatpush1.bf16.msra.mxu0 0
    %3069 = vmatprep.subr.bf16.mxu0 0
    %3070 = vmatpush1.bf16.msra.mxu0 0
    %3071 = vmatprep.subr.bf16.mxu0 0
    %3072 = vmatpush1.bf16.msra.mxu0 0
    %3073 = vmatprep.subr.bf16.mxu0 0
    %3074 = vmatpush1.bf16.msra.mxu0 0
    %3075 = vmatprep.subr.bf16.mxu0 0
    %3076 = vmatpush1.bf16.msra.mxu0 0
    %3077 = vmatprep.subr.bf16.mxu0 0
    %3078 = vmatpush1.bf16.msra.mxu0 0
    %3079 = vmatprep.subr.bf16.mxu0 0
    %3080 = vmatpush1.bf16.msra.mxu0 0
    %3081 = vmatprep.mubr.bf16.mxu0 0
    %3082 = vmatmul.mubr.bf16.gmra.mrb[0].mxu0 %v3039
    %v3083 = vpop.f32.mrb[0].mxu0
    %v3084 = vadd.f32 0.0, %v3083
    %v3085 = vpop.f32.mrb[0].mxu0
    %v3086 = vpop.f32.mrb[0].mxu0
    %v3087 = vpop.f32.mrb[0].mxu0
    %3088 = vdwg.mxu0
    %v3089 = vadd.f32 %v3034, %v3084
    %v3090 = vld [vmem:[%s5] sm:$0x1]
    %v3092 = vlaneseq
    %v3093 = vshrl.u32 %v3092, 7
    %v3094 = vsub.s32 0, %v3093
    %v3095 = vrot.slane %v3090, %v3094
    %v3097 = vadd.f32 %v3089, %v3095
    %v3098 = vmax.f32 %v3097, 0.0
    %v3099 = vld [vmem:[#allocation8] sm:$0xff]
    %v3100 = vld [vmem:[#allocation8 + $0x8] sm:$0xff]
    %v3101 = vld [vmem:[#allocation8 + $0x10] sm:$0xff]
    %v3102 = vld [vmem:[#allocation8 + $0x18] sm:$0xff]
    %v3103 = vld [vmem:[#allocation8 + $0x20] sm:$0xff]
    %v3104 = vld [vmem:[#allocation8 + $0x28] sm:$0xff]
    %v3105 = vld [vmem:[#allocation8 + $0x30] sm:$0xff]
    %v3106 = vld [vmem:[#allocation8 + $0x38] sm:$0xff]
    %v3107 = vld [vmem:[#allocation8 + $0x40] sm:$0xff]
    %v3108 = vld [vmem:[#allocation8 + $0x48] sm:$0xff]
    %v3109 = vld [vmem:[#allocation8 + $0x50] sm:$0xff]
    %v3110 = vld [vmem:[#allocation8 + $0x58] sm:$0xff]
    %v3111 = vld [vmem:[#allocation8 + $0x60] sm:$0xff]
    %v3112 = vld [vmem:[#allocation8 + $0x68] sm:$0xff]
    %v3113 = vld [vmem:[#allocation8 + $0x70] sm:$0xff]
    %v3114 = vld [vmem:[%s6] sm:$0x1]
    %v3116 = vlaneseq
    %v3117 = vshrl.u32 %v3116, 7
    %v3118 = vsub.s32 0, %v3117
    %v3119 = vrot.slane %v3114, %v3118
    %vm3121 = vcmask 982016
    %v3123 = vsel %vm3121, %v3098, 0
    %3125 = vmatprep.subr.mxu0 0.0
    %3126 = vmatpush1.msra.mxu0 %v3099
    %3127 = vmatprep.subr.mxu0 0.0
    %3128 = vmatpush1.msra.mxu0 %v3100
    %3129 = vmatprep.subr.mxu0 0.0
    %3130 = vmatpush1.msra.mxu0 %v3101
    %3131 = vmatprep.subr.mxu0 0.0
    %3132 = vmatpush1.msra.mxu0 %v3102
    %3133 = vmatprep.subr.mxu0 0.0
    %3134 = vmatpush1.msra.mxu0 %v3103
    %3135 = vmatprep.subr.mxu0 0.0
    %3136 = vmatpush1.msra.mxu0 %v3104
    %3137 = vmatprep.subr.mxu0 0.0
    %3138 = vmatpush1.msra.mxu0 %v3105
    %3139 = vmatprep.subr.mxu0 0.0
    %3140 = vmatpush1.msra.mxu0 %v3106
    %3141 = vmatprep.subr.mxu0 0.0
    %3142 = vmatpush1.msra.mxu0 %v3107
    %3143 = vmatprep.subr.mxu0 0.0
    %3144 = vmatpush1.msra.mxu0 %v3108
    %3145 = vmatprep.subr.mxu0 0.0
    %3146 = vmatpush1.msra.mxu0 %v3109
    %3147 = vmatprep.subr.mxu0 0.0
    %3148 = vmatpush1.msra.mxu0 %v3110
    %3149 = vmatprep.subr.mxu0 0.0
    %3150 = vmatpush1.msra.mxu0 %v3111
    %3151 = vmatprep.subr.mxu0 0.0
    %3152 = vmatpush1.msra.mxu0 %v3112
    %3153 = vmatprep.subr.mxu0 0.0
    %3154 = vmatpush1.msra.mxu0 %v3113
    %3155 = vmatprep.subr.mxu0 0.0
    %3156 = vmatpush1.msra.mxu0 0.0
    %3157 = vmatprep.subr.mxu0 0.0
    %3158 = vmatpush1.msra.mxu0 0.0
    %3159 = vmatprep.subr.mxu0 0.0
    %3160 = vmatpush1.msra.mxu0 0.0
    %3161 = vmatprep.subr.mxu0 0.0
    %3162 = vmatpush1.msra.mxu0 0.0
    %3163 = vmatprep.subr.mxu0 0.0
    %3164 = vmatpush1.msra.mxu0 0.0
    %3165 = vmatprep.subr.mxu0 0.0
    %3166 = vmatpush1.msra.mxu0 0.0
    %3167 = vmatprep.subr.mxu0 0.0
    %3168 = vmatpush1.msra.mxu0 0.0
    %3169 = vmatprep.subr.mxu0 0.0
    %3170 = vmatpush1.msra.mxu0 0.0
    %3171 = vmatprep.subr.mxu0 0.0
    %3172 = vmatpush1.msra.mxu0 0.0
    %3173 = vmatprep.subr.mxu0 0.0
    %3174 = vmatpush1.msra.mxu0 0.0
    %3175 = vmatprep.subr.mxu0 0.0
    %3176 = vmatpush1.msra.mxu0 0.0
    %3177 = vmatprep.subr.mxu0 0.0
    %3178 = vmatpush1.msra.mxu0 0.0
    %3179 = vmatprep.subr.mxu0 0.0
    %3180 = vmatpush1.msra.mxu0 0.0
    %3181 = vmatprep.subr.mxu0 0.0
    %3182 = vmatpush1.msra.mxu0 0.0
    %3183 = vmatprep.subr.mxu0 0.0
    %3184 = vmatpush1.msra.mxu0 0.0
    %3185 = vmatprep.subr.mxu0 0.0
    %3186 = vmatpush1.msra.mxu0 0.0
    %3187 = vmatprep.subr.mxu0 0.0
    %3188 = vmatpush1.msra.mxu0 0.0
    %3189 = vmatprep.mubr.f32.mxu0 0.0
    %3190 = vmatmul.mubr.f32.gmra.mrb[0].mxu0 %v3123
    %v3191 = vpop.f32.mrb[0].mxu0
    %v3192 = vadd.f32 %v3119, %v3191
    %v3193 = vpop.f32.mrb[0].mxu0
    %3194 = vdwg.mxu0
    %v3195 = vmax.f32 %v3192, 0.0
    %v3196 = vld [vmem:[%s7] sm:$0xff]
    %v3197 = vld [vmem:[%s7 + $0x8] sm:$0xff]
    %v3198 = vld [vmem:[%s7 + $0x10] sm:$0xff]
    %v3199 = vld [vmem:[%s7 + $0x18] sm:$0xff]
    %v3200 = vld [vmem:[%s7 + $0x20] sm:$0xff]
    %v3201 = vld [vmem:[%s7 + $0x28] sm:$0xff]
    %v3202 = vld [vmem:[%s7 + $0x30] sm:$0xff]
    %v3203 = vld [vmem:[%s7 + $0x38] sm:$0xff]
    %v3204 = vld [vmem:[%s7 + $0x40] sm:$0xff]
    %v3205 = vld [vmem:[%s7 + $0x48] sm:$0xff]
    %v3206 = vld [vmem:[%s7 + $0x50] sm:$0xf]
    %v3207 = vld [vmem:[%s8] sm:$0x1]
    %v3209 = vlaneseq
    %v3210 = vshrl.u32 %v3209, 7
    %v3211 = vsub.s32 0, %v3210
    %v3212 = vrot.slane %v3207, %v3211
    %vm3214 = vcmask 687104
    %v3216 = vsel %vm3214, %v3195, 0
    %vm3218 = vcmask 1043456
    %v3220 = vsel %vm3218, %v3206, 0
    %3222 = vmatprep.subr.mxu0 0.0
    %3223 = vmatpush1.msra.mxu0 %v3196
    %3224 = vmatprep.subr.mxu0 0.0
    %3225 = vmatpush1.msra.mxu0 %v3197
    %3226 = vmatprep.subr.mxu0 0.0
    %3227 = vmatpush1.msra.mxu0 %v3198
    %3228 = vmatprep.subr.mxu0 0.0
    %3229 = vmatpush1.msra.mxu0 %v3199
    %3230 = vmatprep.subr.mxu0 0.0
    %3231 = vmatpush1.msra.mxu0 %v3200
    %3232 = vmatprep.subr.mxu0 0.0
    %3233 = vmatpush1.msra.mxu0 %v3201
    %3234 = vmatprep.subr.mxu0 0.0
    %3235 = vmatpush1.msra.mxu0 %v3202
    %3236 = vmatprep.subr.mxu0 0.0
    %3237 = vmatpush1.msra.mxu0 %v3203
    %3238 = vmatprep.subr.mxu0 0.0
    %3239 = vmatpush1.msra.mxu0 %v3204
    %3240 = vmatprep.subr.mxu0 0.0
    %3241 = vmatpush1.msra.mxu0 %v3205
    %3242 = vmatprep.subr.mxu0 0.0
    %3243 = vmatpush1.msra.mxu0 %v3220
    %3244 = vmatprep.subr.mxu0 0.0
    %3245 = vmatpush1.msra.mxu0 0.0
    %3246 = vmatprep.subr.mxu0 0.0
    %3247 = vmatpush1.msra.mxu0 0.0
    %3248 = vmatprep.subr.mxu0 0.0
    %3249 = vmatpush1.msra.mxu0 0.0
    %3250 = vmatprep.subr.mxu0 0.0
    %3251 = vmatpush1.msra.mxu0 0.0
    %3252 = vmatprep.subr.mxu0 0.0
    %3253 = vmatpush1.msra.mxu0 0.0
    %3254 = vmatprep.subr.mxu0 0.0
    %3255 = vmatpush1.msra.mxu0 0.0
    %3256 = vmatprep.subr.mxu0 0.0
    %3257 = vmatpush1.msra.mxu0 0.0
    %3258 = vmatprep.subr.mxu0 0.0
    %3259 = vmatpush1.msra.mxu0 0.0
    %3260 = vmatprep.subr.mxu0 0.0
    %3261 = vmatpush1.msra.mxu0 0.0
    %3262 = vmatprep.subr.mxu0 0.0
    %3263 = vmatpush1.msra.mxu0 0.0
    %3264 = vmatprep.subr.mxu0 0.0
    %3265 = vmatpush1.msra.mxu0 0.0
    %3266 = vmatprep.subr.mxu0 0.0
    %3267 = vmatpush1.msra.mxu0 0.0
    %3268 = vmatprep.subr.mxu0 0.0
    %3269 = vmatpush1.msra.mxu0 0.0
    %3270 = vmatprep.subr.mxu0 0.0
    %3271 = vmatpush1.msra.mxu0 0.0
    %3272 = vmatprep.subr.mxu0 0.0
    %3273 = vmatpush1.msra.mxu0 0.0
    %3274 = vmatprep.subr.mxu0 0.0
    %3275 = vmatpush1.msra.mxu0 0.0
    %3276 = vmatprep.subr.mxu0 0.0
    %3277 = vmatpush1.msra.mxu0 0.0
    %3278 = vmatprep.subr.mxu0 0.0
    %3279 = vmatpush1.msra.mxu0 0.0
    %3280 = vmatprep.subr.mxu0 0.0
    %3281 = vmatpush1.msra.mxu0 0.0
    %3282 = vmatprep.subr.mxu0 0.0
    %3283 = vmatpush1.msra.mxu0 0.0
    %3284 = vmatprep.subr.mxu0 0.0
    %3285 = vmatpush1.msra.mxu0 0.0
    %3286 = vmatprep.mubr.f32.mxu0 0.0
    %3287 = vmatmul.mubr.f32.gmra.mrb[0].mxu0 %v3216
    %v3288 = vpop.f32.mrb[0].mxu0
    %v3289 = vadd.f32 %v3212, %v3288
    %v3290 = vpop.f32.mrb[0].mxu0
    %3291 = vdwg.mxu0
    %vm3292 = vcmask 74752
    %3293 = vst.msk [vmem:[#allocation10] sm:$0x3] %vm3292, %v3289
    // Predicated region
    $region131: #{forward.1} parent=1 // pred_check
      _
    $region132: #{forward.1} parent=1 // pred_check_branch
      %3295 = sbr.rel (0) target = $region134
    $region133: #{forward.1} parent=1 // pred_region
      %s3297 = ssub.s32 32, 32
      %3298 = vsyncadd [#allocation11], %s3297
      %s3300 = sshll.u32 [#allocation10], 4
      %s3301 = int_to_ptr.vmem [resolvable:$true] %s3300
      %3303 = dma.vmem_to_hbm [thread:$0]  %s3301, 32, %s9, [#allocation11]
    $region134: #{forward.1} parent=1 // pred_fallthru
      _
    // Predicated region
    $region135: #{forward.1} parent=1 // pred_check
      _
    $region136: #{forward.1} parent=1 // pred_check_branch
      %3305 = sbr.rel (0) target = $region138
    $region137: #{forward.1} parent=1 // pred_region
      %3306 = dma.done [#allocation11], 32
    $region138: #{forward.1} parent=1 // pred_fallthru
      _
    %3307 = vsyncpa [#allocation11], 1
  %3308 = vsyncmov [#allocation9]
  %s3309 = vpop.sfrf %3308
  %p3310 = scmp.eq.s32.totalorder %s3309, 0
  %p3311 = pneg %p3310
  %3313 = shalt.err (%p3311)
  %s3314 = scalar_lea.sflag [#allocation9], 1
  %3315 = vsyncmov %s3314
  %s3316 = vpop.sfrf %3315
  %p3317 = scmp.eq.s32.totalorder %s3316, 0
  %p3318 = pneg %p3317
  %3320 = shalt.err (%p3318)
  %s3321 = scalar_lea.sflag [#allocation9], 2
  %3322 = vsyncmov %s3321
  %s3323 = vpop.sfrf %3322
  %p3324 = scmp.eq.s32.totalorder %s3323, 0
  %p3325 = pneg %p3324
  %3327 = shalt.err (%p3325)

</llo_original>
